<compile_context>
chip_gen: v5e
topology: v5e:2x2
jax: 0.10.0
libtpu: 0.0.40
codegen_flags: <defaults>
</compile_context>

<pallas_src>
import jax
import jax.numpy as jnp
from jax.experimental import pallas as pl
from jax.experimental.pallas import tpu as pltpu


def _round_up(x: int, m: int) -> int:
    return ((x + m - 1) // m) * m


def _vmem_bytes(shape, dtype) -> int:
    """Rough VMEM footprint of one buffer (lane/sublane padded)."""
    dims = list(shape) if len(shape) else [1]
    dims[-1] = _round_up(dims[-1], 128)
    if len(dims) >= 2:
        dims[-2] = _round_up(dims[-2], 8)
    n = 1
    for s in dims:
        n *= s
    return n * jnp.dtype(dtype).itemsize


# ---------------------------------------------------------------------------
# Fused multi-layer (bi)LSTM + pooling kernel.
# ---------------------------------------------------------------------------
def make_lstm_kernel(*, num_layers, num_dirs, L, BT, Hp, Ep, Cn, G, OutP,
                     attn_type):
    """Kernel factory.  Hp = padded per-direction hidden, G = 4*Hp, Cn = dirs*Hp."""
    n_w = num_layers * num_dirs * 3          # (W_ih, W_hh, bias) per (layer, dir)
    U = 2 if (L % 2 == 0 and L >= 2) else 1  # manual unroll factor of the time loop

    def kernel(*args):
        len_ref = args[0]                         # (BT, 1) int32
        emb_ref = args[1]                         # (L, BT, Ep) bf16, time-major
        w_refs = args[2:2 + n_w]
        out_ref = args[2 + n_w]                   # (BT, OutP) f32
        gx_ref, seq_ref, h_ref, c_ref, acc_ref = args[3 + n_w:]
        # gx_ref : (num_dirs, L, BT, G)  f32   precomputed x@W_ih + b
        # seq_ref: (num_dirs, L, BT, Hp) bf16  per-direction h sequence (next-layer input)
        # h_ref  : (num_dirs, BT, Hp)    f32
        # c_ref  : (num_dirs, BT, Hp)    f32
        # acc_ref: (num_dirs, BT, Hp)    f32   'avg' masked time-sum accumulator

        def wih_r(layer, d):
            return w_refs[(layer * num_dirs + d) * 3 + 0]

        def whh_r(layer, d):
            return w_refs[(layer * num_dirs + d) * 3 + 1]

        def b_r(layer, d):
            return w_refs[(layer * num_dirs + d) * 3 + 2]

        lengths = len_ref[...]                    # (BT, 1) int32

        for layer in range(num_layers):
            is_last = layer == num_layers - 1
            write_seq = not is_last               # only the next layer needs the sequence
            do_avg = is_last and attn_type == "avg"

            # ---- time-parallel input projection (both directions) -----------
            if layer == 0:
                x0 = emb_ref[...].reshape(L * BT, Ep)            # bf16
                for d in range(num_dirs):
                    gx = jnp.dot(x0, wih_r(layer, d)[...],
                                 preferred_element_type=jnp.float32)
                    gx_ref[d] = gx.reshape(L, BT, G) + b_r(layer, d)[...]
            else:
                # Previous layer's outputs are fully consumed HERE (before the
                # recurrence below overwrites seq_ref) -> no ping-pong needed.
                xs = [seq_ref[dd].reshape(L * BT, Hp) for dd in range(num_dirs)]
                for d in range(num_dirs):
                    wih = wih_r(layer, d)                        # (num_dirs, Hp, G) bf16
                    gx = jnp.dot(xs[0], wih[0],
                                 preferred_element_type=jnp.float32)
                    for dd in range(1, num_dirs):
                        gx = gx + jnp.dot(xs[dd], wih[dd],
                                          preferred_element_type=jnp.float32)
                    gx_ref[d] = gx.reshape(L, BT, G) + b_r(layer, d)[...]

            h_ref[...] = jnp.zeros_like(h_ref)
            c_ref[...] = jnp.zeros_like(c_ref)
            if do_avg:
                acc_ref[...] = jnp.zeros_like(acc_ref)

            # ---- interleaved fwd/bwd recurrence (manually unrolled x U) ------
            @pl.loop(0, L // U)
            def _(sb):
                for u in range(U):
                    s = sb * U + u
                    for d in range(num_dirs):     # d=0 fwd, d=1 bwd: independent chains
                        t = s if d == 0 else (L - 1) - s
                        h = h_ref[d]
                        c = c_ref[d]
                        g = gx_ref[d, t] + jnp.dot(
                            h.astype(jnp.bfloat16), whh_r(layer, d)[...],
                            preferred_element_type=jnp.float32)
                        i_g = jax.nn.sigmoid(g[:, 0:Hp])
                        f_g = jax.nn.sigmoid(g[:, Hp:2 * Hp])
                        g_g = jnp.tanh(g[:, 2 * Hp:3 * Hp])
                        o_g = jax.nn.sigmoid(g[:, 3 * Hp:4 * Hp])
                        c_new = f_g * c + i_g * g_g
                        h_new = o_g * jnp.tanh(c_new)
                        # pack_padded_sequence emulation: past a sequence's length
                        # the state is carried unchanged and the output is zero.
                        valid = lengths > t                       # (BT, 1) bool
                        h_out = jnp.where(valid, h_new, 0.0)
                        if write_seq:
                            seq_ref[d, t] = h_out.astype(seq_ref.dtype)
                        if do_avg:
                            acc_ref[d] = acc_ref[d] + h_out
                        h_ref[d] = jnp.where(valid, h_new, h)
                        c_ref[d] = jnp.where(valid, c_new, c)
            # TODO(synk): training-mode inter-layer dropout not modeled (eval no-op).

        # ---- pooling ---------------------------------------------------------
        if attn_type == "last":
            parts = [h_ref[d] for d in range(num_dirs)]
        else:  # "avg": acc already holds the masked time-sum of the last layer
            inv_len = 1.0 / lengths.astype(jnp.float32)           # (BT, 1)
            parts = [acc_ref[d] * inv_len for d in range(num_dirs)]
        res = parts[0] if num_dirs == 1 else jnp.concatenate(parts, axis=1)
        if OutP > Cn:                                             # lane-dense output slab
            res = jnp.concatenate(
                [res, jnp.zeros((BT, OutP - Cn), jnp.float32)], axis=1)
        out_ref[...] = res.astype(out_ref.dtype)

    return kernel


# ---------------------------------------------------------------------------
# Host-side parameter preparation (PyTorch layout -> padded kernel layout).
# ---------------------------------------------------------------------------
def prepare_lstm_params(params, *, num_layers, num_dirs, H, Hp, E, Ep):
    G = 4 * Hp
    embed = params["embed"]
    V = embed.shape[0]
    embed_p = jnp.zeros((V, Ep), jnp.float32).at[:, :E].set(embed)
    embed_p = embed_p.astype(jnp.bfloat16)

    def gate_pad(w):  # (rows, 4H) -> (rows, 4Hp), per-gate zero padding
        out = jnp.zeros((w.shape[0], G), jnp.float32)
        for g in range(4):
            out = out.at[:, g * Hp:g * Hp + H].set(w[:, g * H:(g + 1) * H])
        return out

    flat = []
    for layer in range(num_layers):
        for d in range(num_dirs):
            p = params["lstm"][layer][d]
            w_ih = gate_pad(p["w_ih"].T)                     # (in_real, 4Hp)
            w_hh = gate_pad(p["w_hh"].T)                     # (H, 4Hp)
            b = gate_pad((p["b_ih"] + p["b_hh"])[None, :])   # (1, 4Hp)

            if layer == 0:
                wih_p = jnp.zeros((Ep, G), jnp.float32).at[:E, :].set(w_ih)
            else:
                # Split rows per input direction so the kernel can feed the next
                # layer directly from the per-direction sequence buffers
                # (no channel-concat copy): gx = x_fwd@W[0] + x_bwd@W[1].
                wih_p = jnp.zeros((num_dirs, Hp, G), jnp.float32)
                for dd in range(num_dirs):
                    wih_p = wih_p.at[dd, :H, :].set(w_ih[dd * H:(dd + 1) * H, :])
            whh_p = jnp.zeros((Hp, G), jnp.float32).at[:H, :].set(w_hh)
            flat += [wih_p.astype(jnp.bfloat16), whh_p.astype(jnp.bfloat16), b]
    return embed_p, flat


# ---------------------------------------------------------------------------
# Full forward pass.
# ---------------------------------------------------------------------------
def lstm_feature_extractor(inputs, params, *, num_layers, hidden_size, bdrnn,
                           attn_type):
    if attn_type not in ("last", "avg"):
        # TODO(synk): attn_type='dot' needs DotAttentionLayer, not defined in the spec.
        raise NotImplementedError("attn_type 'dot' not implemented")

    data, lengths = inputs
    B, L = data.shape
    E = params["embed"].shape[1]
    num_dirs = 2 if bdrnn else 1
    H = hidden_size // 2 if bdrnn else hidden_size

    Hp = _round_up(H, 64)           # => 4*Hp multiple of 256 (full MXU N tiles)
    Ep = _round_up(E, 8)
    G = 4 * Hp
    Cn = num_dirs * Hp
    OutP = _round_up(Cn, 128)       # lane-dense output width

    # Batch tile: as big as the (padded) real batch allows, capped so the
    # per-timestep (BT, G) f32 gate tile stays within ~half the vreg file.
    bt_cap = max(8, min(128, ((128 * 1024) // (4 * G)) // 8 * 8))
    BT = min(bt_cap, _round_up(B, 8))
    B_pad = _round_up(B, BT)

    embed_p, flat_w = prepare_lstm_params(
        params, num_layers=num_layers, num_dirs=num_dirs, H=H, Hp=Hp, E=E, Ep=Ep)

    # Embedding gather directly in time-major order (transpose the cheap int32
    # index matrix instead of the gathered (B, L, Ep) activations).
    # TODO(synk): the gather itself could be fused into the kernel via scalar
    # prefetch + pl.Element row indexing for very large vocab/seq; kept in XLA here.
    emb_tm = jnp.take(embed_p, data.T.astype(jnp.int32), axis=0)   # (L, B, Ep) bf16
    lens = lengths.astype(jnp.int32)
    if B_pad != B:
        emb_tm = jnp.pad(emb_tm, ((0, 0), (0, B_pad - B), (0, 0)))
        lens = jnp.pad(lens, (0, B_pad - B), constant_values=1)
    len_col = lens.reshape(B_pad, 1)

    kernel = make_lstm_kernel(num_layers=num_layers, num_dirs=num_dirs, L=L,
                              BT=BT, Hp=Hp, Ep=Ep, Cn=Cn, G=G, OutP=OutP,
                              attn_type=attn_type)

    in_specs = [
        pl.BlockSpec((BT, 1), lambda i: (i, 0)),
        pl.BlockSpec((L, BT, Ep), lambda i: (0, i, 0)),
    ]
    for w in flat_w:
        # TODO(synk): single-buffer these grid-invariant weights
        # (pipeline_mode=pl.Buffered(1)) to halve their VMEM on big models.
        in_specs.append(pl.BlockSpec(w.shape, lambda i, n=w.ndim: (0,) * n))

    scratch_defs = [
        ((num_dirs, L, BT, G), jnp.float32),    # precomputed x@W_ih + b (both dirs)
        ((num_dirs, L, BT, Hp), jnp.bfloat16),  # per-direction h sequence (bf16)
        ((num_dirs, BT, Hp), jnp.float32),      # h state
        ((num_dirs, BT, Hp), jnp.float32),      # c state
        ((num_dirs, BT, Hp), jnp.float32),      # 'avg' time-sum accumulator
    ]
    scratch_shapes = [pltpu.VMEM(s, d) for s, d in scratch_defs]

    # Explicit scoped-VMEM limit from the computed footprint (inputs/outputs
    # double-buffered by the pipeline), clamped below v7x's 64 MiB physical.
    vmem_need = sum(_vmem_bytes(s, d) for s, d in scratch_defs)
    vmem_need += 2 * (_vmem_bytes((BT, 1), jnp.int32)
                      + _vmem_bytes((L, BT, Ep), jnp.bfloat16)
                      + _vmem_bytes((BT, OutP), jnp.float32)
                      + sum(_vmem_bytes(w.shape, w.dtype) for w in flat_w))
    vmem_limit = int(min(60 * 2**20, max(32 * 2**20, vmem_need * 5 // 4 + (2 << 20))))

    out = pl.pallas_call(
        kernel,
        out_shape=jax.ShapeDtypeStruct((B_pad, OutP), jnp.float32),
        grid=(B_pad // BT,),
        in_specs=in_specs,
        out_specs=pl.BlockSpec((BT, OutP), lambda i: (i, 0)),
        scratch_shapes=scratch_shapes,
        compiler_params=pltpu.CompilerParams(
            dimension_semantics=("parallel",),      # batch tiles -> megacore split
            vmem_limit_bytes=vmem_limit),
    )(len_col, emb_tm, *flat_w)

    # Strip batch padding and the per-direction channel padding (Hp -> H).
    feats = [out[:B, d * Hp:d * Hp + H] for d in range(num_dirs)]
    return jnp.concatenate(feats, axis=1) if num_dirs > 1 else feats[0]


# ---------------------------------------------------------------------------
# Deterministic parameter init (PyTorch nn.LSTM layout) + example run.
# ---------------------------------------------------------------------------
def init_params(key, vocab_size, emb_size, num_layers, hidden_size, bdrnn):
    num_dirs = 2 if bdrnn else 1
    H = hidden_size // 2 if bdrnn else hidden_size
    keys = list(jax.random.split(key, 1 + num_layers * num_dirs * 4))

    embed = jax.random.normal(keys.pop(), (vocab_size, emb_size), jnp.float32) * 0.1
    lstm = []
    for layer in range(num_layers):
        in_size = emb_size if layer == 0 else num_dirs * H
        dirs = []
        for _ in range(num_dirs):
            dirs.append({
                "w_ih": jax.random.normal(keys.pop(), (4 * H, in_size), jnp.float32) * 0.1,
                "w_hh": jax.random.normal(keys.pop(), (4 * H, H), jnp.float32) * 0.1,
                "b_ih": jax.random.normal(keys.pop(), (4 * H,), jnp.float32) * 0.01,
                "b_hh": jax.random.normal(keys.pop(), (4 * H,), jnp.float32) * 0.01,
            })
        lstm.append(dirs)
    return {"embed": embed, "lstm": lstm}


if __name__ == "__main__":
    # Small shapes consistent with the module.
    B, L = 2, 16
    vocab_size, emb_size = 50, 32
    num_layers = 2
    hidden_size = 32
    bdrnn = True

    key = jax.random.PRNGKey(0)
    k_param, k_data = jax.random.split(key)

    params = init_params(k_param, vocab_size, emb_size, num_layers, hidden_size, bdrnn)
    data = jax.random.randint(k_data, (B, L), 0, vocab_size, dtype=jnp.int32)
    lengths = jnp.array([L, L - 5], dtype=jnp.int32)   # descending, as pack_padded expects

    out_last = lstm_feature_extractor((data, lengths), params,
                                      num_layers=num_layers, hidden_size=hidden_size,
                                      bdrnn=bdrnn, attn_type="last")
    out_avg = lstm_feature_extractor((data, lengths), params,
                                     num_layers=num_layers, hidden_size=hidden_size,
                                     bdrnn=bdrnn, attn_type="avg")
    out_last, out_avg = jax.block_until_ready((out_last, out_avg))

    assert out_last.shape == (B, hidden_size), out_last.shape
    assert out_avg.shape == (B, hidden_size), out_avg.shape
    assert bool(jnp.all(jnp.isfinite(out_last))) and bool(jnp.all(jnp.isfinite(out_avg)))
    print("KERNEL_OK")
</pallas_src>

<mosaic_0001>
module attributes {stable_mosaic.version = 11 : i64} {
  func.func @kernel(%arg0: i32, %arg1: memref<8x1xi32, #tpu.memory_space<vmem>>, %arg2: memref<16x8x32xbf16, #tpu.memory_space<vmem>>, %arg3: memref<32x256xbf16, #tpu.memory_space<vmem>>, %arg4: memref<64x256xbf16, #tpu.memory_space<vmem>>, %arg5: memref<1x256xf32, #tpu.memory_space<vmem>>, %arg6: memref<32x256xbf16, #tpu.memory_space<vmem>>, %arg7: memref<64x256xbf16, #tpu.memory_space<vmem>>, %arg8: memref<1x256xf32, #tpu.memory_space<vmem>>, %arg9: memref<2x64x256xbf16, #tpu.memory_space<vmem>>, %arg10: memref<64x256xbf16, #tpu.memory_space<vmem>>, %arg11: memref<1x256xf32, #tpu.memory_space<vmem>>, %arg12: memref<2x64x256xbf16, #tpu.memory_space<vmem>>, %arg13: memref<64x256xbf16, #tpu.memory_space<vmem>>, %arg14: memref<1x256xf32, #tpu.memory_space<vmem>>, %arg15: memref<8x128xf32, #tpu.memory_space<vmem>>, %arg16: memref<2x16x8x256xf32, #tpu.memory_space<vmem>>, %arg17: memref<2x16x8x64xbf16, #tpu.memory_space<vmem>>, %arg18: memref<2x8x64xf32, #tpu.memory_space<vmem>>, %arg19: memref<2x8x64xf32, #tpu.memory_space<vmem>>, %arg20: memref<2x8x64xf32, #tpu.memory_space<vmem>>) attributes {dimension_semantics = [#tpu.dimension_semantics<parallel>], iteration_bounds = array<i64: 1>, scalar_prefetch = 0 : i64, scratch_operands = 5 : i64, tpu.core_type = #tpu.core_type<tc>, window_params = [{transform_indices = @transform_0, window_bounds = array<i64: 8, 1>}, {transform_indices = @transform_1, window_bounds = array<i64: 16, 8, 32>}, {pipeline_mode = #tpu.pipeline_mode<synchronous>, transform_indices = @transform_2, window_bounds = array<i64: 32, 256>}, {pipeline_mode = #tpu.pipeline_mode<synchronous>, transform_indices = @transform_3, window_bounds = array<i64: 64, 256>}, {pipeline_mode = #tpu.pipeline_mode<synchronous>, transform_indices = @transform_4, window_bounds = array<i64: 1, 256>}, {pipeline_mode = #tpu.pipeline_mode<synchronous>, transform_indices = @transform_5, window_bounds = array<i64: 32, 256>}, {pipeline_mode = #tpu.pipeline_mode<synchronous>, transform_indices = @transform_6, window_bounds = array<i64: 64, 256>}, {pipeline_mode = #tpu.pipeline_mode<synchronous>, transform_indices = @transform_7, window_bounds = array<i64: 1, 256>}, {pipeline_mode = #tpu.pipeline_mode<synchronous>, transform_indices = @transform_8, window_bounds = array<i64: 2, 64, 256>}, {pipeline_mode = #tpu.pipeline_mode<synchronous>, transform_indices = @transform_9, window_bounds = array<i64: 64, 256>}, {pipeline_mode = #tpu.pipeline_mode<synchronous>, transform_indices = @transform_10, window_bounds = array<i64: 1, 256>}, {pipeline_mode = #tpu.pipeline_mode<synchronous>, transform_indices = @transform_11, window_bounds = array<i64: 2, 64, 256>}, {pipeline_mode = #tpu.pipeline_mode<synchronous>, transform_indices = @transform_12, window_bounds = array<i64: 64, 256>}, {pipeline_mode = #tpu.pipeline_mode<synchronous>, transform_indices = @transform_13, window_bounds = array<i64: 1, 256>}, {transform_indices = @transform_14, window_bounds = array<i64: 8, 128>}]} {
    %c0 = arith.constant 0 : index
    %c0_0 = arith.constant 0 : index
    %0 = vector.load %arg1[%c0, %c0_0] : memref<8x1xi32, #tpu.memory_space<vmem>>, vector<8x1xi32>
    %c0_1 = arith.constant 0 : index
    %c0_2 = arith.constant 0 : index
    %c0_3 = arith.constant 0 : index
    %1 = vector.load %arg2[%c0_1, %c0_2, %c0_3] : memref<16x8x32xbf16, #tpu.memory_space<vmem>>, vector<16x8x32xbf16>
    %2 = vector.shape_cast %1 : vector<16x8x32xbf16> to vector<128x32xbf16>
    %c0_4 = arith.constant 0 : index
    %c0_5 = arith.constant 0 : index
    %3 = vector.load %arg3[%c0_4, %c0_5] : memref<32x256xbf16, #tpu.memory_space<vmem>>, vector<32x256xbf16>
    %cst = arith.constant dense<0.000000e+00> : vector<128x256xf32>
    %4 = tpu.matmul %2, %3, %cst {dimension_numbers = #tpu.dot_dimension_numbers<[1], [0], [0], [1], [0, 0, 1, 1], [], []>} : vector<128x32xbf16>, vector<32x256xbf16>, vector<128x256xf32> -> vector<128x256xf32>
    %5 = vector.shape_cast %4 : vector<128x256xf32> to vector<16x8x256xf32>
    %c0_6 = arith.constant 0 : index
    %c0_7 = arith.constant 0 : index
    %6 = vector.load %arg5[%c0_6, %c0_7] : memref<1x256xf32, #tpu.memory_space<vmem>>, vector<1x256xf32>
    %7 = vector.shape_cast %6 : vector<1x256xf32> to vector<1x1x256xf32>
    %8 = vector.broadcast %7 : vector<1x1x256xf32> to vector<16x8x256xf32>
    %9 = arith.addf %5, %8 : vector<16x8x256xf32>
    %c0_8 = arith.constant 0 : index
    %c0_9 = arith.constant 0 : index
    %c0_10 = arith.constant 0 : index
    %c0_11 = arith.constant 0 : index
    %10 = vector.load %arg16[%c0_8, %c0_9, %c0_10, %c0_11] : memref<2x16x8x256xf32, #tpu.memory_space<vmem>>, vector<1x16x8x256xf32>
    %11 = vector.shape_cast %10 : vector<1x16x8x256xf32> to vector<16x8x256xf32>
    %12 = vector.shape_cast %9 : vector<16x8x256xf32> to vector<1x16x8x256xf32>
    tpu.vector_store %arg16[%c0_8, %c0_9, %c0_10, %c0_11], %12 {strides = array<i32>} : memref<2x16x8x256xf32, #tpu.memory_space<vmem>>, vector<1x16x8x256xf32>,
    %c0_12 = arith.constant 0 : index
    %c0_13 = arith.constant 0 : index
    %13 = vector.load %arg6[%c0_12, %c0_13] : memref<32x256xbf16, #tpu.memory_space<vmem>>, vector<32x256xbf16>
    %cst_14 = arith.constant dense<0.000000e+00> : vector<128x256xf32>
    %14 = tpu.matmul %2, %13, %cst_14 {dimension_numbers = #tpu.dot_dimension_numbers<[1], [0], [0], [1], [0, 0, 1, 1], [], []>} : vector<128x32xbf16>, vector<32x256xbf16>, vector<128x256xf32> -> vector<128x256xf32>
    %15 = vector.shape_cast %14 : vector<128x256xf32> to vector<16x8x256xf32>
    %c0_15 = arith.constant 0 : index
    %c0_16 = arith.constant 0 : index
    %16 = vector.load %arg8[%c0_15, %c0_16] : memref<1x256xf32, #tpu.memory_space<vmem>>, vector<1x256xf32>
    %17 = vector.shape_cast %16 : vector<1x256xf32> to vector<1x1x256xf32>
    %18 = vector.broadcast %17 : vector<1x1x256xf32> to vector<16x8x256xf32>
    %19 = arith.addf %15, %18 : vector<16x8x256xf32>
    %c1 = arith.constant 1 : index
    %c0_17 = arith.constant 0 : index
    %c0_18 = arith.constant 0 : index
    %c0_19 = arith.constant 0 : index
    %20 = vector.load %arg16[%c1, %c0_17, %c0_18, %c0_19] : memref<2x16x8x256xf32, #tpu.memory_space<vmem>>, vector<1x16x8x256xf32>
    %21 = vector.shape_cast %20 : vector<1x16x8x256xf32> to vector<16x8x256xf32>
    %22 = vector.shape_cast %19 : vector<16x8x256xf32> to vector<1x16x8x256xf32>
    tpu.vector_store %arg16[%c1, %c0_17, %c0_18, %c0_19], %22 {strides = array<i32>} : memref<2x16x8x256xf32, #tpu.memory_space<vmem>>, vector<1x16x8x256xf32>,
    %cst_20 = arith.constant 0.000000e+00 : f32
    %23 = vector.broadcast %cst_20 : f32 to vector<2x8x64xf32>
    %c0_21 = arith.constant 0 : index
    %c0_22 = arith.constant 0 : index
    %c0_23 = arith.constant 0 : index
    %24 = vector.load %arg18[%c0_21, %c0_22, %c0_23] : memref<2x8x64xf32, #tpu.memory_space<vmem>>, vector<2x8x64xf32>
    tpu.vector_store %arg18[%c0_21, %c0_22, %c0_23], %23 {strides = array<i32>} : memref<2x8x64xf32, #tpu.memory_space<vmem>>, vector<2x8x64xf32>,
    %cst_24 = arith.constant 0.000000e+00 : f32
    %25 = vector.broadcast %cst_24 : f32 to vector<2x8x64xf32>
    %c0_25 = arith.constant 0 : index
    %c0_26 = arith.constant 0 : index
    %c0_27 = arith.constant 0 : index
    %26 = vector.load %arg19[%c0_25, %c0_26, %c0_27] : memref<2x8x64xf32, #tpu.memory_space<vmem>>, vector<2x8x64xf32>
    tpu.vector_store %arg19[%c0_25, %c0_26, %c0_27], %25 {strides = array<i32>} : memref<2x8x64xf32, #tpu.memory_space<vmem>>, vector<2x8x64xf32>,
    %c0_i32 = arith.constant 0 : i32
    %c8_i32 = arith.constant 8 : i32
    %27 = arith.addi %c0_i32, %c8_i32 : i32
    %c1_i32 = arith.constant 1 : i32
    scf.for %arg21 = %c0_i32 to %27 step %c1_i32  : i32 {
      %c1_i32_85 = arith.constant 1 : i32
      %75 = arith.muli %arg21, %c1_i32_85 : i32
      %c0_i32_86 = arith.constant 0 : i32
      %76 = arith.addi %c0_i32_86, %75 : i32
      %c2_i32 = arith.constant 2 : i32
      %77 = arith.muli %76, %c2_i32 : i32
      %c0_i32_87 = arith.constant 0 : i32
      %78 = arith.addi %77, %c0_i32_87 : i32
      %c0_88 = arith.constant 0 : index
      %c0_89 = arith.constant 0 : index
      %c0_90 = arith.constant 0 : index
      %79 = vector.load %arg18[%c0_88, %c0_89, %c0_90] : memref<2x8x64xf32, #tpu.memory_space<vmem>>, vector<1x8x64xf32>
      %80 = vector.shape_cast %79 : vector<1x8x64xf32> to vector<8x64xf32>
      %c0_91 = arith.constant 0 : index
      %c0_92 = arith.constant 0 : index
      %c0_93 = arith.constant 0 : index
      %81 = vector.load %arg19[%c0_91, %c0_92, %c0_93] : memref<2x8x64xf32, #tpu.memory_space<vmem>>, vector<1x8x64xf32>
      %82 = vector.shape_cast %81 : vector<1x8x64xf32> to vector<8x64xf32>
      %c0_94 = arith.constant 0 : index
      %83 = arith.index_cast %78 : i32 to index
      %c0_95 = arith.constant 0 : index
      %c0_96 = arith.constant 0 : index
      %84 = vector.load %arg16[%c0_94, %83, %c0_95, %c0_96] : memref<2x16x8x256xf32, #tpu.memory_space<vmem>>, vector<1x1x8x256xf32>
      %85 = vector.shape_cast %84 : vector<1x1x8x256xf32> to vector<8x256xf32>
      %86 = arith.truncf %80 : vector<8x64xf32> to vector<8x64xbf16>
      %c0_97 = arith.constant 0 : index
      %c0_98 = arith.constant 0 : index
      %87 = vector.load %arg4[%c0_97, %c0_98] : memref<64x256xbf16, #tpu.memory_space<vmem>>, vector<64x256xbf16>
      %cst_99 = arith.constant dense<0.000000e+00> : vector<8x256xf32>
      %88 = tpu.matmul %86, %87, %cst_99 {dimension_numbers = #tpu.dot_dimension_numbers<[1], [0], [0], [1], [0, 0, 1, 1], [], []>} : vector<8x64xbf16>, vector<64x256xbf16>, vector<8x256xf32> -> vector<8x256xf32>
      %89 = arith.addf %85, %88 : vector<8x256xf32>
      %90 = vector.extract_strided_slice %89 {offsets = [0, 0], sizes = [8, 64], strides = [1, 1]} : vector<8x256xf32> to vector<8x64xf32>
      %91 = arith.negf %90 : vector<8x64xf32>
      %92 = math.exp %91 : vector<8x64xf32>
      %cst_100 = arith.constant 1.000000e+00 : f32
      %93 = vector.broadcast %cst_100 : f32 to vector<8x64xf32>
      %94 = arith.addf %93, %92 : vector<8x64xf32>
      %95 = arith.divf %93, %94 : vector<8x64xf32>
      %96 = vector.extract_strided_slice %89 {offsets = [0, 64], sizes = [8, 64], strides = [1, 1]} : vector<8x256xf32> to vector<8x64xf32>
      %97 = arith.negf %96 : vector<8x64xf32>
      %98 = math.exp %97 : vector<8x64xf32>
      %cst_101 = arith.constant 1.000000e+00 : f32
      %99 = vector.broadcast %cst_101 : f32 to vector<8x64xf32>
      %100 = arith.addf %99, %98 : vector<8x64xf32>
      %101 = arith.divf %99, %100 : vector<8x64xf32>
      %102 = vector.extract_strided_slice %89 {offsets = [0, 128], sizes = [8, 64], strides = [1, 1]} : vector<8x256xf32> to vector<8x64xf32>
      %103 = math.tanh %102 : vector<8x64xf32>
      %104 = vector.extract_strided_slice %89 {offsets = [0, 192], sizes = [8, 64], strides = [1, 1]} : vector<8x256xf32> to vector<8x64xf32>
      %105 = arith.negf %104 : vector<8x64xf32>
      %106 = math.exp %105 : vector<8x64xf32>
      %cst_102 = arith.constant 1.000000e+00 : f32
      %107 = vector.broadcast %cst_102 : f32 to vector<8x64xf32>
      %108 = arith.addf %107, %106 : vector<8x64xf32>
      %109 = arith.divf %107, %108 : vector<8x64xf32>
      %110 = arith.mulf %101, %82 : vector<8x64xf32>
      %111 = arith.mulf %95, %103 : vector<8x64xf32>
      %112 = arith.addf %110, %111 : vector<8x64xf32>
      %113 = math.tanh %112 : vector<8x64xf32>
      %114 = arith.mulf %109, %113 : vector<8x64xf32>
      %115 = vector.broadcast %78 : i32 to vector<8x1xi32>
      %116 = arith.cmpi sgt, %0, %115 : vector<8x1xi32>
      %cst_103 = arith.constant 0.000000e+00 : f32
      %117 = vector.shape_cast %116 : vector<8x1xi1> to vector<8x1xi1>
      %118 = vector.broadcast %117 : vector<8x1xi1> to vector<8x64xi1>
      %119 = vector.broadcast %cst_103 : f32 to vector<8x64xf32>
      %120 = arith.select %118, %114, %119 : vector<8x64xi1>, vector<8x64xf32>
      %121 = arith.truncf %120 : vector<8x64xf32> to vector<8x64xbf16>
      %c0_104 = arith.constant 0 : index
      %122 = arith.index_cast %78 : i32 to index
      %c0_105 = arith.constant 0 : index
      %c0_106 = arith.constant 0 : index
      %123 = vector.load %arg17[%c0_104, %122, %c0_105, %c0_106] : memref<2x16x8x64xbf16, #tpu.memory_space<vmem>>, vector<1x1x8x64xbf16>
      %124 = vector.shape_cast %123 : vector<1x1x8x64xbf16> to vector<8x64xbf16>
      %125 = vector.shape_cast %121 : vector<8x64xbf16> to vector<1x1x8x64xbf16>
      tpu.vector_store %arg17[%c0_104, %122, %c0_105, %c0_106], %125 {strides = array<i32>} : memref<2x16x8x64xbf16, #tpu.memory_space<vmem>>, vector<1x1x8x64xbf16>,
      %126 = vector.shape_cast %116 : vector<8x1xi1> to vector<8x1xi1>
      %127 = vector.broadcast %126 : vector<8x1xi1> to vector<8x64xi1>
      %128 = arith.select %127, %114, %80 : vector<8x64xi1>, vector<8x64xf32>
      %c0_107 = arith.constant 0 : index
      %c0_108 = arith.constant 0 : index
      %c0_109 = arith.constant 0 : index
      %129 = vector.load %arg18[%c0_107, %c0_108, %c0_109] : memref<2x8x64xf32, #tpu.memory_space<vmem>>, vector<1x8x64xf32>
      %130 = vector.shape_cast %129 : vector<1x8x64xf32> to vector<8x64xf32>
      %131 = vector.shape_cast %128 : vector<8x64xf32> to vector<1x8x64xf32>
      tpu.vector_store %arg18[%c0_107, %c0_108, %c0_109], %131 {strides = array<i32>} : memref<2x8x64xf32, #tpu.memory_space<vmem>>, vector<1x8x64xf32>,
      %132 = vector.shape_cast %116 : vector<8x1xi1> to vector<8x1xi1>
      %133 = vector.broadcast %132 : vector<8x1xi1> to vector<8x64xi1>
      %134 = arith.select %133, %112, %82 : vector<8x64xi1>, vector<8x64xf32>
      %c0_110 = arith.constant 0 : index
      %c0_111 = arith.constant 0 : index
      %c0_112 = arith.constant 0 : index
      %135 = vector.load %arg19[%c0_110, %c0_111, %c0_112] : memref<2x8x64xf32, #tpu.memory_space<vmem>>, vector<1x8x64xf32>
      %136 = vector.shape_cast %135 : vector<1x8x64xf32> to vector<8x64xf32>
      %137 = vector.shape_cast %134 : vector<8x64xf32> to vector<1x8x64xf32>
      tpu.vector_store %arg19[%c0_110, %c0_111, %c0_112], %137 {strides = array<i32>} : memref<2x8x64xf32, #tpu.memory_space<vmem>>, vector<1x8x64xf32>,
      %c15_i32 = arith.constant 15 : i32
      %138 = arith.subi %c15_i32, %78 : i32
      %c1_113 = arith.constant 1 : index
      %c0_114 = arith.constant 0 : index
      %c0_115 = arith.constant 0 : index
      %139 = vector.load %arg18[%c1_113, %c0_114, %c0_115] : memref<2x8x64xf32, #tpu.memory_space<vmem>>, vector<1x8x64xf32>
      %140 = vector.shape_cast %139 : vector<1x8x64xf32> to vector<8x64xf32>
      %c1_116 = arith.constant 1 : index
      %c0_117 = arith.constant 0 : index
      %c0_118 = arith.constant 0 : index
      %141 = vector.load %arg19[%c1_116, %c0_117, %c0_118] : memref<2x8x64xf32, #tpu.memory_space<vmem>>, vector<1x8x64xf32>
      %142 = vector.shape_cast %141 : vector<1x8x64xf32> to vector<8x64xf32>
      %c1_119 = arith.constant 1 : index
      %143 = arith.index_cast %138 : i32 to index
      %c0_120 = arith.constant 0 : index
      %c0_121 = arith.constant 0 : index
      %144 = vector.load %arg16[%c1_119, %143, %c0_120, %c0_121] : memref<2x16x8x256xf32, #tpu.memory_space<vmem>>, vector<1x1x8x256xf32>
      %145 = vector.shape_cast %144 : vector<1x1x8x256xf32> to vector<8x256xf32>
      %146 = arith.truncf %140 : vector<8x64xf32> to vector<8x64xbf16>
      %c0_122 = arith.constant 0 : index
      %c0_123 = arith.constant 0 : index
      %147 = vector.load %arg7[%c0_122, %c0_123] : memref<64x256xbf16, #tpu.memory_space<vmem>>, vector<64x256xbf16>
      %cst_124 = arith.constant dense<0.000000e+00> : vector<8x256xf32>
      %148 = tpu.matmul %146, %147, %cst_124 {dimension_numbers = #tpu.dot_dimension_numbers<[1], [0], [0], [1], [0, 0, 1, 1], [], []>} : vector<8x64xbf16>, vector<64x256xbf16>, vector<8x256xf32> -> vector<8x256xf32>
      %149 = arith.addf %145, %148 : vector<8x256xf32>
      %150 = vector.extract_strided_slice %149 {offsets = [0, 0], sizes = [8, 64], strides = [1, 1]} : vector<8x256xf32> to vector<8x64xf32>
      %151 = arith.negf %150 : vector<8x64xf32>
      %152 = math.exp %151 : vector<8x64xf32>
      %cst_125 = arith.constant 1.000000e+00 : f32
      %153 = vector.broadcast %cst_125 : f32 to vector<8x64xf32>
      %154 = arith.addf %153, %152 : vector<8x64xf32>
      %155 = arith.divf %153, %154 : vector<8x64xf32>
      %156 = vector.extract_strided_slice %149 {offsets = [0, 64], sizes = [8, 64], strides = [1, 1]} : vector<8x256xf32> to vector<8x64xf32>
      %157 = arith.negf %156 : vector<8x64xf32>
      %158 = math.exp %157 : vector<8x64xf32>
      %cst_126 = arith.constant 1.000000e+00 : f32
      %159 = vector.broadcast %cst_126 : f32 to vector<8x64xf32>
      %160 = arith.addf %159, %158 : vector<8x64xf32>
      %161 = arith.divf %159, %160 : vector<8x64xf32>
      %162 = vector.extract_strided_slice %149 {offsets = [0, 128], sizes = [8, 64], strides = [1, 1]} : vector<8x256xf32> to vector<8x64xf32>
      %163 = math.tanh %162 : vector<8x64xf32>
      %164 = vector.extract_strided_slice %149 {offsets = [0, 192], sizes = [8, 64], strides = [1, 1]} : vector<8x256xf32> to vector<8x64xf32>
      %165 = arith.negf %164 : vector<8x64xf32>
      %166 = math.exp %165 : vector<8x64xf32>
      %cst_127 = arith.constant 1.000000e+00 : f32
      %167 = vector.broadcast %cst_127 : f32 to vector<8x64xf32>
      %168 = arith.addf %167, %166 : vector<8x64xf32>
      %169 = arith.divf %167, %168 : vector<8x64xf32>
      %170 = arith.mulf %161, %142 : vector<8x64xf32>
      %171 = arith.mulf %155, %163 : vector<8x64xf32>
      %172 = arith.addf %170, %171 : vector<8x64xf32>
      %173 = math.tanh %172 : vector<8x64xf32>
      %174 = arith.mulf %169, %173 : vector<8x64xf32>
      %175 = vector.broadcast %138 : i32 to vector<8x1xi32>
      %176 = arith.cmpi sgt, %0, %175 : vector<8x1xi32>
      %cst_128 = arith.constant 0.000000e+00 : f32
      %177 = vector.shape_cast %176 : vector<8x1xi1> to vector<8x1xi1>
      %178 = vector.broadcast %177 : vector<8x1xi1> to vector<8x64xi1>
      %179 = vector.broadcast %cst_128 : f32 to vector<8x64xf32>
      %180 = arith.select %178, %174, %179 : vector<8x64xi1>, vector<8x64xf32>
      %181 = arith.truncf %180 : vector<8x64xf32> to vector<8x64xbf16>
      %c1_129 = arith.constant 1 : index
      %182 = arith.index_cast %138 : i32 to index
      %c0_130 = arith.constant 0 : index
      %c0_131 = arith.constant 0 : index
      %183 = vector.load %arg17[%c1_129, %182, %c0_130, %c0_131] : memref<2x16x8x64xbf16, #tpu.memory_space<vmem>>, vector<1x1x8x64xbf16>
      %184 = vector.shape_cast %183 : vector<1x1x8x64xbf16> to vector<8x64xbf16>
      %185 = vector.shape_cast %181 : vector<8x64xbf16> to vector<1x1x8x64xbf16>
      tpu.vector_store %arg17[%c1_129, %182, %c0_130, %c0_131], %185 {strides = array<i32>} : memref<2x16x8x64xbf16, #tpu.memory_space<vmem>>, vector<1x1x8x64xbf16>,
      %186 = vector.shape_cast %176 : vector<8x1xi1> to vector<8x1xi1>
      %187 = vector.broadcast %186 : vector<8x1xi1> to vector<8x64xi1>
      %188 = arith.select %187, %174, %140 : vector<8x64xi1>, vector<8x64xf32>
      %c1_132 = arith.constant 1 : index
      %c0_133 = arith.constant 0 : index
      %c0_134 = arith.constant 0 : index
      %189 = vector.load %arg18[%c1_132, %c0_133, %c0_134] : memref<2x8x64xf32, #tpu.memory_space<vmem>>, vector<1x8x64xf32>
      %190 = vector.shape_cast %189 : vector<1x8x64xf32> to vector<8x64xf32>
      %191 = vector.shape_cast %188 : vector<8x64xf32> to vector<1x8x64xf32>
      tpu.vector_store %arg18[%c1_132, %c0_133, %c0_134], %191 {strides = array<i32>} : memref<2x8x64xf32, #tpu.memory_space<vmem>>, vector<1x8x64xf32>,
      %192 = vector.shape_cast %176 : vector<8x1xi1> to vector<8x1xi1>
      %193 = vector.broadcast %192 : vector<8x1xi1> to vector<8x64xi1>
      %194 = arith.select %193, %172, %142 : vector<8x64xi1>, vector<8x64xf32>
      %c1_135 = arith.constant 1 : index
      %c0_136 = arith.constant 0 : index
      %c0_137 = arith.constant 0 : index
      %195 = vector.load %arg19[%c1_135, %c0_136, %c0_137] : memref<2x8x64xf32, #tpu.memory_space<vmem>>, vector<1x8x64xf32>
      %196 = vector.shape_cast %195 : vector<1x8x64xf32> to vector<8x64xf32>
      %197 = vector.shape_cast %194 : vector<8x64xf32> to vector<1x8x64xf32>
      tpu.vector_store %arg19[%c1_135, %c0_136, %c0_137], %197 {strides = array<i32>} : memref<2x8x64xf32, #tpu.memory_space<vmem>>, vector<1x8x64xf32>,
      %c2_i32_138 = arith.constant 2 : i32
      %198 = arith.muli %76, %c2_i32_138 : i32
      %c1_i32_139 = arith.constant 1 : i32
      %199 = arith.addi %198, %c1_i32_139 : i32
      %c0_140 = arith.constant 0 : index
      %c0_141 = arith.constant 0 : index
      %c0_142 = arith.constant 0 : index
      %200 = vector.load %arg18[%c0_140, %c0_141, %c0_142] : memref<2x8x64xf32, #tpu.memory_space<vmem>>, vector<1x8x64xf32>
      %201 = vector.shape_cast %200 : vector<1x8x64xf32> to vector<8x64xf32>
      %c0_143 = arith.constant 0 : index
      %c0_144 = arith.constant 0 : index
      %c0_145 = arith.constant 0 : index
      %202 = vector.load %arg19[%c0_143, %c0_144, %c0_145] : memref<2x8x64xf32, #tpu.memory_space<vmem>>, vector<1x8x64xf32>
      %203 = vector.shape_cast %202 : vector<1x8x64xf32> to vector<8x64xf32>
      %c0_146 = arith.constant 0 : index
      %204 = arith.index_cast %199 : i32 to index
      %c0_147 = arith.constant 0 : index
      %c0_148 = arith.constant 0 : index
      %205 = vector.load %arg16[%c0_146, %204, %c0_147, %c0_148] : memref<2x16x8x256xf32, #tpu.memory_space<vmem>>, vector<1x1x8x256xf32>
      %206 = vector.shape_cast %205 : vector<1x1x8x256xf32> to vector<8x256xf32>
      %207 = arith.truncf %201 : vector<8x64xf32> to vector<8x64xbf16>
      %c0_149 = arith.constant 0 : index
      %c0_150 = arith.constant 0 : index
      %208 = vector.load %arg4[%c0_149, %c0_150] : memref<64x256xbf16, #tpu.memory_space<vmem>>, vector<64x256xbf16>
      %cst_151 = arith.constant dense<0.000000e+00> : vector<8x256xf32>
      %209 = tpu.matmul %207, %208, %cst_151 {dimension_numbers = #tpu.dot_dimension_numbers<[1], [0], [0], [1], [0, 0, 1, 1], [], []>} : vector<8x64xbf16>, vector<64x256xbf16>, vector<8x256xf32> -> vector<8x256xf32>
      %210 = arith.addf %206, %209 : vector<8x256xf32>
      %211 = vector.extract_strided_slice %210 {offsets = [0, 0], sizes = [8, 64], strides = [1, 1]} : vector<8x256xf32> to vector<8x64xf32>
      %212 = arith.negf %211 : vector<8x64xf32>
      %213 = math.exp %212 : vector<8x64xf32>
      %cst_152 = arith.constant 1.000000e+00 : f32
      %214 = vector.broadcast %cst_152 : f32 to vector<8x64xf32>
      %215 = arith.addf %214, %213 : vector<8x64xf32>
      %216 = arith.divf %214, %215 : vector<8x64xf32>
      %217 = vector.extract_strided_slice %210 {offsets = [0, 64], sizes = [8, 64], strides = [1, 1]} : vector<8x256xf32> to vector<8x64xf32>
      %218 = arith.negf %217 : vector<8x64xf32>
      %219 = math.exp %218 : vector<8x64xf32>
      %cst_153 = arith.constant 1.000000e+00 : f32
      %220 = vector.broadcast %cst_153 : f32 to vector<8x64xf32>
      %221 = arith.addf %220, %219 : vector<8x64xf32>
      %222 = arith.divf %220, %221 : vector<8x64xf32>
      %223 = vector.extract_strided_slice %210 {offsets = [0, 128], sizes = [8, 64], strides = [1, 1]} : vector<8x256xf32> to vector<8x64xf32>
      %224 = math.tanh %223 : vector<8x64xf32>
      %225 = vector.extract_strided_slice %210 {offsets = [0, 192], sizes = [8, 64], strides = [1, 1]} : vector<8x256xf32> to vector<8x64xf32>
      %226 = arith.negf %225 : vector<8x64xf32>
      %227 = math.exp %226 : vector<8x64xf32>
      %cst_154 = arith.constant 1.000000e+00 : f32
      %228 = vector.broadcast %cst_154 : f32 to vector<8x64xf32>
      %229 = arith.addf %228, %227 : vector<8x64xf32>
      %230 = arith.divf %228, %229 : vector<8x64xf32>
      %231 = arith.mulf %222, %203 : vector<8x64xf32>
      %232 = arith.mulf %216, %224 : vector<8x64xf32>
      %233 = arith.addf %231, %232 : vector<8x64xf32>
      %234 = math.tanh %233 : vector<8x64xf32>
      %235 = arith.mulf %230, %234 : vector<8x64xf32>
      %236 = vector.broadcast %199 : i32 to vector<8x1xi32>
      %237 = arith.cmpi sgt, %0, %236 : vector<8x1xi32>
      %cst_155 = arith.constant 0.000000e+00 : f32
      %238 = vector.shape_cast %237 : vector<8x1xi1> to vector<8x1xi1>
      %239 = vector.broadcast %238 : vector<8x1xi1> to vector<8x64xi1>
      %240 = vector.broadcast %cst_155 : f32 to vector<8x64xf32>
      %241 = arith.select %239, %235, %240 : vector<8x64xi1>, vector<8x64xf32>
      %242 = arith.truncf %241 : vector<8x64xf32> to vector<8x64xbf16>
      %c0_156 = arith.constant 0 : index
      %243 = arith.index_cast %199 : i32 to index
      %c0_157 = arith.constant 0 : index
      %c0_158 = arith.constant 0 : index
      %244 = vector.load %arg17[%c0_156, %243, %c0_157, %c0_158] : memref<2x16x8x64xbf16, #tpu.memory_space<vmem>>, vector<1x1x8x64xbf16>
      %245 = vector.shape_cast %244 : vector<1x1x8x64xbf16> to vector<8x64xbf16>
      %246 = vector.shape_cast %242 : vector<8x64xbf16> to vector<1x1x8x64xbf16>
      tpu.vector_store %arg17[%c0_156, %243, %c0_157, %c0_158], %246 {strides = array<i32>} : memref<2x16x8x64xbf16, #tpu.memory_space<vmem>>, vector<1x1x8x64xbf16>,
      %247 = vector.shape_cast %237 : vector<8x1xi1> to vector<8x1xi1>
      %248 = vector.broadcast %247 : vector<8x1xi1> to vector<8x64xi1>
      %249 = arith.select %248, %235, %201 : vector<8x64xi1>, vector<8x64xf32>
      %c0_159 = arith.constant 0 : index
      %c0_160 = arith.constant 0 : index
      %c0_161 = arith.constant 0 : index
      %250 = vector.load %arg18[%c0_159, %c0_160, %c0_161] : memref<2x8x64xf32, #tpu.memory_space<vmem>>, vector<1x8x64xf32>
      %251 = vector.shape_cast %250 : vector<1x8x64xf32> to vector<8x64xf32>
      %252 = vector.shape_cast %249 : vector<8x64xf32> to vector<1x8x64xf32>
      tpu.vector_store %arg18[%c0_159, %c0_160, %c0_161], %252 {strides = array<i32>} : memref<2x8x64xf32, #tpu.memory_space<vmem>>, vector<1x8x64xf32>,
      %253 = vector.shape_cast %237 : vector<8x1xi1> to vector<8x1xi1>
      %254 = vector.broadcast %253 : vector<8x1xi1> to vector<8x64xi1>
      %255 = arith.select %254, %233, %203 : vector<8x64xi1>, vector<8x64xf32>
      %c0_162 = arith.constant 0 : index
      %c0_163 = arith.constant 0 : index
      %c0_164 = arith.constant 0 : index
      %256 = vector.load %arg19[%c0_162, %c0_163, %c0_164] : memref<2x8x64xf32, #tpu.memory_space<vmem>>, vector<1x8x64xf32>
      %257 = vector.shape_cast %256 : vector<1x8x64xf32> to vector<8x64xf32>
      %258 = vector.shape_cast %255 : vector<8x64xf32> to vector<1x8x64xf32>
      tpu.vector_store %arg19[%c0_162, %c0_163, %c0_164], %258 {strides = array<i32>} : memref<2x8x64xf32, #tpu.memory_space<vmem>>, vector<1x8x64xf32>,
      %c15_i32_165 = arith.constant 15 : i32
      %259 = arith.subi %c15_i32_165, %199 : i32
      %c1_166 = arith.constant 1 : index
      %c0_167 = arith.constant 0 : index
      %c0_168 = arith.constant 0 : index
      %260 = vector.load %arg18[%c1_166, %c0_167, %c0_168] : memref<2x8x64xf32, #tpu.memory_space<vmem>>, vector<1x8x64xf32>
      %261 = vector.shape_cast %260 : vector<1x8x64xf32> to vector<8x64xf32>
      %c1_169 = arith.constant 1 : index
      %c0_170 = arith.constant 0 : index
      %c0_171 = arith.constant 0 : index
      %262 = vector.load %arg19[%c1_169, %c0_170, %c0_171] : memref<2x8x64xf32, #tpu.memory_space<vmem>>, vector<1x8x64xf32>
      %263 = vector.shape_cast %262 : vector<1x8x64xf32> to vector<8x64xf32>
      %c1_172 = arith.constant 1 : index
      %264 = arith.index_cast %259 : i32 to index
      %c0_173 = arith.constant 0 : index
      %c0_174 = arith.constant 0 : index
      %265 = vector.load %arg16[%c1_172, %264, %c0_173, %c0_174] : memref<2x16x8x256xf32, #tpu.memory_space<vmem>>, vector<1x1x8x256xf32>
      %266 = vector.shape_cast %265 : vector<1x1x8x256xf32> to vector<8x256xf32>
      %267 = arith.truncf %261 : vector<8x64xf32> to vector<8x64xbf16>
      %c0_175 = arith.constant 0 : index
      %c0_176 = arith.constant 0 : index
      %268 = vector.load %arg7[%c0_175, %c0_176] : memref<64x256xbf16, #tpu.memory_space<vmem>>, vector<64x256xbf16>
      %cst_177 = arith.constant dense<0.000000e+00> : vector<8x256xf32>
      %269 = tpu.matmul %267, %268, %cst_177 {dimension_numbers = #tpu.dot_dimension_numbers<[1], [0], [0], [1], [0, 0, 1, 1], [], []>} : vector<8x64xbf16>, vector<64x256xbf16>, vector<8x256xf32> -> vector<8x256xf32>
      %270 = arith.addf %266, %269 : vector<8x256xf32>
      %271 = vector.extract_strided_slice %270 {offsets = [0, 0], sizes = [8, 64], strides = [1, 1]} : vector<8x256xf32> to vector<8x64xf32>
      %272 = arith.negf %271 : vector<8x64xf32>
      %273 = math.exp %272 : vector<8x64xf32>
      %cst_178 = arith.constant 1.000000e+00 : f32
      %274 = vector.broadcast %cst_178 : f32 to vector<8x64xf32>
      %275 = arith.addf %274, %273 : vector<8x64xf32>
      %276 = arith.divf %274, %275 : vector<8x64xf32>
      %277 = vector.extract_strided_slice %270 {offsets = [0, 64], sizes = [8, 64], strides = [1, 1]} : vector<8x256xf32> to vector<8x64xf32>
      %278 = arith.negf %277 : vector<8x64xf32>
      %279 = math.exp %278 : vector<8x64xf32>
      %cst_179 = arith.constant 1.000000e+00 : f32
      %280 = vector.broadcast %cst_179 : f32 to vector<8x64xf32>
      %281 = arith.addf %280, %279 : vector<8x64xf32>
      %282 = arith.divf %280, %281 : vector<8x64xf32>
      %283 = vector.extract_strided_slice %270 {offsets = [0, 128], sizes = [8, 64], strides = [1, 1]} : vector<8x256xf32> to vector<8x64xf32>
      %284 = math.tanh %283 : vector<8x64xf32>
      %285 = vector.extract_strided_slice %270 {offsets = [0, 192], sizes = [8, 64], strides = [1, 1]} : vector<8x256xf32> to vector<8x64xf32>
      %286 = arith.negf %285 : vector<8x64xf32>
      %287 = math.exp %286 : vector<8x64xf32>
      %cst_180 = arith.constant 1.000000e+00 : f32
      %288 = vector.broadcast %cst_180 : f32 to vector<8x64xf32>
      %289 = arith.addf %288, %287 : vector<8x64xf32>
      %290 = arith.divf %288, %289 : vector<8x64xf32>
      %291 = arith.mulf %282, %263 : vector<8x64xf32>
      %292 = arith.mulf %276, %284 : vector<8x64xf32>
      %293 = arith.addf %291, %292 : vector<8x64xf32>
      %294 = math.tanh %293 : vector<8x64xf32>
      %295 = arith.mulf %290, %294 : vector<8x64xf32>
      %296 = vector.broadcast %259 : i32 to vector<8x1xi32>
      %297 = arith.cmpi sgt, %0, %296 : vector<8x1xi32>
      %cst_181 = arith.constant 0.000000e+00 : f32
      %298 = vector.shape_cast %297 : vector<8x1xi1> to vector<8x1xi1>
      %299 = vector.broadcast %298 : vector<8x1xi1> to vector<8x64xi1>
      %300 = vector.broadcast %cst_181 : f32 to vector<8x64xf32>
      %301 = arith.select %299, %295, %300 : vector<8x64xi1>, vector<8x64xf32>
      %302 = arith.truncf %301 : vector<8x64xf32> to vector<8x64xbf16>
      %c1_182 = arith.constant 1 : index
      %303 = arith.index_cast %259 : i32 to index
      %c0_183 = arith.constant 0 : index
      %c0_184 = arith.constant 0 : index
      %304 = vector.load %arg17[%c1_182, %303, %c0_183, %c0_184] : memref<2x16x8x64xbf16, #tpu.memory_space<vmem>>, vector<1x1x8x64xbf16>
      %305 = vector.shape_cast %304 : vector<1x1x8x64xbf16> to vector<8x64xbf16>
      %306 = vector.shape_cast %302 : vector<8x64xbf16> to vector<1x1x8x64xbf16>
      tpu.vector_store %arg17[%c1_182, %303, %c0_183, %c0_184], %306 {strides = array<i32>} : memref<2x16x8x64xbf16, #tpu.memory_space<vmem>>, vector<1x1x8x64xbf16>,
      %307 = vector.shape_cast %297 : vector<8x1xi1> to vector<8x1xi1>
      %308 = vector.broadcast %307 : vector<8x1xi1> to vector<8x64xi1>
      %309 = arith.select %308, %295, %261 : vector<8x64xi1>, vector<8x64xf32>
      %c1_185 = arith.constant 1 : index
      %c0_186 = arith.constant 0 : index
      %c0_187 = arith.constant 0 : index
      %310 = vector.load %arg18[%c1_185, %c0_186, %c0_187] : memref<2x8x64xf32, #tpu.memory_space<vmem>>, vector<1x8x64xf32>
      %311 = vector.shape_cast %310 : vector<1x8x64xf32> to vector<8x64xf32>
      %312 = vector.shape_cast %309 : vector<8x64xf32> to vector<1x8x64xf32>
      tpu.vector_store %arg18[%c1_185, %c0_186, %c0_187], %312 {strides = array<i32>} : memref<2x8x64xf32, #tpu.memory_space<vmem>>, vector<1x8x64xf32>,
      %313 = vector.shape_cast %297 : vector<8x1xi1> to vector<8x1xi1>
      %314 = vector.broadcast %313 : vector<8x1xi1> to vector<8x64xi1>
      %315 = arith.select %314, %293, %263 : vector<8x64xi1>, vector<8x64xf32>
      %c1_188 = arith.constant 1 : index
      %c0_189 = arith.constant 0 : index
      %c0_190 = arith.constant 0 : index
      %316 = vector.load %arg19[%c1_188, %c0_189, %c0_190] : memref<2x8x64xf32, #tpu.memory_space<vmem>>, vector<1x8x64xf32>
      %317 = vector.shape_cast %316 : vector<1x8x64xf32> to vector<8x64xf32>
      %318 = vector.shape_cast %315 : vector<8x64xf32> to vector<1x8x64xf32>
      tpu.vector_store %arg19[%c1_188, %c0_189, %c0_190], %318 {strides = array<i32>} : memref<2x8x64xf32, #tpu.memory_space<vmem>>, vector<1x8x64xf32>,
    }
    %c8_i32_28 = arith.constant 8 : i32
    %c0_29 = arith.constant 0 : index
    %c0_30 = arith.constant 0 : index
    %c0_31 = arith.constant 0 : index
    %c0_32 = arith.constant 0 : index
    %28 = vector.load %arg17[%c0_29, %c0_30, %c0_31, %c0_32] : memref<2x16x8x64xbf16, #tpu.memory_space<vmem>>, vector<1x16x8x64xbf16>
    %29 = vector.shape_cast %28 : vector<1x16x8x64xbf16> to vector<16x8x64xbf16>
    %30 = vector.shape_cast %29 : vector<16x8x64xbf16> to vector<128x64xbf16>
    %c1_33 = arith.constant 1 : index
    %c0_34 = arith.constant 0 : index
    %c0_35 = arith.constant 0 : index
    %c0_36 = arith.constant 0 : index
    %31 = vector.load %arg17[%c1_33, %c0_34, %c0_35, %c0_36] : memref<2x16x8x64xbf16, #tpu.memory_space<vmem>>, vector<1x16x8x64xbf16>
    %32 = vector.shape_cast %31 : vector<1x16x8x64xbf16> to vector<16x8x64xbf16>
    %33 = vector.shape_cast %32 : vector<16x8x64xbf16> to vector<128x64xbf16>
    %c0_37 = arith.constant 0 : index
    %c0_38 = arith.constant 0 : index
    %c0_39 = arith.constant 0 : index
    %34 = vector.load %arg9[%c0_37, %c0_38, %c0_39] : memref<2x64x256xbf16, #tpu.memory_space<vmem>>, vector<1x64x256xbf16>
    %35 = vector.shape_cast %34 : vector<1x64x256xbf16> to vector<64x256xbf16>
    %cst_40 = arith.constant dense<0.000000e+00> : vector<128x256xf32>
    %36 = tpu.matmul %30, %35, %cst_40 {dimension_numbers = #tpu.dot_dimension_numbers<[1], [0], [0], [1], [0, 0, 1, 1], [], []>} : vector<128x64xbf16>, vector<64x256xbf16>, vector<128x256xf32> -> vector<128x256xf32>
    %c1_41 = arith.constant 1 : index
    %c0_42 = arith.constant 0 : index
    %c0_43 = arith.constant 0 : index
    %37 = vector.load %arg9[%c1_41, %c0_42, %c0_43] : memref<2x64x256xbf16, #tpu.memory_space<vmem>>, vector<1x64x256xbf16>
    %38 = vector.shape_cast %37 : vector<1x64x256xbf16> to vector<64x256xbf16>
    %cst_44 = arith.constant dense<0.000000e+00> : vector<128x256xf32>
    %39 = tpu.matmul %33, %38, %cst_44 {dimension_numbers = #tpu.dot_dimension_numbers<[1], [0], [0], [1], [0, 0, 1, 1], [], []>} : vector<128x64xbf16>, vector<64x256xbf16>, vector<128x256xf32> -> vector<128x256xf32>
    %40 = arith.addf %36, %39 : vector<128x256xf32>
    %41 = vector.shape_cast %40 : vector<128x256xf32> to vector<16x8x256xf32>
    %c0_45 = arith.constant 0 : index
    %c0_46 = arith.constant 0 : index
    %42 = vector.load %arg11[%c0_45, %c0_46] : memref<1x256xf32, #tpu.memory_space<vmem>>, vector<1x256xf32>
    %43 = vector.shape_cast %42 : vector<1x256xf32> to vector<1x1x256xf32>
    %44 = vector.broadcast %43 : vector<1x1x256xf32> to vector<16x8x256xf32>
    %45 = arith.addf %41, %44 : vector<16x8x256xf32>
    %c0_47 = arith.constant 0 : index
    %c0_48 = arith.constant 0 : index
    %c0_49 = arith.constant 0 : index
    %c0_50 = arith.constant 0 : index
    %46 = vector.load %arg16[%c0_47, %c0_48, %c0_49, %c0_50] : memref<2x16x8x256xf32, #tpu.memory_space<vmem>>, vector<1x16x8x256xf32>
    %47 = vector.shape_cast %46 : vector<1x16x8x256xf32> to vector<16x8x256xf32>
    %48 = vector.shape_cast %45 : vector<16x8x256xf32> to vector<1x16x8x256xf32>
    tpu.vector_store %arg16[%c0_47, %c0_48, %c0_49, %c0_50], %48 {strides = array<i32>} : memref<2x16x8x256xf32, #tpu.memory_space<vmem>>, vector<1x16x8x256xf32>,
    %c0_51 = arith.constant 0 : index
    %c0_52 = arith.constant 0 : index
    %c0_53 = arith.constant 0 : index
    %49 = vector.load %arg12[%c0_51, %c0_52, %c0_53] : memref<2x64x256xbf16, #tpu.memory_space<vmem>>, vector<1x64x256xbf16>
    %50 = vector.shape_cast %49 : vector<1x64x256xbf16> to vector<64x256xbf16>
    %cst_54 = arith.constant dense<0.000000e+00> : vector<128x256xf32>
    %51 = tpu.matmul %30, %50, %cst_54 {dimension_numbers = #tpu.dot_dimension_numbers<[1], [0], [0], [1], [0, 0, 1, 1], [], []>} : vector<128x64xbf16>, vector<64x256xbf16>, vector<128x256xf32> -> vector<128x256xf32>
    %c1_55 = arith.constant 1 : index
    %c0_56 = arith.constant 0 : index
    %c0_57 = arith.constant 0 : index
    %52 = vector.load %arg12[%c1_55, %c0_56, %c0_57] : memref<2x64x256xbf16, #tpu.memory_space<vmem>>, vector<1x64x256xbf16>
    %53 = vector.shape_cast %52 : vector<1x64x256xbf16> to vector<64x256xbf16>
    %cst_58 = arith.constant dense<0.000000e+00> : vector<128x256xf32>
    %54 = tpu.matmul %33, %53, %cst_58 {dimension_numbers = #tpu.dot_dimension_numbers<[1], [0], [0], [1], [0, 0, 1, 1], [], []>} : vector<128x64xbf16>, vector<64x256xbf16>, vector<128x256xf32> -> vector<128x256xf32>
    %55 = arith.addf %51, %54 : vector<128x256xf32>
    %56 = vector.shape_cast %55 : vector<128x256xf32> to vector<16x8x256xf32>
    %c0_59 = arith.constant 0 : index
    %c0_60 = arith.constant 0 : index
    %57 = vector.load %arg14[%c0_59, %c0_60] : memref<1x256xf32, #tpu.memory_space<vmem>>, vector<1x256xf32>
    %58 = vector.shape_cast %57 : vector<1x256xf32> to vector<1x1x256xf32>
    %59 = vector.broadcast %58 : vector<1x1x256xf32> to vector<16x8x256xf32>
    %60 = arith.addf %56, %59 : vector<16x8x256xf32>
    %c1_61 = arith.constant 1 : index
    %c0_62 = arith.constant 0 : index
    %c0_63 = arith.constant 0 : index
    %c0_64 = arith.constant 0 : index
    %61 = vector.load %arg16[%c1_61, %c0_62, %c0_63, %c0_64] : memref<2x16x8x256xf32, #tpu.memory_space<vmem>>, vector<1x16x8x256xf32>
    %62 = vector.shape_cast %61 : vector<1x16x8x256xf32> to vector<16x8x256xf32>
    %63 = vector.shape_cast %60 : vector<16x8x256xf32> to vector<1x16x8x256xf32>
    tpu.vector_store %arg16[%c1_61, %c0_62, %c0_63, %c0_64], %63 {strides = array<i32>} : memref<2x16x8x256xf32, #tpu.memory_space<vmem>>, vector<1x16x8x256xf32>,
    %cst_65 = arith.constant 0.000000e+00 : f32
    %64 = vector.broadcast %cst_65 : f32 to vector<2x8x64xf32>
    %c0_66 = arith.constant 0 : index
    %c0_67 = arith.constant 0 : index
    %c0_68 = arith.constant 0 : index
    %65 = vector.load %arg18[%c0_66, %c0_67, %c0_68] : memref<2x8x64xf32, #tpu.memory_space<vmem>>, vector<2x8x64xf32>
    tpu.vector_store %arg18[%c0_66, %c0_67, %c0_68], %64 {strides = array<i32>} : memref<2x8x64xf32, #tpu.memory_space<vmem>>, vector<2x8x64xf32>,
    %cst_69 = arith.constant 0.000000e+00 : f32
    %66 = vector.broadcast %cst_69 : f32 to vector<2x8x64xf32>
    %c0_70 = arith.constant 0 : index
    %c0_71 = arith.constant 0 : index
    %c0_72 = arith.constant 0 : index
    %67 = vector.load %arg19[%c0_70, %c0_71, %c0_72] : memref<2x8x64xf32, #tpu.memory_space<vmem>>, vector<2x8x64xf32>
    tpu.vector_store %arg19[%c0_70, %c0_71, %c0_72], %66 {strides = array<i32>} : memref<2x8x64xf32, #tpu.memory_space<vmem>>, vector<2x8x64xf32>,
    %c0_i32_73 = arith.constant 0 : i32
    %c8_i32_74 = arith.constant 8 : i32
    %68 = arith.addi %c0_i32_73, %c8_i32_74 : i32
    %c1_i32_75 = arith.constant 1 : i32
    scf.for %arg21 = %c0_i32_73 to %68 step %c1_i32_75  : i32 {
      %c1_i32_85 = arith.constant 1 : i32
      %75 = arith.muli %arg21, %c1_i32_85 : i32
      %c0_i32_86 = arith.constant 0 : i32
      %76 = arith.addi %c0_i32_86, %75 : i32
      %c2_i32 = arith.constant 2 : i32
      %77 = arith.muli %76, %c2_i32 : i32
      %c0_i32_87 = arith.constant 0 : i32
      %78 = arith.addi %77, %c0_i32_87 : i32
      %c0_88 = arith.constant 0 : index
      %c0_89 = arith.constant 0 : index
      %c0_90 = arith.constant 0 : index
      %79 = vector.load %arg18[%c0_88, %c0_89, %c0_90] : memref<2x8x64xf32, #tpu.memory_space<vmem>>, vector<1x8x64xf32>
      %80 = vector.shape_cast %79 : vector<1x8x64xf32> to vector<8x64xf32>
      %c0_91 = arith.constant 0 : index
      %c0_92 = arith.constant 0 : index
      %c0_93 = arith.constant 0 : index
      %81 = vector.load %arg19[%c0_91, %c0_92, %c0_93] : memref<2x8x64xf32, #tpu.memory_space<vmem>>, vector<1x8x64xf32>
      %82 = vector.shape_cast %81 : vector<1x8x64xf32> to vector<8x64xf32>
      %c0_94 = arith.constant 0 : index
      %83 = arith.index_cast %78 : i32 to index
      %c0_95 = arith.constant 0 : index
      %c0_96 = arith.constant 0 : index
      %84 = vector.load %arg16[%c0_94, %83, %c0_95, %c0_96] : memref<2x16x8x256xf32, #tpu.memory_space<vmem>>, vector<1x1x8x256xf32>
      %85 = vector.shape_cast %84 : vector<1x1x8x256xf32> to vector<8x256xf32>
      %86 = arith.truncf %80 : vector<8x64xf32> to vector<8x64xbf16>
      %c0_97 = arith.constant 0 : index
      %c0_98 = arith.constant 0 : index
      %87 = vector.load %arg10[%c0_97, %c0_98] : memref<64x256xbf16, #tpu.memory_space<vmem>>, vector<64x256xbf16>
      %cst_99 = arith.constant dense<0.000000e+00> : vector<8x256xf32>
      %88 = tpu.matmul %86, %87, %cst_99 {dimension_numbers = #tpu.dot_dimension_numbers<[1], [0], [0], [1], [0, 0, 1, 1], [], []>} : vector<8x64xbf16>, vector<64x256xbf16>, vector<8x256xf32> -> vector<8x256xf32>
      %89 = arith.addf %85, %88 : vector<8x256xf32>
      %90 = vector.extract_strided_slice %89 {offsets = [0, 0], sizes = [8, 64], strides = [1, 1]} : vector<8x256xf32> to vector<8x64xf32>
      %91 = arith.negf %90 : vector<8x64xf32>
      %92 = math.exp %91 : vector<8x64xf32>
      %cst_100 = arith.constant 1.000000e+00 : f32
      %93 = vector.broadcast %cst_100 : f32 to vector<8x64xf32>
      %94 = arith.addf %93, %92 : vector<8x64xf32>
      %95 = arith.divf %93, %94 : vector<8x64xf32>
      %96 = vector.extract_strided_slice %89 {offsets = [0, 64], sizes = [8, 64], strides = [1, 1]} : vector<8x256xf32> to vector<8x64xf32>
      %97 = arith.negf %96 : vector<8x64xf32>
      %98 = math.exp %97 : vector<8x64xf32>
      %cst_101 = arith.constant 1.000000e+00 : f32
      %99 = vector.broadcast %cst_101 : f32 to vector<8x64xf32>
      %100 = arith.addf %99, %98 : vector<8x64xf32>
      %101 = arith.divf %99, %100 : vector<8x64xf32>
      %102 = vector.extract_strided_slice %89 {offsets = [0, 128], sizes = [8, 64], strides = [1, 1]} : vector<8x256xf32> to vector<8x64xf32>
      %103 = math.tanh %102 : vector<8x64xf32>
      %104 = vector.extract_strided_slice %89 {offsets = [0, 192], sizes = [8, 64], strides = [1, 1]} : vector<8x256xf32> to vector<8x64xf32>
      %105 = arith.negf %104 : vector<8x64xf32>
      %106 = math.exp %105 : vector<8x64xf32>
      %cst_102 = arith.constant 1.000000e+00 : f32
      %107 = vector.broadcast %cst_102 : f32 to vector<8x64xf32>
      %108 = arith.addf %107, %106 : vector<8x64xf32>
      %109 = arith.divf %107, %108 : vector<8x64xf32>
      %110 = arith.mulf %101, %82 : vector<8x64xf32>
      %111 = arith.mulf %95, %103 : vector<8x64xf32>
      %112 = arith.addf %110, %111 : vector<8x64xf32>
      %113 = math.tanh %112 : vector<8x64xf32>
      %114 = arith.mulf %109, %113 : vector<8x64xf32>
      %115 = vector.broadcast %78 : i32 to vector<8x1xi32>
      %116 = arith.cmpi sgt, %0, %115 : vector<8x1xi32>
      %117 = vector.shape_cast %116 : vector<8x1xi1> to vector<8x1xi1>
      %118 = vector.broadcast %117 : vector<8x1xi1> to vector<8x64xi1>
      %119 = arith.select %118, %114, %80 : vector<8x64xi1>, vector<8x64xf32>
      %c0_103 = arith.constant 0 : index
      %c0_104 = arith.constant 0 : index
      %c0_105 = arith.constant 0 : index
      %120 = vector.load %arg18[%c0_103, %c0_104, %c0_105] : memref<2x8x64xf32, #tpu.memory_space<vmem>>, vector<1x8x64xf32>
      %121 = vector.shape_cast %120 : vector<1x8x64xf32> to vector<8x64xf32>
      %122 = vector.shape_cast %119 : vector<8x64xf32> to vector<1x8x64xf32>
      tpu.vector_store %arg18[%c0_103, %c0_104, %c0_105], %122 {strides = array<i32>} : memref<2x8x64xf32, #tpu.memory_space<vmem>>, vector<1x8x64xf32>,
      %123 = vector.shape_cast %116 : vector<8x1xi1> to vector<8x1xi1>
      %124 = vector.broadcast %123 : vector<8x1xi1> to vector<8x64xi1>
      %125 = arith.select %124, %112, %82 : vector<8x64xi1>, vector<8x64xf32>
      %c0_106 = arith.constant 0 : index
      %c0_107 = arith.constant 0 : index
      %c0_108 = arith.constant 0 : index
      %126 = vector.load %arg19[%c0_106, %c0_107, %c0_108] : memref<2x8x64xf32, #tpu.memory_space<vmem>>, vector<1x8x64xf32>
      %127 = vector.shape_cast %126 : vector<1x8x64xf32> to vector<8x64xf32>
      %128 = vector.shape_cast %125 : vector<8x64xf32> to vector<1x8x64xf32>
      tpu.vector_store %arg19[%c0_106, %c0_107, %c0_108], %128 {strides = array<i32>} : memref<2x8x64xf32, #tpu.memory_space<vmem>>, vector<1x8x64xf32>,
      %c15_i32 = arith.constant 15 : i32
      %129 = arith.subi %c15_i32, %78 : i32
      %c1_109 = arith.constant 1 : index
      %c0_110 = arith.constant 0 : index
      %c0_111 = arith.constant 0 : index
      %130 = vector.load %arg18[%c1_109, %c0_110, %c0_111] : memref<2x8x64xf32, #tpu.memory_space<vmem>>, vector<1x8x64xf32>
      %131 = vector.shape_cast %130 : vector<1x8x64xf32> to vector<8x64xf32>
      %c1_112 = arith.constant 1 : index
      %c0_113 = arith.constant 0 : index
      %c0_114 = arith.constant 0 : index
      %132 = vector.load %arg19[%c1_112, %c0_113, %c0_114] : memref<2x8x64xf32, #tpu.memory_space<vmem>>, vector<1x8x64xf32>
      %133 = vector.shape_cast %132 : vector<1x8x64xf32> to vector<8x64xf32>
      %c1_115 = arith.constant 1 : index
      %134 = arith.index_cast %129 : i32 to index
      %c0_116 = arith.constant 0 : index
      %c0_117 = arith.constant 0 : index
      %135 = vector.load %arg16[%c1_115, %134, %c0_116, %c0_117] : memref<2x16x8x256xf32, #tpu.memory_space<vmem>>, vector<1x1x8x256xf32>
      %136 = vector.shape_cast %135 : vector<1x1x8x256xf32> to vector<8x256xf32>
      %137 = arith.truncf %131 : vector<8x64xf32> to vector<8x64xbf16>
      %c0_118 = arith.constant 0 : index
      %c0_119 = arith.constant 0 : index
      %138 = vector.load %arg13[%c0_118, %c0_119] : memref<64x256xbf16, #tpu.memory_space<vmem>>, vector<64x256xbf16>
      %cst_120 = arith.constant dense<0.000000e+00> : vector<8x256xf32>
      %139 = tpu.matmul %137, %138, %cst_120 {dimension_numbers = #tpu.dot_dimension_numbers<[1], [0], [0], [1], [0, 0, 1, 1], [], []>} : vector<8x64xbf16>, vector<64x256xbf16>, vector<8x256xf32> -> vector<8x256xf32>
      %140 = arith.addf %136, %139 : vector<8x256xf32>
      %141 = vector.extract_strided_slice %140 {offsets = [0, 0], sizes = [8, 64], strides = [1, 1]} : vector<8x256xf32> to vector<8x64xf32>
      %142 = arith.negf %141 : vector<8x64xf32>
      %143 = math.exp %142 : vector<8x64xf32>
      %cst_121 = arith.constant 1.000000e+00 : f32
      %144 = vector.broadcast %cst_121 : f32 to vector<8x64xf32>
      %145 = arith.addf %144, %143 : vector<8x64xf32>
      %146 = arith.divf %144, %145 : vector<8x64xf32>
      %147 = vector.extract_strided_slice %140 {offsets = [0, 64], sizes = [8, 64], strides = [1, 1]} : vector<8x256xf32> to vector<8x64xf32>
      %148 = arith.negf %147 : vector<8x64xf32>
      %149 = math.exp %148 : vector<8x64xf32>
      %cst_122 = arith.constant 1.000000e+00 : f32
      %150 = vector.broadcast %cst_122 : f32 to vector<8x64xf32>
      %151 = arith.addf %150, %149 : vector<8x64xf32>
      %152 = arith.divf %150, %151 : vector<8x64xf32>
      %153 = vector.extract_strided_slice %140 {offsets = [0, 128], sizes = [8, 64], strides = [1, 1]} : vector<8x256xf32> to vector<8x64xf32>
      %154 = math.tanh %153 : vector<8x64xf32>
      %155 = vector.extract_strided_slice %140 {offsets = [0, 192], sizes = [8, 64], strides = [1, 1]} : vector<8x256xf32> to vector<8x64xf32>
      %156 = arith.negf %155 : vector<8x64xf32>
      %157 = math.exp %156 : vector<8x64xf32>
      %cst_123 = arith.constant 1.000000e+00 : f32
      %158 = vector.broadcast %cst_123 : f32 to vector<8x64xf32>
      %159 = arith.addf %158, %157 : vector<8x64xf32>
      %160 = arith.divf %158, %159 : vector<8x64xf32>
      %161 = arith.mulf %152, %133 : vector<8x64xf32>
      %162 = arith.mulf %146, %154 : vector<8x64xf32>
      %163 = arith.addf %161, %162 : vector<8x64xf32>
      %164 = math.tanh %163 : vector<8x64xf32>
      %165 = arith.mulf %160, %164 : vector<8x64xf32>
      %166 = vector.broadcast %129 : i32 to vector<8x1xi32>
      %167 = arith.cmpi sgt, %0, %166 : vector<8x1xi32>
      %168 = vector.shape_cast %167 : vector<8x1xi1> to vector<8x1xi1>
      %169 = vector.broadcast %168 : vector<8x1xi1> to vector<8x64xi1>
      %170 = arith.select %169, %165, %131 : vector<8x64xi1>, vector<8x64xf32>
      %c1_124 = arith.constant 1 : index
      %c0_125 = arith.constant 0 : index
      %c0_126 = arith.constant 0 : index
      %171 = vector.load %arg18[%c1_124, %c0_125, %c0_126] : memref<2x8x64xf32, #tpu.memory_space<vmem>>, vector<1x8x64xf32>
      %172 = vector.shape_cast %171 : vector<1x8x64xf32> to vector<8x64xf32>
      %173 = vector.shape_cast %170 : vector<8x64xf32> to vector<1x8x64xf32>
      tpu.vector_store %arg18[%c1_124, %c0_125, %c0_126], %173 {strides = array<i32>} : memref<2x8x64xf32, #tpu.memory_space<vmem>>, vector<1x8x64xf32>,
      %174 = vector.shape_cast %167 : vector<8x1xi1> to vector<8x1xi1>
      %175 = vector.broadcast %174 : vector<8x1xi1> to vector<8x64xi1>
      %176 = arith.select %175, %163, %133 : vector<8x64xi1>, vector<8x64xf32>
      %c1_127 = arith.constant 1 : index
      %c0_128 = arith.constant 0 : index
      %c0_129 = arith.constant 0 : index
      %177 = vector.load %arg19[%c1_127, %c0_128, %c0_129] : memref<2x8x64xf32, #tpu.memory_space<vmem>>, vector<1x8x64xf32>
      %178 = vector.shape_cast %177 : vector<1x8x64xf32> to vector<8x64xf32>
      %179 = vector.shape_cast %176 : vector<8x64xf32> to vector<1x8x64xf32>
      tpu.vector_store %arg19[%c1_127, %c0_128, %c0_129], %179 {strides = array<i32>} : memref<2x8x64xf32, #tpu.memory_space<vmem>>, vector<1x8x64xf32>,
      %c2_i32_130 = arith.constant 2 : i32
      %180 = arith.muli %76, %c2_i32_130 : i32
      %c1_i32_131 = arith.constant 1 : i32
      %181 = arith.addi %180, %c1_i32_131 : i32
      %c0_132 = arith.constant 0 : index
      %c0_133 = arith.constant 0 : index
      %c0_134 = arith.constant 0 : index
      %182 = vector.load %arg18[%c0_132, %c0_133, %c0_134] : memref<2x8x64xf32, #tpu.memory_space<vmem>>, vector<1x8x64xf32>
      %183 = vector.shape_cast %182 : vector<1x8x64xf32> to vector<8x64xf32>
      %c0_135 = arith.constant 0 : index
      %c0_136 = arith.constant 0 : index
      %c0_137 = arith.constant 0 : index
      %184 = vector.load %arg19[%c0_135, %c0_136, %c0_137] : memref<2x8x64xf32, #tpu.memory_space<vmem>>, vector<1x8x64xf32>
      %185 = vector.shape_cast %184 : vector<1x8x64xf32> to vector<8x64xf32>
      %c0_138 = arith.constant 0 : index
      %186 = arith.index_cast %181 : i32 to index
      %c0_139 = arith.constant 0 : index
      %c0_140 = arith.constant 0 : index
      %187 = vector.load %arg16[%c0_138, %186, %c0_139, %c0_140] : memref<2x16x8x256xf32, #tpu.memory_space<vmem>>, vector<1x1x8x256xf32>
      %188 = vector.shape_cast %187 : vector<1x1x8x256xf32> to vector<8x256xf32>
      %189 = arith.truncf %183 : vector<8x64xf32> to vector<8x64xbf16>
      %c0_141 = arith.constant 0 : index
      %c0_142 = arith.constant 0 : index
      %190 = vector.load %arg10[%c0_141, %c0_142] : memref<64x256xbf16, #tpu.memory_space<vmem>>, vector<64x256xbf16>
      %cst_143 = arith.constant dense<0.000000e+00> : vector<8x256xf32>
      %191 = tpu.matmul %189, %190, %cst_143 {dimension_numbers = #tpu.dot_dimension_numbers<[1], [0], [0], [1], [0, 0, 1, 1], [], []>} : vector<8x64xbf16>, vector<64x256xbf16>, vector<8x256xf32> -> vector<8x256xf32>
      %192 = arith.addf %188, %191 : vector<8x256xf32>
      %193 = vector.extract_strided_slice %192 {offsets = [0, 0], sizes = [8, 64], strides = [1, 1]} : vector<8x256xf32> to vector<8x64xf32>
      %194 = arith.negf %193 : vector<8x64xf32>
      %195 = math.exp %194 : vector<8x64xf32>
      %cst_144 = arith.constant 1.000000e+00 : f32
      %196 = vector.broadcast %cst_144 : f32 to vector<8x64xf32>
      %197 = arith.addf %196, %195 : vector<8x64xf32>
      %198 = arith.divf %196, %197 : vector<8x64xf32>
      %199 = vector.extract_strided_slice %192 {offsets = [0, 64], sizes = [8, 64], strides = [1, 1]} : vector<8x256xf32> to vector<8x64xf32>
      %200 = arith.negf %199 : vector<8x64xf32>
      %201 = math.exp %200 : vector<8x64xf32>
      %cst_145 = arith.constant 1.000000e+00 : f32
      %202 = vector.broadcast %cst_145 : f32 to vector<8x64xf32>
      %203 = arith.addf %202, %201 : vector<8x64xf32>
      %204 = arith.divf %202, %203 : vector<8x64xf32>
      %205 = vector.extract_strided_slice %192 {offsets = [0, 128], sizes = [8, 64], strides = [1, 1]} : vector<8x256xf32> to vector<8x64xf32>
      %206 = math.tanh %205 : vector<8x64xf32>
      %207 = vector.extract_strided_slice %192 {offsets = [0, 192], sizes = [8, 64], strides = [1, 1]} : vector<8x256xf32> to vector<8x64xf32>
      %208 = arith.negf %207 : vector<8x64xf32>
      %209 = math.exp %208 : vector<8x64xf32>
      %cst_146 = arith.constant 1.000000e+00 : f32
      %210 = vector.broadcast %cst_146 : f32 to vector<8x64xf32>
      %211 = arith.addf %210, %209 : vector<8x64xf32>
      %212 = arith.divf %210, %211 : vector<8x64xf32>
      %213 = arith.mulf %204, %185 : vector<8x64xf32>
      %214 = arith.mulf %198, %206 : vector<8x64xf32>
      %215 = arith.addf %213, %214 : vector<8x64xf32>
      %216 = math.tanh %215 : vector<8x64xf32>
      %217 = arith.mulf %212, %216 : vector<8x64xf32>
      %218 = vector.broadcast %181 : i32 to vector<8x1xi32>
      %219 = arith.cmpi sgt, %0, %218 : vector<8x1xi32>
      %220 = vector.shape_cast %219 : vector<8x1xi1> to vector<8x1xi1>
      %221 = vector.broadcast %220 : vector<8x1xi1> to vector<8x64xi1>
      %222 = arith.select %221, %217, %183 : vector<8x64xi1>, vector<8x64xf32>
      %c0_147 = arith.constant 0 : index
      %c0_148 = arith.constant 0 : index
      %c0_149 = arith.constant 0 : index
      %223 = vector.load %arg18[%c0_147, %c0_148, %c0_149] : memref<2x8x64xf32, #tpu.memory_space<vmem>>, vector<1x8x64xf32>
      %224 = vector.shape_cast %223 : vector<1x8x64xf32> to vector<8x64xf32>
      %225 = vector.shape_cast %222 : vector<8x64xf32> to vector<1x8x64xf32>
      tpu.vector_store %arg18[%c0_147, %c0_148, %c0_149], %225 {strides = array<i32>} : memref<2x8x64xf32, #tpu.memory_space<vmem>>, vector<1x8x64xf32>,
      %226 = vector.shape_cast %219 : vector<8x1xi1> to vector<8x1xi1>
      %227 = vector.broadcast %226 : vector<8x1xi1> to vector<8x64xi1>
      %228 = arith.select %227, %215, %185 : vector<8x64xi1>, vector<8x64xf32>
      %c0_150 = arith.constant 0 : index
      %c0_151 = arith.constant 0 : index
      %c0_152 = arith.constant 0 : index
      %229 = vector.load %arg19[%c0_150, %c0_151, %c0_152] : memref<2x8x64xf32, #tpu.memory_space<vmem>>, vector<1x8x64xf32>
      %230 = vector.shape_cast %229 : vector<1x8x64xf32> to vector<8x64xf32>
      %231 = vector.shape_cast %228 : vector<8x64xf32> to vector<1x8x64xf32>
      tpu.vector_store %arg19[%c0_150, %c0_151, %c0_152], %231 {strides = array<i32>} : memref<2x8x64xf32, #tpu.memory_space<vmem>>, vector<1x8x64xf32>,
      %c15_i32_153 = arith.constant 15 : i32
      %232 = arith.subi %c15_i32_153, %181 : i32
      %c1_154 = arith.constant 1 : index
      %c0_155 = arith.constant 0 : index
      %c0_156 = arith.constant 0 : index
      %233 = vector.load %arg18[%c1_154, %c0_155, %c0_156] : memref<2x8x64xf32, #tpu.memory_space<vmem>>, vector<1x8x64xf32>
      %234 = vector.shape_cast %233 : vector<1x8x64xf32> to vector<8x64xf32>
      %c1_157 = arith.constant 1 : index
      %c0_158 = arith.constant 0 : index
      %c0_159 = arith.constant 0 : index
      %235 = vector.load %arg19[%c1_157, %c0_158, %c0_159] : memref<2x8x64xf32, #tpu.memory_space<vmem>>, vector<1x8x64xf32>
      %236 = vector.shape_cast %235 : vector<1x8x64xf32> to vector<8x64xf32>
      %c1_160 = arith.constant 1 : index
      %237 = arith.index_cast %232 : i32 to index
      %c0_161 = arith.constant 0 : index
      %c0_162 = arith.constant 0 : index
      %238 = vector.load %arg16[%c1_160, %237, %c0_161, %c0_162] : memref<2x16x8x256xf32, #tpu.memory_space<vmem>>, vector<1x1x8x256xf32>
      %239 = vector.shape_cast %238 : vector<1x1x8x256xf32> to vector<8x256xf32>
      %240 = arith.truncf %234 : vector<8x64xf32> to vector<8x64xbf16>
      %c0_163 = arith.constant 0 : index
      %c0_164 = arith.constant 0 : index
      %241 = vector.load %arg13[%c0_163, %c0_164] : memref<64x256xbf16, #tpu.memory_space<vmem>>, vector<64x256xbf16>
      %cst_165 = arith.constant dense<0.000000e+00> : vector<8x256xf32>
      %242 = tpu.matmul %240, %241, %cst_165 {dimension_numbers = #tpu.dot_dimension_numbers<[1], [0], [0], [1], [0, 0, 1, 1], [], []>} : vector<8x64xbf16>, vector<64x256xbf16>, vector<8x256xf32> -> vector<8x256xf32>
      %243 = arith.addf %239, %242 : vector<8x256xf32>
      %244 = vector.extract_strided_slice %243 {offsets = [0, 0], sizes = [8, 64], strides = [1, 1]} : vector<8x256xf32> to vector<8x64xf32>
      %245 = arith.negf %244 : vector<8x64xf32>
      %246 = math.exp %245 : vector<8x64xf32>
      %cst_166 = arith.constant 1.000000e+00 : f32
      %247 = vector.broadcast %cst_166 : f32 to vector<8x64xf32>
      %248 = arith.addf %247, %246 : vector<8x64xf32>
      %249 = arith.divf %247, %248 : vector<8x64xf32>
      %250 = vector.extract_strided_slice %243 {offsets = [0, 64], sizes = [8, 64], strides = [1, 1]} : vector<8x256xf32> to vector<8x64xf32>
      %251 = arith.negf %250 : vector<8x64xf32>
      %252 = math.exp %251 : vector<8x64xf32>
      %cst_167 = arith.constant 1.000000e+00 : f32
      %253 = vector.broadcast %cst_167 : f32 to vector<8x64xf32>
      %254 = arith.addf %253, %252 : vector<8x64xf32>
      %255 = arith.divf %253, %254 : vector<8x64xf32>
      %256 = vector.extract_strided_slice %243 {offsets = [0, 128], sizes = [8, 64], strides = [1, 1]} : vector<8x256xf32> to vector<8x64xf32>
      %257 = math.tanh %256 : vector<8x64xf32>
      %258 = vector.extract_strided_slice %243 {offsets = [0, 192], sizes = [8, 64], strides = [1, 1]} : vector<8x256xf32> to vector<8x64xf32>
      %259 = arith.negf %258 : vector<8x64xf32>
      %260 = math.exp %259 : vector<8x64xf32>
      %cst_168 = arith.constant 1.000000e+00 : f32
      %261 = vector.broadcast %cst_168 : f32 to vector<8x64xf32>
      %262 = arith.addf %261, %260 : vector<8x64xf32>
      %263 = arith.divf %261, %262 : vector<8x64xf32>
      %264 = arith.mulf %255, %236 : vector<8x64xf32>
      %265 = arith.mulf %249, %257 : vector<8x64xf32>
      %266 = arith.addf %264, %265 : vector<8x64xf32>
      %267 = math.tanh %266 : vector<8x64xf32>
      %268 = arith.mulf %263, %267 : vector<8x64xf32>
      %269 = vector.broadcast %232 : i32 to vector<8x1xi32>
      %270 = arith.cmpi sgt, %0, %269 : vector<8x1xi32>
      %271 = vector.shape_cast %270 : vector<8x1xi1> to vector<8x1xi1>
      %272 = vector.broadcast %271 : vector<8x1xi1> to vector<8x64xi1>
      %273 = arith.select %272, %268, %234 : vector<8x64xi1>, vector<8x64xf32>
      %c1_169 = arith.constant 1 : index
      %c0_170 = arith.constant 0 : index
      %c0_171 = arith.constant 0 : index
      %274 = vector.load %arg18[%c1_169, %c0_170, %c0_171] : memref<2x8x64xf32, #tpu.memory_space<vmem>>, vector<1x8x64xf32>
      %275 = vector.shape_cast %274 : vector<1x8x64xf32> to vector<8x64xf32>
      %276 = vector.shape_cast %273 : vector<8x64xf32> to vector<1x8x64xf32>
      tpu.vector_store %arg18[%c1_169, %c0_170, %c0_171], %276 {strides = array<i32>} : memref<2x8x64xf32, #tpu.memory_space<vmem>>, vector<1x8x64xf32>,
      %277 = vector.shape_cast %270 : vector<8x1xi1> to vector<8x1xi1>
      %278 = vector.broadcast %277 : vector<8x1xi1> to vector<8x64xi1>
      %279 = arith.select %278, %266, %236 : vector<8x64xi1>, vector<8x64xf32>
      %c1_172 = arith.constant 1 : index
      %c0_173 = arith.constant 0 : index
      %c0_174 = arith.constant 0 : index
      %280 = vector.load %arg19[%c1_172, %c0_173, %c0_174] : memref<2x8x64xf32, #tpu.memory_space<vmem>>, vector<1x8x64xf32>
      %281 = vector.shape_cast %280 : vector<1x8x64xf32> to vector<8x64xf32>
      %282 = vector.shape_cast %279 : vector<8x64xf32> to vector<1x8x64xf32>
      tpu.vector_store %arg19[%c1_172, %c0_173, %c0_174], %282 {strides = array<i32>} : memref<2x8x64xf32, #tpu.memory_space<vmem>>, vector<1x8x64xf32>,
    }
    %c8_i32_76 = arith.constant 8 : i32
    %c0_77 = arith.constant 0 : index
    %c0_78 = arith.constant 0 : index
    %c0_79 = arith.constant 0 : index
    %69 = vector.load %arg18[%c0_77, %c0_78, %c0_79] : memref<2x8x64xf32, #tpu.memory_space<vmem>>, vector<1x8x64xf32>
    %70 = vector.shape_cast %69 : vector<1x8x64xf32> to vector<8x64xf32>
    %c1_80 = arith.constant 1 : index
    %c0_81 = arith.constant 0 : index
    %c0_82 = arith.constant 0 : index
    %71 = vector.load %arg18[%c1_80, %c0_81, %c0_82] : memref<2x8x64xf32, #tpu.memory_space<vmem>>, vector<1x8x64xf32>
    %72 = vector.shape_cast %71 : vector<1x8x64xf32> to vector<8x64xf32>
    %73 = tpu.concatenate %70, %72 in 1 : vector<8x64xf32>, vector<8x64xf32> -> vector<8x128xf32>
    %c0_83 = arith.constant 0 : index
    %c0_84 = arith.constant 0 : index
    %74 = vector.load %arg15[%c0_83, %c0_84] : memref<8x128xf32, #tpu.memory_space<vmem>>, vector<8x128xf32>
    tpu.vector_store %arg15[%c0_83, %c0_84], %73 {strides = array<i32>} : memref<8x128xf32, #tpu.memory_space<vmem>>, vector<8x128xf32>,
    return
  }
  func.func @transform_0(%arg0: i32) -> (i32, i32) {
    %c0_i32 = arith.constant 0 : i32
    %c0_i32_0 = arith.constant 0 : i32
    return %arg0, %c0_i32 : i32, i32
  }
  func.func @transform_1(%arg0: i32) -> (i32, i32, i32) {
    %c0_i32 = arith.constant 0 : i32
    %c0_i32_0 = arith.constant 0 : i32
    %c0_i32_1 = arith.constant 0 : i32
    return %c0_i32, %arg0, %c0_i32_0 : i32, i32, i32
  }
  func.func @transform_2(%arg0: i32) -> (i32, i32) {
    %c0_i32 = arith.constant 0 : i32
    %c0_i32_0 = arith.constant 0 : i32
    %c0_i32_1 = arith.constant 0 : i32
    return %c0_i32, %c0_i32_0 : i32, i32
  }
  func.func @transform_3(%arg0: i32) -> (i32, i32) {
    %c0_i32 = arith.constant 0 : i32
    %c0_i32_0 = arith.constant 0 : i32
    %c0_i32_1 = arith.constant 0 : i32
    return %c0_i32, %c0_i32_0 : i32, i32
  }
  func.func @transform_4(%arg0: i32) -> (i32, i32) {
    %c0_i32 = arith.constant 0 : i32
    %c0_i32_0 = arith.constant 0 : i32
    %c0_i32_1 = arith.constant 0 : i32
    return %c0_i32, %c0_i32_0 : i32, i32
  }
  func.func @transform_5(%arg0: i32) -> (i32, i32) {
    %c0_i32 = arith.constant 0 : i32
    %c0_i32_0 = arith.constant 0 : i32
    %c0_i32_1 = arith.constant 0 : i32
    return %c0_i32, %c0_i32_0 : i32, i32
  }
  func.func @transform_6(%arg0: i32) -> (i32, i32) {
    %c0_i32 = arith.constant 0 : i32
    %c0_i32_0 = arith.constant 0 : i32
    %c0_i32_1 = arith.constant 0 : i32
    return %c0_i32, %c0_i32_0 : i32, i32
  }
  func.func @transform_7(%arg0: i32) -> (i32, i32) {
    %c0_i32 = arith.constant 0 : i32
    %c0_i32_0 = arith.constant 0 : i32
    %c0_i32_1 = arith.constant 0 : i32
    return %c0_i32, %c0_i32_0 : i32, i32
  }
  func.func @transform_8(%arg0: i32) -> (i32, i32, i32) {
    %c0_i32 = arith.constant 0 : i32
    %c0_i32_0 = arith.constant 0 : i32
    %c0_i32_1 = arith.constant 0 : i32
    %c0_i32_2 = arith.constant 0 : i32
    return %c0_i32, %c0_i32_0, %c0_i32_1 : i32, i32, i32
  }
  func.func @transform_9(%arg0: i32) -> (i32, i32) {
    %c0_i32 = arith.constant 0 : i32
    %c0_i32_0 = arith.constant 0 : i32
    %c0_i32_1 = arith.constant 0 : i32
    return %c0_i32, %c0_i32_0 : i32, i32
  }
  func.func @transform_10(%arg0: i32) -> (i32, i32) {
    %c0_i32 = arith.constant 0 : i32
    %c0_i32_0 = arith.constant 0 : i32
    %c0_i32_1 = arith.constant 0 : i32
    return %c0_i32, %c0_i32_0 : i32, i32
  }
  func.func @transform_11(%arg0: i32) -> (i32, i32, i32) {
    %c0_i32 = arith.constant 0 : i32
    %c0_i32_0 = arith.constant 0 : i32
    %c0_i32_1 = arith.constant 0 : i32
    %c0_i32_2 = arith.constant 0 : i32
    return %c0_i32, %c0_i32_0, %c0_i32_1 : i32, i32, i32
  }
  func.func @transform_12(%arg0: i32) -> (i32, i32) {
    %c0_i32 = arith.constant 0 : i32
    %c0_i32_0 = arith.constant 0 : i32
    %c0_i32_1 = arith.constant 0 : i32
    return %c0_i32, %c0_i32_0 : i32, i32
  }
  func.func @transform_13(%arg0: i32) -> (i32, i32) {
    %c0_i32 = arith.constant 0 : i32
    %c0_i32_0 = arith.constant 0 : i32
    %c0_i32_1 = arith.constant 0 : i32
    return %c0_i32, %c0_i32_0 : i32, i32
  }
  func.func @transform_14(%arg0: i32) -> (i32, i32) {
    %c0_i32 = arith.constant 0 : i32
    %c0_i32_0 = arith.constant 0 : i32
    return %arg0, %c0_i32 : i32, i32
  }
}

</mosaic_0001>

<llo_original>
// kernel: tpu_custom_call.1
$region0: #{tpu_custom_call.1}
  #allocation0 [shape = 'u32[]', space=smem, size = 0x4, offset = 0x4, fixed_abs, tag = 'smem constant byte address 0x4 - core index']
  #allocation1 [shape = 'u32[72,128]{1,0:T(1,128)}', space=vmem, size = 0x9000, scoped, tag = 'internal scratch']
  #allocation2 [shape = 'f32[2,16,8,256]{3,2,1,0:T(8,128)}', space=vmem, size = 0x40000, scoped, tag = 'scratch operand']
  #allocation3 [shape = 'bf16[2,16,8,64]{3,2,1,0:T(8,128)(2,1)}', space=vmem, size = 0x10000, scoped, tag = 'scratch operand']
  #allocation4 [shape = 'f32[2,8,64]{2,1,0:T(8,128)}', space=vmem, size = 0x2000, scoped, tag = 'scratch operand']
  #allocation5 [shape = 'f32[2,8,64]{2,1,0:T(8,128)}', space=vmem, size = 0x2000, scoped, tag = 'scratch operand']
  #allocation6 [shape = 'f32[2,8,64]{2,1,0:T(8,128)}', space=vmem, size = 0x2000, scoped, tag = 'scratch operand']
  %s0 = inlined_call_operand.vmem [shape: s32[8,1], index: 0, kind: input, shape index: {}]
  %s1 = inlined_call_operand.hbm [shape: bf16[16,8,32], index: 1, kind: input, shape index: {}]
  %s2 = inlined_call_operand.hbm [shape: bf16[32,256], index: 2, kind: input, shape index: {}]
  %s3 = inlined_call_operand.hbm [shape: bf16[64,256], index: 3, kind: input, shape index: {}]
  %s4 = inlined_call_operand.vmem [shape: f32[1,256], index: 4, kind: input, shape index: {}]
  %s5 = inlined_call_operand.hbm [shape: bf16[32,256], index: 5, kind: input, shape index: {}]
  %s6 = inlined_call_operand.hbm [shape: bf16[64,256], index: 6, kind: input, shape index: {}]
  %s7 = inlined_call_operand.vmem [shape: f32[1,256], index: 7, kind: input, shape index: {}]
  %s8 = inlined_call_operand.hbm [shape: bf16[2,64,256], index: 8, kind: input, shape index: {}]
  %s9 = inlined_call_operand.hbm [shape: bf16[64,256], index: 9, kind: input, shape index: {}]
  %s10 = inlined_call_operand.vmem [shape: f32[1,256], index: 10, kind: input, shape index: {}]
  %s11 = inlined_call_operand.hbm [shape: bf16[2,64,256], index: 11, kind: input, shape index: {}]
  %s12 = inlined_call_operand.hbm [shape: bf16[64,256], index: 12, kind: input, shape index: {}]
  %s13 = inlined_call_operand.vmem [shape: f32[1,256], index: 13, kind: input, shape index: {}]
  %s14 = inlined_call_operand.hbm [shape: f32[8,128], index: 14, kind: output, shape index: {}]
  %s15 = sld [smem:[#allocation0]]
  $region116: #{tpu_custom_call.1} parent=0
    _
  %s17 = ssub.s32 1, %s15
  %s18 = scalar_select 0, %s17, %s15
  $region1: #{tpu_custom_call.1} parent=0
    #allocation7 [shape = 'u8[32768]{0}', space=vmem, size = 0x8000, scoped, tag = 'input window, operand 1, single buffered']
    #allocation8 [shape = 's32[1]{0}', space=sflag, size = 0x4, scoped, tag = 'scoped memory for tpu_custom_call.1']
    #allocation9 [shape = 's32[1]{0}', space=sflag, size = 0x4, scoped, tag = 'scoped memory for tpu_custom_call.1']
    #allocation10 [shape = 'u8[16384]{0}', space=vmem, size = 0x4000, scoped, tag = 'input window, operand 2, single buffered']
    #allocation11 [shape = 's32[1]{0}', space=sflag, size = 0x4, scoped, tag = 'scoped memory for tpu_custom_call.1']
    #allocation12 [shape = 'u8[32768]{0}', space=vmem, size = 0x8000, scoped, tag = 'input window, operand 3, single buffered']
    #allocation13 [shape = 'u8[16384]{0}', space=vmem, size = 0x4000, scoped, tag = 'input window, operand 5, single buffered']
    #allocation14 [shape = 's32[1]{0}', space=sflag, size = 0x4, scoped, tag = 'scoped memory for tpu_custom_call.1']
    #allocation15 [shape = 'u8[32768]{0}', space=vmem, size = 0x8000, scoped, tag = 'input window, operand 6, single buffered']
    #allocation16 [shape = 'u8[65536]{0}', space=vmem, size = 0x10000, scoped, tag = 'input window, operand 8, single buffered']
    #allocation17 [shape = 's32[1]{0}', space=sflag, size = 0x4, scoped, tag = 'scoped memory for tpu_custom_call.1']
    #allocation18 [shape = 'u8[32768]{0}', space=vmem, size = 0x8000, scoped, tag = 'input window, operand 9, single buffered']
    #allocation19 [shape = 'u8[65536]{0}', space=vmem, size = 0x10000, scoped, tag = 'input window, operand 11, single buffered']
    #allocation20 [shape = 's32[1]{0}', space=sflag, size = 0x4, scoped, tag = 'scoped memory for tpu_custom_call.1']
    #allocation21 [shape = 'u8[32768]{0}', space=vmem, size = 0x8000, scoped, tag = 'input window, operand 12, single buffered']
    #allocation22 [shape = 'u8[4096]{0}', space=vmem, size = 0x1000, scoped, tag = 'output window, operand 0, single buffered']
    %19 = vsyncpa [#allocation8], 0
    %20 = vsyncpa [#allocation11], 0
    %21 = vsyncpa [#allocation14], 0
    %22 = vsyncpa [#allocation17], 0
    %23 = vsyncpa [#allocation20], 0
    %24 = vsyncpa [#allocation9], 0
    // Predicated region
    $region2: #{tpu_custom_call.1} parent=1 // pred_check
      _
    $region3: #{tpu_custom_call.1} parent=1 // pred_check_branch
      %26 = sbr.rel (0) target = $region5
    $region4: #{tpu_custom_call.1} parent=1 // pred_region
      _
    $region5: #{tpu_custom_call.1} parent=1 // pred_fallthru
      _
    // Predicated region
    $region6: #{tpu_custom_call.1} parent=1 // pred_check
      _
    $region7: #{tpu_custom_call.1} parent=1 // pred_check_branch
      %28 = sbr.rel (0) target = $region9
    $region8: #{tpu_custom_call.1} parent=1 // pred_region
      %30 = vsyncadd [#allocation8], 0
      %s31 = sshll.u32 %s1, 4
      %s32 = int_to_ptr.hbm [resolvable:$true] %s31
      %s33 = sshll.u32 [#allocation7], 4
      %s34 = int_to_ptr.vmem [resolvable:$true] %s33
      %39 = dma.hbm_to_vmem [thread:$0]  %s32, 1024, %s34, [#allocation8], 64, 64, 4
    $region9: #{tpu_custom_call.1} parent=1 // pred_fallthru
      _
    // Predicated region
    $region10: #{tpu_custom_call.1} parent=1 // pred_check
      _
    $region11: #{tpu_custom_call.1} parent=1 // pred_check_branch
      %41 = sbr.rel (0) target = $region13
    $region12: #{tpu_custom_call.1} parent=1 // pred_region
      %43 = vsyncadd [#allocation11], 0
      %s44 = sshll.u32 %s2, 4
      %s45 = int_to_ptr.hbm [resolvable:$true] %s44
      %s46 = sshll.u32 [#allocation10], 4
      %s47 = int_to_ptr.vmem [resolvable:$true] %s46
      %52 = dma.hbm_to_vmem [thread:$0]  %s45, 512, %s47, [#allocation11], 128, 128, 8
    $region13: #{tpu_custom_call.1} parent=1 // pred_fallthru
      _
    // Predicated region
    $region14: #{tpu_custom_call.1} parent=1 // pred_check
      _
    $region15: #{tpu_custom_call.1} parent=1 // pred_check_branch
      %54 = sbr.rel (0) target = $region17
    $region16: #{tpu_custom_call.1} parent=1 // pred_region
      %56 = vsyncadd [#allocation11], 0
      %s57 = sshll.u32 %s3, 4
      %s58 = int_to_ptr.hbm [resolvable:$true] %s57
      %s59 = sshll.u32 [#allocation12], 4
      %s60 = int_to_ptr.vmem [resolvable:$true] %s59
      %65 = dma.hbm_to_vmem [thread:$0]  %s58, 1024, %s60, [#allocation11], 128, 128, 8
    $region17: #{tpu_custom_call.1} parent=1 // pred_fallthru
      _
    // Predicated region
    $region18: #{tpu_custom_call.1} parent=1 // pred_check
      _
    $region19: #{tpu_custom_call.1} parent=1 // pred_check_branch
      %67 = sbr.rel (0) target = $region21
    $region20: #{tpu_custom_call.1} parent=1 // pred_region
      _
    $region21: #{tpu_custom_call.1} parent=1 // pred_fallthru
      _
    // Predicated region
    $region22: #{tpu_custom_call.1} parent=1 // pred_check
      _
    $region23: #{tpu_custom_call.1} parent=1 // pred_check_branch
      %69 = sbr.rel (0) target = $region25
    $region24: #{tpu_custom_call.1} parent=1 // pred_region
      %71 = vsyncadd [#allocation14], 0
      %s72 = sshll.u32 %s5, 4
      %s73 = int_to_ptr.hbm [resolvable:$true] %s72
      %s74 = sshll.u32 [#allocation13], 4
      %s75 = int_to_ptr.vmem [resolvable:$true] %s74
      %80 = dma.hbm_to_vmem [thread:$0]  %s73, 512, %s75, [#allocation14], 128, 128, 8
    $region25: #{tpu_custom_call.1} parent=1 // pred_fallthru
      _
    // Predicated region
    $region26: #{tpu_custom_call.1} parent=1 // pred_check
      _
    $region27: #{tpu_custom_call.1} parent=1 // pred_check_branch
      %82 = sbr.rel (0) target = $region29
    $region28: #{tpu_custom_call.1} parent=1 // pred_region
      %84 = vsyncadd [#allocation14], 0
      %s85 = sshll.u32 %s6, 4
      %s86 = int_to_ptr.hbm [resolvable:$true] %s85
      %s87 = sshll.u32 [#allocation15], 4
      %s88 = int_to_ptr.vmem [resolvable:$true] %s87
      %93 = dma.hbm_to_vmem [thread:$0]  %s86, 1024, %s88, [#allocation14], 128, 128, 8
    $region29: #{tpu_custom_call.1} parent=1 // pred_fallthru
      _
    // Predicated region
    $region30: #{tpu_custom_call.1} parent=1 // pred_check
      _
    $region31: #{tpu_custom_call.1} parent=1 // pred_check_branch
      %95 = sbr.rel (0) target = $region33
    $region32: #{tpu_custom_call.1} parent=1 // pred_region
      _
    $region33: #{tpu_custom_call.1} parent=1 // pred_fallthru
      _
    // Predicated region
    $region34: #{tpu_custom_call.1} parent=1 // pred_check
      _
    $region35: #{tpu_custom_call.1} parent=1 // pred_check_branch
      %97 = sbr.rel (0) target = $region37
    $region36: #{tpu_custom_call.1} parent=1 // pred_region
      %99 = vsyncadd [#allocation17], 0
      %s100 = sshll.u32 %s8, 4
      %s101 = int_to_ptr.hbm [resolvable:$true] %s100
      %s102 = sshll.u32 [#allocation16], 4
      %s103 = int_to_ptr.vmem [resolvable:$true] %s102
      %108 = dma.hbm_to_vmem [thread:$0]  %s101, 2048, %s103, [#allocation17], 128, 128, 8
    $region37: #{tpu_custom_call.1} parent=1 // pred_fallthru
      _
    // Predicated region
    $region38: #{tpu_custom_call.1} parent=1 // pred_check
      _
    $region39: #{tpu_custom_call.1} parent=1 // pred_check_branch
      %110 = sbr.rel (0) target = $region41
    $region40: #{tpu_custom_call.1} parent=1 // pred_region
      %112 = vsyncadd [#allocation17], 0
      %s113 = sshll.u32 %s9, 4
      %s114 = int_to_ptr.hbm [resolvable:$true] %s113
      %s115 = sshll.u32 [#allocation18], 4
      %s116 = int_to_ptr.vmem [resolvable:$true] %s115
      %121 = dma.hbm_to_vmem [thread:$0]  %s114, 1024, %s116, [#allocation17], 128, 128, 8
    $region41: #{tpu_custom_call.1} parent=1 // pred_fallthru
      _
    // Predicated region
    $region42: #{tpu_custom_call.1} parent=1 // pred_check
      _
    $region43: #{tpu_custom_call.1} parent=1 // pred_check_branch
      %123 = sbr.rel (0) target = $region45
    $region44: #{tpu_custom_call.1} parent=1 // pred_region
      _
    $region45: #{tpu_custom_call.1} parent=1 // pred_fallthru
      _
    // Predicated region
    $region46: #{tpu_custom_call.1} parent=1 // pred_check
      _
    $region47: #{tpu_custom_call.1} parent=1 // pred_check_branch
      %125 = sbr.rel (0) target = $region49
    $region48: #{tpu_custom_call.1} parent=1 // pred_region
      %127 = vsyncadd [#allocation20], 0
      %s128 = sshll.u32 %s11, 4
      %s129 = int_to_ptr.hbm [resolvable:$true] %s128
      %s130 = sshll.u32 [#allocation19], 4
      %s131 = int_to_ptr.vmem [resolvable:$true] %s130
      %136 = dma.hbm_to_vmem [thread:$0]  %s129, 2048, %s131, [#allocation20], 128, 128, 8
    $region49: #{tpu_custom_call.1} parent=1 // pred_fallthru
      _
    // Predicated region
    $region50: #{tpu_custom_call.1} parent=1 // pred_check
      _
    $region51: #{tpu_custom_call.1} parent=1 // pred_check_branch
      %138 = sbr.rel (0) target = $region53
    $region52: #{tpu_custom_call.1} parent=1 // pred_region
      %140 = vsyncadd [#allocation20], 0
      %s141 = sshll.u32 %s12, 4
      %s142 = int_to_ptr.hbm [resolvable:$true] %s141
      %s143 = sshll.u32 [#allocation21], 4
      %s144 = int_to_ptr.vmem [resolvable:$true] %s143
      %149 = dma.hbm_to_vmem [thread:$0]  %s142, 1024, %s144, [#allocation20], 128, 128, 8
    $region53: #{tpu_custom_call.1} parent=1 // pred_fallthru
      _
    // Predicated region
    $region54: #{tpu_custom_call.1} parent=1 // pred_check
      _
    $region55: #{tpu_custom_call.1} parent=1 // pred_check_branch
      %151 = sbr.rel (0) target = $region57
    $region56: #{tpu_custom_call.1} parent=1 // pred_region
      _
    $region57: #{tpu_custom_call.1} parent=1 // pred_fallthru
      _
    // Predicated region
    $region58: #{tpu_custom_call.1} parent=1 // pred_check
      _
    $region59: #{tpu_custom_call.1} parent=1 // pred_check_branch
      %153 = sbr.rel (0) target = $region61
    $region60: #{tpu_custom_call.1} parent=1 // pred_region
      %155 = dma.done [#allocation8], 1024
    $region61: #{tpu_custom_call.1} parent=1 // pred_fallthru
      _
    // Predicated region
    $region62: #{tpu_custom_call.1} parent=1 // pred_check
      _
    $region63: #{tpu_custom_call.1} parent=1 // pred_check_branch
      %157 = sbr.rel (0) target = $region65
    $region64: #{tpu_custom_call.1} parent=1 // pred_region
      %159 = dma.done [#allocation11], 512
    $region65: #{tpu_custom_call.1} parent=1 // pred_fallthru
      _
    // Predicated region
    $region66: #{tpu_custom_call.1} parent=1 // pred_check
      _
    $region67: #{tpu_custom_call.1} parent=1 // pred_check_branch
      %161 = sbr.rel (0) target = $region69
    $region68: #{tpu_custom_call.1} parent=1 // pred_region
      %163 = dma.done [#allocation11], 1024
    $region69: #{tpu_custom_call.1} parent=1 // pred_fallthru
      _
    // Predicated region
    $region70: #{tpu_custom_call.1} parent=1 // pred_check
      _
    $region71: #{tpu_custom_call.1} parent=1 // pred_check_branch
      %165 = sbr.rel (0) target = $region73
    $region72: #{tpu_custom_call.1} parent=1 // pred_region
      %167 = dma.done [#allocation14], 512
    $region73: #{tpu_custom_call.1} parent=1 // pred_fallthru
      _
    // Predicated region
    $region74: #{tpu_custom_call.1} parent=1 // pred_check
      _
    $region75: #{tpu_custom_call.1} parent=1 // pred_check_branch
      %169 = sbr.rel (0) target = $region77
    $region76: #{tpu_custom_call.1} parent=1 // pred_region
      %171 = dma.done [#allocation14], 1024
    $region77: #{tpu_custom_call.1} parent=1 // pred_fallthru
      _
    // Predicated region
    $region78: #{tpu_custom_call.1} parent=1 // pred_check
      _
    $region79: #{tpu_custom_call.1} parent=1 // pred_check_branch
      %173 = sbr.rel (0) target = $region81
    $region80: #{tpu_custom_call.1} parent=1 // pred_region
      %175 = dma.done [#allocation17], 2048
    $region81: #{tpu_custom_call.1} parent=1 // pred_fallthru
      _
    // Predicated region
    $region82: #{tpu_custom_call.1} parent=1 // pred_check
      _
    $region83: #{tpu_custom_call.1} parent=1 // pred_check_branch
      %177 = sbr.rel (0) target = $region85
    $region84: #{tpu_custom_call.1} parent=1 // pred_region
      %179 = dma.done [#allocation17], 1024
    $region85: #{tpu_custom_call.1} parent=1 // pred_fallthru
      _
    // Predicated region
    $region86: #{tpu_custom_call.1} parent=1 // pred_check
      _
    $region87: #{tpu_custom_call.1} parent=1 // pred_check_branch
      %181 = sbr.rel (0) target = $region89
    $region88: #{tpu_custom_call.1} parent=1 // pred_region
      %183 = dma.done [#allocation20], 2048
    $region89: #{tpu_custom_call.1} parent=1 // pred_fallthru
      _
    // Predicated region
    $region90: #{tpu_custom_call.1} parent=1 // pred_check
      _
    $region91: #{tpu_custom_call.1} parent=1 // pred_check_branch
      %185 = sbr.rel (0) target = $region93
    $region92: #{tpu_custom_call.1} parent=1 // pred_region
      %187 = dma.done [#allocation20], 1024
    $region93: #{tpu_custom_call.1} parent=1 // pred_fallthru
      _
    %v189 = vld [vmem:[%s0] sm:$0xff]
    %v190 = vld [vmem:[#allocation7] sm:$0xf]
    %v191 = vld [vmem:[#allocation7 + $0x4] sm:$0xf]
    %v192 = vld [vmem:[#allocation7 + $0x8] sm:$0xf]
    %v193 = vld [vmem:[#allocation7 + $0xc] sm:$0xf]
    %v194 = vld [vmem:[#allocation7 + $0x10] sm:$0xf]
    %v195 = vld [vmem:[#allocation7 + $0x14] sm:$0xf]
    %v196 = vld [vmem:[#allocation7 + $0x18] sm:$0xf]
    %v197 = vld [vmem:[#allocation7 + $0x1c] sm:$0xf]
    %v198 = vld [vmem:[#allocation7 + $0x20] sm:$0xf]
    %v199 = vld [vmem:[#allocation7 + $0x24] sm:$0xf]
    %v200 = vld [vmem:[#allocation7 + $0x28] sm:$0xf]
    %v201 = vld [vmem:[#allocation7 + $0x2c] sm:$0xf]
    %v202 = vld [vmem:[#allocation7 + $0x30] sm:$0xf]
    %v203 = vld [vmem:[#allocation7 + $0x34] sm:$0xf]
    %v204 = vld [vmem:[#allocation7 + $0x38] sm:$0xf]
    %v205 = vld [vmem:[#allocation7 + $0x3c] sm:$0xf]
    %v206 = vld [vmem:[#allocation10] sm:$0xff]
    %v207 = vld [vmem:[#allocation10 + $0x8] sm:$0xff]
    %v208 = vld [vmem:[#allocation10 + $0x10] sm:$0xff]
    %v209 = vld [vmem:[#allocation10 + $0x18] sm:$0xff]
    %v226 = vunpack.c.l.b16 %v190
    %v227 = vunpack.c.l.b16 %v191
    %v228 = vunpack.c.l.b16 %v192
    %v229 = vunpack.c.l.b16 %v193
    %v230 = vunpack.c.l.b16 %v194
    %v231 = vunpack.c.l.b16 %v195
    %v232 = vunpack.c.l.b16 %v196
    %v233 = vunpack.c.l.b16 %v197
    %v234 = vunpack.c.l.b16 %v198
    %v235 = vunpack.c.l.b16 %v199
    %v236 = vunpack.c.l.b16 %v200
    %v237 = vunpack.c.l.b16 %v201
    %v238 = vunpack.c.l.b16 %v202
    %v239 = vunpack.c.l.b16 %v203
    %v240 = vunpack.c.l.b16 %v204
    %v241 = vunpack.c.l.b16 %v205
    %v242 = vpack.c.b16 %v227, %v226
    %v243 = vpack.c.b16 %v229, %v228
    %v244 = vpack.c.b16 %v231, %v230
    %v245 = vpack.c.b16 %v233, %v232
    %v246 = vpack.c.b16 %v235, %v234
    %v247 = vpack.c.b16 %v237, %v236
    %v248 = vpack.c.b16 %v239, %v238
    %v249 = vpack.c.b16 %v241, %v240
    %v254 = vunpack.c.l.b16 %v206
    %v255 = vunpack.c.h.b16 %v206
    %v256 = vunpack.c.l.b16 %v207
    %v257 = vunpack.c.h.b16 %v207
    %v258 = vunpack.c.l.b16 %v208
    %v259 = vunpack.c.h.b16 %v208
    %v260 = vunpack.c.l.b16 %v209
    %v261 = vunpack.c.h.b16 %v209
    %v262 = vpack.c.b16 %v256, %v254
    %v263 = vpack.c.b16 %v257, %v255
    %v264 = vpack.c.b16 %v260, %v258
    %v265 = vpack.c.b16 %v261, %v259
    %vm270 = vcmask 261120
    %v272 = vsel %vm270, %v242, 0
    %v275 = vsel %vm270, %v243, 0
    %v278 = vsel %vm270, %v244, 0
    %v281 = vsel %vm270, %v245, 0
    %v284 = vsel %vm270, %v246, 0
    %v287 = vsel %vm270, %v247, 0
    %v290 = vsel %vm270, %v248, 0
    %v293 = vsel %vm270, %v249, 0
    %295 = vmatpush.bf16.msra.mxu0 0
    %296 = vmatpush.bf16.msra.mxu0 0
    %297 = vmatpush.bf16.msra.mxu0 0
    %298 = vmatpush.bf16.msra.mxu0 0
    %299 = vmatpush.bf16.msra.mxu0 0
    %300 = vmatpush.bf16.msra.mxu0 0
    %301 = vmatpush.bf16.msra.mxu0 %v264
    %302 = vmatpush.bf16.msra.mxu0 %v262
    %303 = vmatmul.bf16.gmra.mxu0 %v272
    %v304 = vpop.f32.mrf.mxu0
    %v305 = vadd.f32 0.0, %v304
    %v306 = vpop.f32.mrf.mxu0
    %v307 = vadd.f32 0.0, %v306
    %308 = vmatmul.bf16.gmra.mxu0 %v275
    %v309 = vpop.f32.mrf.mxu0
    %v310 = vadd.f32 0.0, %v309
    %v311 = vpop.f32.mrf.mxu0
    %v312 = vadd.f32 0.0, %v311
    %313 = vmatmul.bf16.gmra.mxu0 %v278
    %v314 = vpop.f32.mrf.mxu0
    %v315 = vadd.f32 0.0, %v314
    %v316 = vpop.f32.mrf.mxu0
    %v317 = vadd.f32 0.0, %v316
    %318 = vmatmul.bf16.gmra.mxu0 %v281
    %v319 = vpop.f32.mrf.mxu0
    %v320 = vadd.f32 0.0, %v319
    %v321 = vpop.f32.mrf.mxu0
    %v322 = vadd.f32 0.0, %v321
    %323 = vmatmul.bf16.gmra.mxu0 %v284
    %v324 = vpop.f32.mrf.mxu0
    %v325 = vadd.f32 0.0, %v324
    %v326 = vpop.f32.mrf.mxu0
    %v327 = vadd.f32 0.0, %v326
    %328 = vmatmul.bf16.gmra.mxu0 %v287
    %v329 = vpop.f32.mrf.mxu0
    %v330 = vadd.f32 0.0, %v329
    %v331 = vpop.f32.mrf.mxu0
    %v332 = vadd.f32 0.0, %v331
    %333 = vmatmul.bf16.gmra.mxu0 %v290
    %v334 = vpop.f32.mrf.mxu0
    %v335 = vadd.f32 0.0, %v334
    %v336 = vpop.f32.mrf.mxu0
    %v337 = vadd.f32 0.0, %v336
    %338 = vmatmul.bf16.gmra.mxu0 %v293
    %v339 = vpop.f32.mrf.mxu0
    %v340 = vadd.f32 0.0, %v339
    %v341 = vpop.f32.mrf.mxu0
    %v342 = vadd.f32 0.0, %v341
    %343 = vdwg.mxu0
    %344 = vmatpush.bf16.msra.mxu0 0
    %345 = vmatpush.bf16.msra.mxu0 0
    %346 = vmatpush.bf16.msra.mxu0 0
    %347 = vmatpush.bf16.msra.mxu0 0
    %348 = vmatpush.bf16.msra.mxu0 0
    %349 = vmatpush.bf16.msra.mxu0 0
    %350 = vmatpush.bf16.msra.mxu0 %v265
    %351 = vmatpush.bf16.msra.mxu0 %v263
    %352 = vmatmul.bf16.gmra.mxu0 %v272
    %v353 = vpop.f32.mrf.mxu0
    %v354 = vadd.f32 0.0, %v353
    %v355 = vpop.f32.mrf.mxu0
    %v356 = vadd.f32 0.0, %v355
    %357 = vmatmul.bf16.gmra.mxu0 %v275
    %v358 = vpop.f32.mrf.mxu0
    %v359 = vadd.f32 0.0, %v358
    %v360 = vpop.f32.mrf.mxu0
    %v361 = vadd.f32 0.0, %v360
    %362 = vmatmul.bf16.gmra.mxu0 %v278
    %v363 = vpop.f32.mrf.mxu0
    %v364 = vadd.f32 0.0, %v363
    %v365 = vpop.f32.mrf.mxu0
    %v366 = vadd.f32 0.0, %v365
    %367 = vmatmul.bf16.gmra.mxu0 %v281
    %v368 = vpop.f32.mrf.mxu0
    %v369 = vadd.f32 0.0, %v368
    %v370 = vpop.f32.mrf.mxu0
    %v371 = vadd.f32 0.0, %v370
    %372 = vmatmul.bf16.gmra.mxu0 %v284
    %v373 = vpop.f32.mrf.mxu0
    %v374 = vadd.f32 0.0, %v373
    %v375 = vpop.f32.mrf.mxu0
    %v376 = vadd.f32 0.0, %v375
    %377 = vmatmul.bf16.gmra.mxu0 %v287
    %v378 = vpop.f32.mrf.mxu0
    %v379 = vadd.f32 0.0, %v378
    %v380 = vpop.f32.mrf.mxu0
    %v381 = vadd.f32 0.0, %v380
    %382 = vmatmul.bf16.gmra.mxu0 %v290
    %v383 = vpop.f32.mrf.mxu0
    %v384 = vadd.f32 0.0, %v383
    %v385 = vpop.f32.mrf.mxu0
    %v386 = vadd.f32 0.0, %v385
    %387 = vmatmul.bf16.gmra.mxu0 %v293
    %v388 = vpop.f32.mrf.mxu0
    %v389 = vadd.f32 0.0, %v388
    %v390 = vpop.f32.mrf.mxu0
    %v391 = vadd.f32 0.0, %v390
    %392 = vdwg.mxu0
    %v393 = vld [vmem:[%s4] sm:$0x3]
    %v395 = vperm.slane %v393, 0
    %v396 = vperm.slane %v393, 1
    %v399 = vadd.f32 %v305, %v395
    %v400 = vadd.f32 %v354, %v396
    %v401 = vadd.f32 %v307, %v395
    %v402 = vadd.f32 %v356, %v396
    %v403 = vadd.f32 %v310, %v395
    %v404 = vadd.f32 %v359, %v396
    %v405 = vadd.f32 %v312, %v395
    %v406 = vadd.f32 %v361, %v396
    %v407 = vadd.f32 %v315, %v395
    %v408 = vadd.f32 %v364, %v396
    %v409 = vadd.f32 %v317, %v395
    %v410 = vadd.f32 %v366, %v396
    %v411 = vadd.f32 %v320, %v395
    %v412 = vadd.f32 %v369, %v396
    %v413 = vadd.f32 %v322, %v395
    %v414 = vadd.f32 %v371, %v396
    %v415 = vadd.f32 %v325, %v395
    %v416 = vadd.f32 %v374, %v396
    %v417 = vadd.f32 %v327, %v395
    %v418 = vadd.f32 %v376, %v396
    %v419 = vadd.f32 %v330, %v395
    %v420 = vadd.f32 %v379, %v396
    %v421 = vadd.f32 %v332, %v395
    %v422 = vadd.f32 %v381, %v396
    %v423 = vadd.f32 %v335, %v395
    %v424 = vadd.f32 %v384, %v396
    %v425 = vadd.f32 %v337, %v395
    %v426 = vadd.f32 %v386, %v396
    %v427 = vadd.f32 %v340, %v395
    %v428 = vadd.f32 %v389, %v396
    %v429 = vadd.f32 %v342, %v395
    %v430 = vadd.f32 %v391, %v396
    %431 = vst [vmem:[#allocation2] sm:$0xff] %v399
    %432 = vst [vmem:[#allocation2 + $0x8] sm:$0xff] %v400
    %433 = vst [vmem:[#allocation2 + $0x10] sm:$0xff] %v401
    %434 = vst [vmem:[#allocation2 + $0x18] sm:$0xff] %v402
    %435 = vst [vmem:[#allocation2 + $0x20] sm:$0xff] %v403
    %436 = vst [vmem:[#allocation2 + $0x28] sm:$0xff] %v404
    %437 = vst [vmem:[#allocation2 + $0x30] sm:$0xff] %v405
    %438 = vst [vmem:[#allocation2 + $0x38] sm:$0xff] %v406
    %439 = vst [vmem:[#allocation2 + $0x40] sm:$0xff] %v407
    %440 = vst [vmem:[#allocation2 + $0x48] sm:$0xff] %v408
    %441 = vst [vmem:[#allocation2 + $0x50] sm:$0xff] %v409
    %442 = vst [vmem:[#allocation2 + $0x58] sm:$0xff] %v410
    %443 = vst [vmem:[#allocation2 + $0x60] sm:$0xff] %v411
    %444 = vst [vmem:[#allocation2 + $0x68] sm:$0xff] %v412
    %445 = vst [vmem:[#allocation2 + $0x70] sm:$0xff] %v413
    %446 = vst [vmem:[#allocation2 + $0x78] sm:$0xff] %v414
    %447 = vst [vmem:[#allocation2 + $0x80] sm:$0xff] %v415
    %448 = vst [vmem:[#allocation2 + $0x88] sm:$0xff] %v416
    %449 = vst [vmem:[#allocation2 + $0x90] sm:$0xff] %v417
    %450 = vst [vmem:[#allocation2 + $0x98] sm:$0xff] %v418
    %451 = vst [vmem:[#allocation2 + $0xa0] sm:$0xff] %v419
    %452 = vst [vmem:[#allocation2 + $0xa8] sm:$0xff] %v420
    %453 = vst [vmem:[#allocation2 + $0xb0] sm:$0xff] %v421
    %454 = vst [vmem:[#allocation2 + $0xb8] sm:$0xff] %v422
    %455 = vst [vmem:[#allocation2 + $0xc0] sm:$0xff] %v423
    %456 = vst [vmem:[#allocation2 + $0xc8] sm:$0xff] %v424
    %457 = vst [vmem:[#allocation2 + $0xd0] sm:$0xff] %v425
    %458 = vst [vmem:[#allocation2 + $0xd8] sm:$0xff] %v426
    %459 = vst [vmem:[#allocation2 + $0xe0] sm:$0xff] %v427
    %460 = vst [vmem:[#allocation2 + $0xe8] sm:$0xff] %v428
    %461 = vst [vmem:[#allocation2 + $0xf0] sm:$0xff] %v429
    %462 = vst [vmem:[#allocation2 + $0xf8] sm:$0xff] %v430
    %v463 = vld [vmem:[#allocation13] sm:$0xff]
    %v464 = vld [vmem:[#allocation13 + $0x8] sm:$0xff]
    %v465 = vld [vmem:[#allocation13 + $0x10] sm:$0xff]
    %v466 = vld [vmem:[#allocation13 + $0x18] sm:$0xff]
    %v471 = vunpack.c.l.b16 %v463
    %v472 = vunpack.c.h.b16 %v463
    %v473 = vunpack.c.l.b16 %v464
    %v474 = vunpack.c.h.b16 %v464
    %v475 = vunpack.c.l.b16 %v465
    %v476 = vunpack.c.h.b16 %v465
    %v477 = vunpack.c.l.b16 %v466
    %v478 = vunpack.c.h.b16 %v466
    %v479 = vpack.c.b16 %v473, %v471
    %v480 = vpack.c.b16 %v474, %v472
    %v481 = vpack.c.b16 %v477, %v475
    %v482 = vpack.c.b16 %v478, %v476
    %487 = vmatpush.bf16.msra.mxu0 0
    %488 = vmatpush.bf16.msra.mxu0 0
    %489 = vmatpush.bf16.msra.mxu0 0
    %490 = vmatpush.bf16.msra.mxu0 0
    %491 = vmatpush.bf16.msra.mxu0 0
    %492 = vmatpush.bf16.msra.mxu0 0
    %493 = vmatpush.bf16.msra.mxu0 %v481
    %494 = vmatpush.bf16.msra.mxu0 %v479
    %495 = vmatmul.bf16.gmra.mxu0 %v272
    %v496 = vpop.f32.mrf.mxu0
    %v497 = vadd.f32 0.0, %v496
    %v498 = vpop.f32.mrf.mxu0
    %v499 = vadd.f32 0.0, %v498
    %500 = vmatmul.bf16.gmra.mxu0 %v275
    %v501 = vpop.f32.mrf.mxu0
    %v502 = vadd.f32 0.0, %v501
    %v503 = vpop.f32.mrf.mxu0
    %v504 = vadd.f32 0.0, %v503
    %505 = vmatmul.bf16.gmra.mxu0 %v278
    %v506 = vpop.f32.mrf.mxu0
    %v507 = vadd.f32 0.0, %v506
    %v508 = vpop.f32.mrf.mxu0
    %v509 = vadd.f32 0.0, %v508
    %510 = vmatmul.bf16.gmra.mxu0 %v281
    %v511 = vpop.f32.mrf.mxu0
    %v512 = vadd.f32 0.0, %v511
    %v513 = vpop.f32.mrf.mxu0
    %v514 = vadd.f32 0.0, %v513
    %515 = vmatmul.bf16.gmra.mxu0 %v284
    %v516 = vpop.f32.mrf.mxu0
    %v517 = vadd.f32 0.0, %v516
    %v518 = vpop.f32.mrf.mxu0
    %v519 = vadd.f32 0.0, %v518
    %520 = vmatmul.bf16.gmra.mxu0 %v287
    %v521 = vpop.f32.mrf.mxu0
    %v522 = vadd.f32 0.0, %v521
    %v523 = vpop.f32.mrf.mxu0
    %v524 = vadd.f32 0.0, %v523
    %525 = vmatmul.bf16.gmra.mxu0 %v290
    %v526 = vpop.f32.mrf.mxu0
    %v527 = vadd.f32 0.0, %v526
    %v528 = vpop.f32.mrf.mxu0
    %v529 = vadd.f32 0.0, %v528
    %530 = vmatmul.bf16.gmra.mxu0 %v293
    %v531 = vpop.f32.mrf.mxu0
    %v532 = vadd.f32 0.0, %v531
    %v533 = vpop.f32.mrf.mxu0
    %v534 = vadd.f32 0.0, %v533
    %535 = vdwg.mxu0
    %536 = vmatpush.bf16.msra.mxu0 0
    %537 = vmatpush.bf16.msra.mxu0 0
    %538 = vmatpush.bf16.msra.mxu0 0
    %539 = vmatpush.bf16.msra.mxu0 0
    %540 = vmatpush.bf16.msra.mxu0 0
    %541 = vmatpush.bf16.msra.mxu0 0
    %542 = vmatpush.bf16.msra.mxu0 %v482
    %543 = vmatpush.bf16.msra.mxu0 %v480
    %544 = vmatmul.bf16.gmra.mxu0 %v272
    %v545 = vpop.f32.mrf.mxu0
    %v546 = vadd.f32 0.0, %v545
    %v547 = vpop.f32.mrf.mxu0
    %v548 = vadd.f32 0.0, %v547
    %549 = vmatmul.bf16.gmra.mxu0 %v275
    %v550 = vpop.f32.mrf.mxu0
    %v551 = vadd.f32 0.0, %v550
    %v552 = vpop.f32.mrf.mxu0
    %v553 = vadd.f32 0.0, %v552
    %554 = vmatmul.bf16.gmra.mxu0 %v278
    %v555 = vpop.f32.mrf.mxu0
    %v556 = vadd.f32 0.0, %v555
    %v557 = vpop.f32.mrf.mxu0
    %v558 = vadd.f32 0.0, %v557
    %559 = vmatmul.bf16.gmra.mxu0 %v281
    %v560 = vpop.f32.mrf.mxu0
    %v561 = vadd.f32 0.0, %v560
    %v562 = vpop.f32.mrf.mxu0
    %v563 = vadd.f32 0.0, %v562
    %564 = vmatmul.bf16.gmra.mxu0 %v284
    %v565 = vpop.f32.mrf.mxu0
    %v566 = vadd.f32 0.0, %v565
    %v567 = vpop.f32.mrf.mxu0
    %v568 = vadd.f32 0.0, %v567
    %569 = vmatmul.bf16.gmra.mxu0 %v287
    %v570 = vpop.f32.mrf.mxu0
    %v571 = vadd.f32 0.0, %v570
    %v572 = vpop.f32.mrf.mxu0
    %v573 = vadd.f32 0.0, %v572
    %574 = vmatmul.bf16.gmra.mxu0 %v290
    %v575 = vpop.f32.mrf.mxu0
    %v576 = vadd.f32 0.0, %v575
    %v577 = vpop.f32.mrf.mxu0
    %v578 = vadd.f32 0.0, %v577
    %579 = vmatmul.bf16.gmra.mxu0 %v293
    %v580 = vpop.f32.mrf.mxu0
    %v581 = vadd.f32 0.0, %v580
    %v582 = vpop.f32.mrf.mxu0
    %v583 = vadd.f32 0.0, %v582
    %584 = vdwg.mxu0
    %v585 = vld [vmem:[%s7] sm:$0x3]
    %v587 = vperm.slane %v585, 0
    %v588 = vperm.slane %v585, 1
    %v591 = vadd.f32 %v497, %v587
    %v592 = vadd.f32 %v546, %v588
    %v593 = vadd.f32 %v499, %v587
    %v594 = vadd.f32 %v548, %v588
    %v595 = vadd.f32 %v502, %v587
    %v596 = vadd.f32 %v551, %v588
    %v597 = vadd.f32 %v504, %v587
    %v598 = vadd.f32 %v553, %v588
    %v599 = vadd.f32 %v507, %v587
    %v600 = vadd.f32 %v556, %v588
    %v601 = vadd.f32 %v509, %v587
    %v602 = vadd.f32 %v558, %v588
    %v603 = vadd.f32 %v512, %v587
    %v604 = vadd.f32 %v561, %v588
    %v605 = vadd.f32 %v514, %v587
    %v606 = vadd.f32 %v563, %v588
    %v607 = vadd.f32 %v517, %v587
    %v608 = vadd.f32 %v566, %v588
    %v609 = vadd.f32 %v519, %v587
    %v610 = vadd.f32 %v568, %v588
    %v611 = vadd.f32 %v522, %v587
    %v612 = vadd.f32 %v571, %v588
    %v613 = vadd.f32 %v524, %v587
    %v614 = vadd.f32 %v573, %v588
    %v615 = vadd.f32 %v527, %v587
    %v616 = vadd.f32 %v576, %v588
    %v617 = vadd.f32 %v529, %v587
    %v618 = vadd.f32 %v578, %v588
    %v619 = vadd.f32 %v532, %v587
    %v620 = vadd.f32 %v581, %v588
    %v621 = vadd.f32 %v534, %v587
    %v622 = vadd.f32 %v583, %v588
    %s623 = scalar_lea.vmem [#allocation2], 256
    %624 = vst [vmem:[%s623] sm:$0xff] %v591
    %625 = vst [vmem:[%s623 + $0x8] sm:$0xff] %v592
    %626 = vst [vmem:[%s623 + $0x10] sm:$0xff] %v593
    %627 = vst [vmem:[%s623 + $0x18] sm:$0xff] %v594
    %628 = vst [vmem:[%s623 + $0x20] sm:$0xff] %v595
    %629 = vst [vmem:[%s623 + $0x28] sm:$0xff] %v596
    %630 = vst [vmem:[%s623 + $0x30] sm:$0xff] %v597
    %631 = vst [vmem:[%s623 + $0x38] sm:$0xff] %v598
    %632 = vst [vmem:[%s623 + $0x40] sm:$0xff] %v599
    %633 = vst [vmem:[%s623 + $0x48] sm:$0xff] %v600
    %634 = vst [vmem:[%s623 + $0x50] sm:$0xff] %v601
    %635 = vst [vmem:[%s623 + $0x58] sm:$0xff] %v602
    %636 = vst [vmem:[%s623 + $0x60] sm:$0xff] %v603
    %637 = vst [vmem:[%s623 + $0x68] sm:$0xff] %v604
    %638 = vst [vmem:[%s623 + $0x70] sm:$0xff] %v605
    %639 = vst [vmem:[%s623 + $0x78] sm:$0xff] %v606
    %640 = vst [vmem:[%s623 + $0x80] sm:$0xff] %v607
    %641 = vst [vmem:[%s623 + $0x88] sm:$0xff] %v608
    %642 = vst [vmem:[%s623 + $0x90] sm:$0xff] %v609
    %643 = vst [vmem:[%s623 + $0x98] sm:$0xff] %v610
    %644 = vst [vmem:[%s623 + $0xa0] sm:$0xff] %v611
    %645 = vst [vmem:[%s623 + $0xa8] sm:$0xff] %v612
    %646 = vst [vmem:[%s623 + $0xb0] sm:$0xff] %v613
    %647 = vst [vmem:[%s623 + $0xb8] sm:$0xff] %v614
    %648 = vst [vmem:[%s623 + $0xc0] sm:$0xff] %v615
    %649 = vst [vmem:[%s623 + $0xc8] sm:$0xff] %v616
    %650 = vst [vmem:[%s623 + $0xd0] sm:$0xff] %v617
    %651 = vst [vmem:[%s623 + $0xd8] sm:$0xff] %v618
    %652 = vst [vmem:[%s623 + $0xe0] sm:$0xff] %v619
    %653 = vst [vmem:[%s623 + $0xe8] sm:$0xff] %v620
    %654 = vst [vmem:[%s623 + $0xf0] sm:$0xff] %v621
    %655 = vst [vmem:[%s623 + $0xf8] sm:$0xff] %v622
    %vm656 = vcmask 523264
    %657 = vst.msk [vmem:[#allocation4] sm:$0xff] %vm656, 0.0
    %658 = vst.msk [vmem:[#allocation4 + $0x8] sm:$0xff] %vm656, 0.0
    %659 = vst.msk [vmem:[#allocation5] sm:$0xff] %vm656, 0.0
    %660 = vst.msk [vmem:[#allocation5 + $0x8] sm:$0xff] %vm656, 0.0
    loop: start=0, step=1, limit=8
    $region94: #{tpu_custom_call.1} parent=1 // loop_pre_header
      _
    $region95: #{tpu_custom_call.1} parent=1 // loop_header
      %s662 = sphi 0, %s666
      %p663 = scmp.ge.s32.totalorder %s662, 8
    $region96: #{tpu_custom_call.1} parent=1 // loop_header_branch
      %665 = sbr.rel (%p663) target = $region100
    $region97: #{tpu_custom_call.1} parent=1 // loop_body
      %s667 = smul.u32 %s662, 2
      %v668 = vld [vmem:[#allocation4] sm:$0xff]
      %v669 = vld [vmem:[#allocation5] sm:$0xff]
      %s670 = smul.u32 %s667, 2
      %s671 = smul.addr %s670, 8
      %s672 = scalar_lea.vmem [#allocation2], %s671
      %v673 = vld [vmem:[%s672] sm:$0xff]
      %v674 = vld [vmem:[%s672 + $0x8] sm:$0xff]
      %v675 = vpack.c.bf16 %v668, %v668
      %v676 = vld [vmem:[#allocation12] sm:$0xff]
      %v677 = vld [vmem:[#allocation12 + $0x8] sm:$0xff]
      %v678 = vld [vmem:[#allocation12 + $0x10] sm:$0xff]
      %v679 = vld [vmem:[#allocation12 + $0x18] sm:$0xff]
      %v680 = vld [vmem:[#allocation12 + $0x20] sm:$0xff]
      %v681 = vld [vmem:[#allocation12 + $0x28] sm:$0xff]
      %v682 = vld [vmem:[#allocation12 + $0x30] sm:$0xff]
      %v683 = vld [vmem:[#allocation12 + $0x38] sm:$0xff]
      %v692 = vunpack.c.l.b16 %v676
      %v693 = vunpack.c.h.b16 %v676
      %v694 = vunpack.c.l.b16 %v677
      %v695 = vunpack.c.h.b16 %v677
      %v696 = vunpack.c.l.b16 %v678
      %v697 = vunpack.c.h.b16 %v678
      %v698 = vunpack.c.l.b16 %v679
      %v699 = vunpack.c.h.b16 %v679
      %v700 = vunpack.c.l.b16 %v680
      %v701 = vunpack.c.h.b16 %v680
      %v702 = vunpack.c.l.b16 %v681
      %v703 = vunpack.c.h.b16 %v681
      %v704 = vunpack.c.l.b16 %v682
      %v705 = vunpack.c.h.b16 %v682
      %v706 = vunpack.c.l.b16 %v683
      %v707 = vunpack.c.h.b16 %v683
      %v708 = vpack.c.b16 %v694, %v692
      %v709 = vpack.c.b16 %v695, %v693
      %v710 = vpack.c.b16 %v698, %v696
      %v711 = vpack.c.b16 %v699, %v697
      %v712 = vpack.c.b16 %v702, %v700
      %v713 = vpack.c.b16 %v703, %v701
      %v714 = vpack.c.b16 %v706, %v704
      %v715 = vpack.c.b16 %v707, %v705
      %v725 = vsel %vm656, %v675, 0
      %727 = vmatpush.bf16.msra.mxu0 0
      %728 = vmatpush.bf16.msra.mxu0 0
      %729 = vmatpush.bf16.msra.mxu0 0
      %730 = vmatpush.bf16.msra.mxu0 0
      %731 = vmatpush.bf16.msra.mxu0 %v714
      %732 = vmatpush.bf16.msra.mxu0 %v712
      %733 = vmatpush.bf16.msra.mxu0 %v710
      %734 = vmatpush.bf16.msra.mxu0 %v708
      %735 = vmatmul.bf16.gmra.mxu0 %v725
      %v736 = vpop.f32.mrf.mxu0
      %v737 = vadd.f32 0.0, %v736
      %v738 = vpop.f32.mrf.mxu0
      %739 = vdwg.mxu0
      %740 = vmatpush.bf16.msra.mxu0 0
      %741 = vmatpush.bf16.msra.mxu0 0
      %742 = vmatpush.bf16.msra.mxu0 0
      %743 = vmatpush.bf16.msra.mxu0 0
      %744 = vmatpush.bf16.msra.mxu0 %v715
      %745 = vmatpush.bf16.msra.mxu0 %v713
      %746 = vmatpush.bf16.msra.mxu0 %v711
      %747 = vmatpush.bf16.msra.mxu0 %v709
      %748 = vmatmul.bf16.gmra.mxu0 %v725
      %v749 = vpop.f32.mrf.mxu0
      %v750 = vadd.f32 0.0, %v749
      %v751 = vpop.f32.mrf.mxu0
      %752 = vdwg.mxu0
      %v753 = vadd.f32 %v673, %v737
      %v754 = vadd.f32 %v674, %v750
      %v755 = vxor.u32 %v753, 2147483648
      %v756 = vmul.f32 %v755, 1.442695
      %v757 = vpow.pop %v756
      %v758 = vadd.f32 %v757, 1.0
      %v759 = vrcp.pop %v758
      %v760 = vmul.f32 %v758, %v759
      %v761 = vsub.f32 1.0, %v760
      %v762 = vmul.f32 %v759, %v761
      %v763 = vadd.f32 %v759, %v762
      %vm764 = vweird.f32 %v758
      %vm765 = vweird.f32 %v759
      %vm766 = vmor %vm764, %vm765
      %v767 = vsel %vm766, %v759, %v763
      %v768 = vand.u32 2147483647, %v758
      %vm769 = vcmp.eq.f32.partialorder %v768, 8.507059e+37
      %v770 = vand.u32 %v758, 2147483648
      %v771 = vor.u32 1.1754944e-38, %v770
      %v772 = vsel %vm769, %v771, %v767
      %v773 = vmul.f32 1.0, %v772
      %v774 = vtanh.pop %v754
      %v775 = vxor.u32 %v754, 2147483648
      %v776 = vmul.f32 %v775, 1.442695
      %v777 = vpow.pop %v776
      %v778 = vadd.f32 %v777, 1.0
      %v779 = vrcp.pop %v778
      %v780 = vmul.f32 %v778, %v779
      %v781 = vsub.f32 1.0, %v780
      %v782 = vmul.f32 %v779, %v781
      %v783 = vadd.f32 %v779, %v782
      %vm784 = vweird.f32 %v778
      %vm785 = vweird.f32 %v779
      %vm786 = vmor %vm784, %vm785
      %v787 = vsel %vm786, %v779, %v783
      %v788 = vand.u32 2147483647, %v778
      %vm789 = vcmp.eq.f32.partialorder %v788, 8.507059e+37
      %v790 = vand.u32 %v778, 2147483648
      %v791 = vor.u32 1.1754944e-38, %v790
      %v792 = vsel %vm789, %v791, %v787
      %v793 = vmul.f32 1.0, %v792
      %795 = vrot.lane.b32.xlu0 %v669, 64
      %v796 = vpop.permute.xlu0 %795
      %v798 = vmul.f32 %v773, %v796
      %v799 = vmul.f32 %v773, %v774
      %801 = vrot.lane.b32.xlu0 %v799, 64
      %v802 = vpop.permute.xlu0 %801
      %v804 = vadd.f32 %v798, %v802
      %v805 = vtanh.pop %v804
      %v806 = vmul.f32 %v793, %v805
      %v807 = vstv %s667
      %vm808 = vcmp.gt.s32.totalorder %v189, %v807
      %v809 = vsel %vm808, 1, 0
      %810 = vset.pattern.permute.xlu0 0
      %811 = vperm.xlu0 %810, %v809
      %v812 = vpop.permute.xlu0 %811
      %vm813 = vcmp.eq.s32.totalorder %v812, 1
      %v814 = vsel %vm813, %v806, 0.0
      %v815 = vpack.c.bf16 %v814, %v814
      %817 = vrot.lane.b32.xlu0 %v815, 64
      %v818 = vpop.permute.xlu0 %817
      %s820 = smul.addr %s667, 4
      %s821 = scalar_lea.vmem [#allocation3], %s820
      %vm822 = vcmask 519168
      %823 = vst.msk [vmem:[%s821] sm:$0xf] %vm822, %v818
      %825 = vrot.lane.b32.xlu0 %v668, 64
      %v826 = vpop.permute.xlu0 %825
      %v828 = vsel %vm813, %v806, %v826
      %830 = vrot.lane.b32.xlu0 %v828, 64
      %v831 = vpop.permute.xlu0 %830
      %833 = vst.msk [vmem:[#allocation4] sm:$0xff] %vm656, %v831
      %v834 = vsel %vm813, %v804, %v796
      %836 = vrot.lane.b32.xlu0 %v834, 64
      %v837 = vpop.permute.xlu0 %836
      %839 = vst.msk [vmem:[#allocation5] sm:$0xff] %vm656, %v837
      %s840 = ssub.s32 15, %s667
      %s841 = scalar_lea.vmem [#allocation4], 8
      %v842 = vld [vmem:[%s841] sm:$0xff]
      %s843 = scalar_lea.vmem [#allocation5], 8
      %v844 = vld [vmem:[%s843] sm:$0xff]
      %s845 = smul.u32 %s840, 2
      %s846 = sadd.s32 %s845, 32
      %s847 = smul.addr %s846, 8
      %s848 = scalar_lea.vmem [#allocation2], %s847
      %v849 = vld [vmem:[%s848] sm:$0xff]
      %v850 = vld [vmem:[%s848 + $0x8] sm:$0xff]
      %v851 = vpack.c.bf16 %v842, %v842
      %v852 = vld [vmem:[#allocation15] sm:$0xff]
      %v853 = vld [vmem:[#allocation15 + $0x8] sm:$0xff]
      %v854 = vld [vmem:[#allocation15 + $0x10] sm:$0xff]
      %v855 = vld [vmem:[#allocation15 + $0x18] sm:$0xff]
      %v856 = vld [vmem:[#allocation15 + $0x20] sm:$0xff]
      %v857 = vld [vmem:[#allocation15 + $0x28] sm:$0xff]
      %v858 = vld [vmem:[#allocation15 + $0x30] sm:$0xff]
      %v859 = vld [vmem:[#allocation15 + $0x38] sm:$0xff]
      %v868 = vunpack.c.l.b16 %v852
      %v869 = vunpack.c.h.b16 %v852
      %v870 = vunpack.c.l.b16 %v853
      %v871 = vunpack.c.h.b16 %v853
      %v872 = vunpack.c.l.b16 %v854
      %v873 = vunpack.c.h.b16 %v854
      %v874 = vunpack.c.l.b16 %v855
      %v875 = vunpack.c.h.b16 %v855
      %v876 = vunpack.c.l.b16 %v856
      %v877 = vunpack.c.h.b16 %v856
      %v878 = vunpack.c.l.b16 %v857
      %v879 = vunpack.c.h.b16 %v857
      %v880 = vunpack.c.l.b16 %v858
      %v881 = vunpack.c.h.b16 %v858
      %v882 = vunpack.c.l.b16 %v859
      %v883 = vunpack.c.h.b16 %v859
      %v884 = vpack.c.b16 %v870, %v868
      %v885 = vpack.c.b16 %v871, %v869
      %v886 = vpack.c.b16 %v874, %v872
      %v887 = vpack.c.b16 %v875, %v873
      %v888 = vpack.c.b16 %v878, %v876
      %v889 = vpack.c.b16 %v879, %v877
      %v890 = vpack.c.b16 %v882, %v880
      %v891 = vpack.c.b16 %v883, %v881
      %v901 = vsel %vm656, %v851, 0
      %903 = vmatpush.bf16.msra.mxu0 0
      %904 = vmatpush.bf16.msra.mxu0 0
      %905 = vmatpush.bf16.msra.mxu0 0
      %906 = vmatpush.bf16.msra.mxu0 0
      %907 = vmatpush.bf16.msra.mxu0 %v890
      %908 = vmatpush.bf16.msra.mxu0 %v888
      %909 = vmatpush.bf16.msra.mxu0 %v886
      %910 = vmatpush.bf16.msra.mxu0 %v884
      %911 = vmatmul.bf16.gmra.mxu0 %v901
      %v912 = vpop.f32.mrf.mxu0
      %v913 = vadd.f32 0.0, %v912
      %v914 = vpop.f32.mrf.mxu0
      %915 = vdwg.mxu0
      %916 = vmatpush.bf16.msra.mxu0 0
      %917 = vmatpush.bf16.msra.mxu0 0
      %918 = vmatpush.bf16.msra.mxu0 0
      %919 = vmatpush.bf16.msra.mxu0 0
      %920 = vmatpush.bf16.msra.mxu0 %v891
      %921 = vmatpush.bf16.msra.mxu0 %v889
      %922 = vmatpush.bf16.msra.mxu0 %v887
      %923 = vmatpush.bf16.msra.mxu0 %v885
      %924 = vmatmul.bf16.gmra.mxu0 %v901
      %v925 = vpop.f32.mrf.mxu0
      %v926 = vadd.f32 0.0, %v925
      %v927 = vpop.f32.mrf.mxu0
      %928 = vdwg.mxu0
      %v929 = vadd.f32 %v849, %v913
      %v930 = vadd.f32 %v850, %v926
      %v931 = vxor.u32 %v929, 2147483648
      %v932 = vmul.f32 %v931, 1.442695
      %v933 = vpow.pop %v932
      %v934 = vadd.f32 %v933, 1.0
      %v935 = vrcp.pop %v934
      %v936 = vmul.f32 %v934, %v935
      %v937 = vsub.f32 1.0, %v936
      %v938 = vmul.f32 %v935, %v937
      %v939 = vadd.f32 %v935, %v938
      %vm940 = vweird.f32 %v934
      %vm941 = vweird.f32 %v935
      %vm942 = vmor %vm940, %vm941
      %v943 = vsel %vm942, %v935, %v939
      %v944 = vand.u32 2147483647, %v934
      %vm945 = vcmp.eq.f32.partialorder %v944, 8.507059e+37
      %v946 = vand.u32 %v934, 2147483648
      %v947 = vor.u32 1.1754944e-38, %v946
      %v948 = vsel %vm945, %v947, %v943
      %v949 = vmul.f32 1.0, %v948
      %v950 = vtanh.pop %v930
      %v951 = vxor.u32 %v930, 2147483648
      %v952 = vmul.f32 %v951, 1.442695
      %v953 = vpow.pop %v952
      %v954 = vadd.f32 %v953, 1.0
      %v955 = vrcp.pop %v954
      %v956 = vmul.f32 %v954, %v955
      %v957 = vsub.f32 1.0, %v956
      %v958 = vmul.f32 %v955, %v957
      %v959 = vadd.f32 %v955, %v958
      %vm960 = vweird.f32 %v954
      %vm961 = vweird.f32 %v955
      %vm962 = vmor %vm960, %vm961
      %v963 = vsel %vm962, %v955, %v959
      %v964 = vand.u32 2147483647, %v954
      %vm965 = vcmp.eq.f32.partialorder %v964, 8.507059e+37
      %v966 = vand.u32 %v954, 2147483648
      %v967 = vor.u32 1.1754944e-38, %v966
      %v968 = vsel %vm965, %v967, %v963
      %v969 = vmul.f32 1.0, %v968
      %971 = vrot.lane.b32.xlu0 %v844, 64
      %v972 = vpop.permute.xlu0 %971
      %v974 = vmul.f32 %v949, %v972
      %v975 = vmul.f32 %v949, %v950
      %977 = vrot.lane.b32.xlu0 %v975, 64
      %v978 = vpop.permute.xlu0 %977
      %v980 = vadd.f32 %v974, %v978
      %v981 = vtanh.pop %v980
      %v982 = vmul.f32 %v969, %v981
      %v983 = vstv %s840
      %vm984 = vcmp.gt.s32.totalorder %v189, %v983
      %v985 = vsel %vm984, 1, 0
      %986 = vset.pattern.permute.xlu0 0
      %987 = vperm.xlu0 %986, %v985
      %v988 = vpop.permute.xlu0 %987
      %vm989 = vcmp.eq.s32.totalorder %v988, 1
      %v990 = vsel %vm989, %v982, 0.0
      %v991 = vpack.c.bf16 %v990, %v990
      %993 = vrot.lane.b32.xlu0 %v991, 64
      %v994 = vpop.permute.xlu0 %993
      %s996 = sadd.s32 %s840, 16
      %s997 = smul.addr %s996, 4
      %s998 = scalar_lea.vmem [#allocation3], %s997
      %999 = vst.msk [vmem:[%s998] sm:$0xf] %vm822, %v994
      %1001 = vrot.lane.b32.xlu0 %v842, 64
      %v1002 = vpop.permute.xlu0 %1001
      %v1004 = vsel %vm989, %v982, %v1002
      %1006 = vrot.lane.b32.xlu0 %v1004, 64
      %v1007 = vpop.permute.xlu0 %1006
      %1009 = vst.msk [vmem:[%s841] sm:$0xff] %vm656, %v1007
      %v1010 = vsel %vm989, %v980, %v972
      %1012 = vrot.lane.b32.xlu0 %v1010, 64
      %v1013 = vpop.permute.xlu0 %1012
      %1015 = vst.msk [vmem:[%s843] sm:$0xff] %vm656, %v1013
      %s1016 = sadd.s32 %s667, 1
      %v1017 = vld [vmem:[#allocation4] sm:$0xff]
      %v1018 = vld [vmem:[#allocation5] sm:$0xff]
      %s1019 = smul.u32 %s1016, 2
      %s1020 = smul.addr %s1019, 8
      %s1021 = scalar_lea.vmem [#allocation2], %s1020
      %v1022 = vld [vmem:[%s1021] sm:$0xff]
      %v1023 = vld [vmem:[%s1021 + $0x8] sm:$0xff]
      %v1024 = vpack.c.bf16 %v1017, %v1017
      %v1025 = vld [vmem:[#allocation12] sm:$0xff]
      %v1026 = vld [vmem:[#allocation12 + $0x8] sm:$0xff]
      %v1027 = vld [vmem:[#allocation12 + $0x10] sm:$0xff]
      %v1028 = vld [vmem:[#allocation12 + $0x18] sm:$0xff]
      %v1029 = vld [vmem:[#allocation12 + $0x20] sm:$0xff]
      %v1030 = vld [vmem:[#allocation12 + $0x28] sm:$0xff]
      %v1031 = vld [vmem:[#allocation12 + $0x30] sm:$0xff]
      %v1032 = vld [vmem:[#allocation12 + $0x38] sm:$0xff]
      %v1041 = vunpack.c.l.b16 %v1025
      %v1042 = vunpack.c.h.b16 %v1025
      %v1043 = vunpack.c.l.b16 %v1026
      %v1044 = vunpack.c.h.b16 %v1026
      %v1045 = vunpack.c.l.b16 %v1027
      %v1046 = vunpack.c.h.b16 %v1027
      %v1047 = vunpack.c.l.b16 %v1028
      %v1048 = vunpack.c.h.b16 %v1028
      %v1049 = vunpack.c.l.b16 %v1029
      %v1050 = vunpack.c.h.b16 %v1029
      %v1051 = vunpack.c.l.b16 %v1030
      %v1052 = vunpack.c.h.b16 %v1030
      %v1053 = vunpack.c.l.b16 %v1031
      %v1054 = vunpack.c.h.b16 %v1031
      %v1055 = vunpack.c.l.b16 %v1032
      %v1056 = vunpack.c.h.b16 %v1032
      %v1057 = vpack.c.b16 %v1043, %v1041
      %v1058 = vpack.c.b16 %v1044, %v1042
      %v1059 = vpack.c.b16 %v1047, %v1045
      %v1060 = vpack.c.b16 %v1048, %v1046
      %v1061 = vpack.c.b16 %v1051, %v1049
      %v1062 = vpack.c.b16 %v1052, %v1050
      %v1063 = vpack.c.b16 %v1055, %v1053
      %v1064 = vpack.c.b16 %v1056, %v1054
      %v1074 = vsel %vm656, %v1024, 0
      %1076 = vmatpush.bf16.msra.mxu0 0
      %1077 = vmatpush.bf16.msra.mxu0 0
      %1078 = vmatpush.bf16.msra.mxu0 0
      %1079 = vmatpush.bf16.msra.mxu0 0
      %1080 = vmatpush.bf16.msra.mxu0 %v1063
      %1081 = vmatpush.bf16.msra.mxu0 %v1061
      %1082 = vmatpush.bf16.msra.mxu0 %v1059
      %1083 = vmatpush.bf16.msra.mxu0 %v1057
      %1084 = vmatmul.bf16.gmra.mxu0 %v1074
      %v1085 = vpop.f32.mrf.mxu0
      %v1086 = vadd.f32 0.0, %v1085
      %v1087 = vpop.f32.mrf.mxu0
      %1088 = vdwg.mxu0
      %1089 = vmatpush.bf16.msra.mxu0 0
      %1090 = vmatpush.bf16.msra.mxu0 0
      %1091 = vmatpush.bf16.msra.mxu0 0
      %1092 = vmatpush.bf16.msra.mxu0 0
      %1093 = vmatpush.bf16.msra.mxu0 %v1064
      %1094 = vmatpush.bf16.msra.mxu0 %v1062
      %1095 = vmatpush.bf16.msra.mxu0 %v1060
      %1096 = vmatpush.bf16.msra.mxu0 %v1058
      %1097 = vmatmul.bf16.gmra.mxu0 %v1074
      %v1098 = vpop.f32.mrf.mxu0
      %v1099 = vadd.f32 0.0, %v1098
      %v1100 = vpop.f32.mrf.mxu0
      %1101 = vdwg.mxu0
      %v1102 = vadd.f32 %v1022, %v1086
      %v1103 = vadd.f32 %v1023, %v1099
      %v1104 = vxor.u32 %v1102, 2147483648
      %v1105 = vmul.f32 %v1104, 1.442695
      %v1106 = vpow.pop %v1105
      %v1107 = vadd.f32 %v1106, 1.0
      %v1108 = vrcp.pop %v1107
      %v1109 = vmul.f32 %v1107, %v1108
      %v1110 = vsub.f32 1.0, %v1109
      %v1111 = vmul.f32 %v1108, %v1110
      %v1112 = vadd.f32 %v1108, %v1111
      %vm1113 = vweird.f32 %v1107
      %vm1114 = vweird.f32 %v1108
      %vm1115 = vmor %vm1113, %vm1114
      %v1116 = vsel %vm1115, %v1108, %v1112
      %v1117 = vand.u32 2147483647, %v1107
      %vm1118 = vcmp.eq.f32.partialorder %v1117, 8.507059e+37
      %v1119 = vand.u32 %v1107, 2147483648
      %v1120 = vor.u32 1.1754944e-38, %v1119
      %v1121 = vsel %vm1118, %v1120, %v1116
      %v1122 = vmul.f32 1.0, %v1121
      %v1123 = vtanh.pop %v1103
      %v1124 = vxor.u32 %v1103, 2147483648
      %v1125 = vmul.f32 %v1124, 1.442695
      %v1126 = vpow.pop %v1125
      %v1127 = vadd.f32 %v1126, 1.0
      %v1128 = vrcp.pop %v1127
      %v1129 = vmul.f32 %v1127, %v1128
      %v1130 = vsub.f32 1.0, %v1129
      %v1131 = vmul.f32 %v1128, %v1130
      %v1132 = vadd.f32 %v1128, %v1131
      %vm1133 = vweird.f32 %v1127
      %vm1134 = vweird.f32 %v1128
      %vm1135 = vmor %vm1133, %vm1134
      %v1136 = vsel %vm1135, %v1128, %v1132
      %v1137 = vand.u32 2147483647, %v1127
      %vm1138 = vcmp.eq.f32.partialorder %v1137, 8.507059e+37
      %v1139 = vand.u32 %v1127, 2147483648
      %v1140 = vor.u32 1.1754944e-38, %v1139
      %v1141 = vsel %vm1138, %v1140, %v1136
      %v1142 = vmul.f32 1.0, %v1141
      %1144 = vrot.lane.b32.xlu0 %v1018, 64
      %v1145 = vpop.permute.xlu0 %1144
      %v1147 = vmul.f32 %v1122, %v1145
      %v1148 = vmul.f32 %v1122, %v1123
      %1150 = vrot.lane.b32.xlu0 %v1148, 64
      %v1151 = vpop.permute.xlu0 %1150
      %v1153 = vadd.f32 %v1147, %v1151
      %v1154 = vtanh.pop %v1153
      %v1155 = vmul.f32 %v1142, %v1154
      %v1156 = vstv %s1016
      %vm1157 = vcmp.gt.s32.totalorder %v189, %v1156
      %v1158 = vsel %vm1157, 1, 0
      %1159 = vset.pattern.permute.xlu0 0
      %1160 = vperm.xlu0 %1159, %v1158
      %v1161 = vpop.permute.xlu0 %1160
      %vm1162 = vcmp.eq.s32.totalorder %v1161, 1
      %v1163 = vsel %vm1162, %v1155, 0.0
      %v1164 = vpack.c.bf16 %v1163, %v1163
      %1166 = vrot.lane.b32.xlu0 %v1164, 64
      %v1167 = vpop.permute.xlu0 %1166
      %s1169 = smul.addr %s1016, 4
      %s1170 = scalar_lea.vmem [#allocation3], %s1169
      %1171 = vst.msk [vmem:[%s1170] sm:$0xf] %vm822, %v1167
      %1173 = vrot.lane.b32.xlu0 %v1017, 64
      %v1174 = vpop.permute.xlu0 %1173
      %v1176 = vsel %vm1162, %v1155, %v1174
      %1178 = vrot.lane.b32.xlu0 %v1176, 64
      %v1179 = vpop.permute.xlu0 %1178
      %1181 = vst.msk [vmem:[#allocation4] sm:$0xff] %vm656, %v1179
      %v1182 = vsel %vm1162, %v1153, %v1145
      %1184 = vrot.lane.b32.xlu0 %v1182, 64
      %v1185 = vpop.permute.xlu0 %1184
      %1187 = vst.msk [vmem:[#allocation5] sm:$0xff] %vm656, %v1185
      %s1188 = ssub.s32 14, %s667
      %v1189 = vld [vmem:[%s841] sm:$0xff]
      %v1190 = vld [vmem:[%s843] sm:$0xff]
      %s1191 = smul.u32 %s1188, 2
      %s1192 = sadd.s32 %s1191, 32
      %s1193 = smul.addr %s1192, 8
      %s1194 = scalar_lea.vmem [#allocation2], %s1193
      %v1195 = vld [vmem:[%s1194] sm:$0xff]
      %v1196 = vld [vmem:[%s1194 + $0x8] sm:$0xff]
      %v1197 = vpack.c.bf16 %v1189, %v1189
      %v1198 = vld [vmem:[#allocation15] sm:$0xff]
      %v1199 = vld [vmem:[#allocation15 + $0x8] sm:$0xff]
      %v1200 = vld [vmem:[#allocation15 + $0x10] sm:$0xff]
      %v1201 = vld [vmem:[#allocation15 + $0x18] sm:$0xff]
      %v1202 = vld [vmem:[#allocation15 + $0x20] sm:$0xff]
      %v1203 = vld [vmem:[#allocation15 + $0x28] sm:$0xff]
      %v1204 = vld [vmem:[#allocation15 + $0x30] sm:$0xff]
      %v1205 = vld [vmem:[#allocation15 + $0x38] sm:$0xff]
      %v1214 = vunpack.c.l.b16 %v1198
      %v1215 = vunpack.c.h.b16 %v1198
      %v1216 = vunpack.c.l.b16 %v1199
      %v1217 = vunpack.c.h.b16 %v1199
      %v1218 = vunpack.c.l.b16 %v1200
      %v1219 = vunpack.c.h.b16 %v1200
      %v1220 = vunpack.c.l.b16 %v1201
      %v1221 = vunpack.c.h.b16 %v1201
      %v1222 = vunpack.c.l.b16 %v1202
      %v1223 = vunpack.c.h.b16 %v1202
      %v1224 = vunpack.c.l.b16 %v1203
      %v1225 = vunpack.c.h.b16 %v1203
      %v1226 = vunpack.c.l.b16 %v1204
      %v1227 = vunpack.c.h.b16 %v1204
      %v1228 = vunpack.c.l.b16 %v1205
      %v1229 = vunpack.c.h.b16 %v1205
      %v1230 = vpack.c.b16 %v1216, %v1214
      %v1231 = vpack.c.b16 %v1217, %v1215
      %v1232 = vpack.c.b16 %v1220, %v1218
      %v1233 = vpack.c.b16 %v1221, %v1219
      %v1234 = vpack.c.b16 %v1224, %v1222
      %v1235 = vpack.c.b16 %v1225, %v1223
      %v1236 = vpack.c.b16 %v1228, %v1226
      %v1237 = vpack.c.b16 %v1229, %v1227
      %v1247 = vsel %vm656, %v1197, 0
      %1249 = vmatpush.bf16.msra.mxu0 0
      %1250 = vmatpush.bf16.msra.mxu0 0
      %1251 = vmatpush.bf16.msra.mxu0 0
      %1252 = vmatpush.bf16.msra.mxu0 0
      %1253 = vmatpush.bf16.msra.mxu0 %v1236
      %1254 = vmatpush.bf16.msra.mxu0 %v1234
      %1255 = vmatpush.bf16.msra.mxu0 %v1232
      %1256 = vmatpush.bf16.msra.mxu0 %v1230
      %1257 = vmatmul.bf16.gmra.mxu0 %v1247
      %v1258 = vpop.f32.mrf.mxu0
      %v1259 = vadd.f32 0.0, %v1258
      %v1260 = vpop.f32.mrf.mxu0
      %1261 = vdwg.mxu0
      %1262 = vmatpush.bf16.msra.mxu0 0
      %1263 = vmatpush.bf16.msra.mxu0 0
      %1264 = vmatpush.bf16.msra.mxu0 0
      %1265 = vmatpush.bf16.msra.mxu0 0
      %1266 = vmatpush.bf16.msra.mxu0 %v1237
      %1267 = vmatpush.bf16.msra.mxu0 %v1235
      %1268 = vmatpush.bf16.msra.mxu0 %v1233
      %1269 = vmatpush.bf16.msra.mxu0 %v1231
      %1270 = vmatmul.bf16.gmra.mxu0 %v1247
      %v1271 = vpop.f32.mrf.mxu0
      %v1272 = vadd.f32 0.0, %v1271
      %v1273 = vpop.f32.mrf.mxu0
      %1274 = vdwg.mxu0
      %v1275 = vadd.f32 %v1195, %v1259
      %v1276 = vadd.f32 %v1196, %v1272
      %v1277 = vxor.u32 %v1275, 2147483648
      %v1278 = vmul.f32 %v1277, 1.442695
      %v1279 = vpow.pop %v1278
      %v1280 = vadd.f32 %v1279, 1.0
      %v1281 = vrcp.pop %v1280
      %v1282 = vmul.f32 %v1280, %v1281
      %v1283 = vsub.f32 1.0, %v1282
      %v1284 = vmul.f32 %v1281, %v1283
      %v1285 = vadd.f32 %v1281, %v1284
      %vm1286 = vweird.f32 %v1280
      %vm1287 = vweird.f32 %v1281
      %vm1288 = vmor %vm1286, %vm1287
      %v1289 = vsel %vm1288, %v1281, %v1285
      %v1290 = vand.u32 2147483647, %v1280
      %vm1291 = vcmp.eq.f32.partialorder %v1290, 8.507059e+37
      %v1292 = vand.u32 %v1280, 2147483648
      %v1293 = vor.u32 1.1754944e-38, %v1292
      %v1294 = vsel %vm1291, %v1293, %v1289
      %v1295 = vmul.f32 1.0, %v1294
      %v1296 = vtanh.pop %v1276
      %v1297 = vxor.u32 %v1276, 2147483648
      %v1298 = vmul.f32 %v1297, 1.442695
      %v1299 = vpow.pop %v1298
      %v1300 = vadd.f32 %v1299, 1.0
      %v1301 = vrcp.pop %v1300
      %v1302 = vmul.f32 %v1300, %v1301
      %v1303 = vsub.f32 1.0, %v1302
      %v1304 = vmul.f32 %v1301, %v1303
      %v1305 = vadd.f32 %v1301, %v1304
      %vm1306 = vweird.f32 %v1300
      %vm1307 = vweird.f32 %v1301
      %vm1308 = vmor %vm1306, %vm1307
      %v1309 = vsel %vm1308, %v1301, %v1305
      %v1310 = vand.u32 2147483647, %v1300
      %vm1311 = vcmp.eq.f32.partialorder %v1310, 8.507059e+37
      %v1312 = vand.u32 %v1300, 2147483648
      %v1313 = vor.u32 1.1754944e-38, %v1312
      %v1314 = vsel %vm1311, %v1313, %v1309
      %v1315 = vmul.f32 1.0, %v1314
      %1317 = vrot.lane.b32.xlu0 %v1190, 64
      %v1318 = vpop.permute.xlu0 %1317
      %v1320 = vmul.f32 %v1295, %v1318
      %v1321 = vmul.f32 %v1295, %v1296
      %1323 = vrot.lane.b32.xlu0 %v1321, 64
      %v1324 = vpop.permute.xlu0 %1323
      %v1326 = vadd.f32 %v1320, %v1324
      %v1327 = vtanh.pop %v1326
      %v1328 = vmul.f32 %v1315, %v1327
      %v1329 = vstv %s1188
      %vm1330 = vcmp.gt.s32.totalorder %v189, %v1329
      %v1331 = vsel %vm1330, 1, 0
      %1332 = vset.pattern.permute.xlu0 0
      %1333 = vperm.xlu0 %1332, %v1331
      %v1334 = vpop.permute.xlu0 %1333
      %vm1335 = vcmp.eq.s32.totalorder %v1334, 1
      %v1336 = vsel %vm1335, %v1328, 0.0
      %v1337 = vpack.c.bf16 %v1336, %v1336
      %1339 = vrot.lane.b32.xlu0 %v1337, 64
      %v1340 = vpop.permute.xlu0 %1339
      %s1342 = sadd.s32 %s1188, 16
      %s1343 = smul.addr %s1342, 4
      %s1344 = scalar_lea.vmem [#allocation3], %s1343
      %1345 = vst.msk [vmem:[%s1344] sm:$0xf] %vm822, %v1340
      %1347 = vrot.lane.b32.xlu0 %v1189, 64
      %v1348 = vpop.permute.xlu0 %1347
      %v1350 = vsel %vm1335, %v1328, %v1348
      %1352 = vrot.lane.b32.xlu0 %v1350, 64
      %v1353 = vpop.permute.xlu0 %1352
      %1355 = vst.msk [vmem:[%s841] sm:$0xff] %vm656, %v1353
      %v1356 = vsel %vm1335, %v1326, %v1318
      %1358 = vrot.lane.b32.xlu0 %v1356, 64
      %v1359 = vpop.permute.xlu0 %1358
      %1361 = vst.msk [vmem:[%s843] sm:$0xff] %vm656, %v1359
    $region98: #{tpu_custom_call.1} parent=1 // loop_footer
      %s666 = sadd.s32 1, %s662
    $region99: #{tpu_custom_call.1} parent=1 // loop_footer_branch
      %661 = sbr.rel target = $region95
    $region100: #{tpu_custom_call.1} parent=1 // loop_exit
      _
    %v1362 = vld [vmem:[#allocation3] sm:$0xf]
    %v1363 = vld [vmem:[#allocation3 + $0x4] sm:$0xf]
    %v1364 = vld [vmem:[#allocation3 + $0x8] sm:$0xf]
    %v1365 = vld [vmem:[#allocation3 + $0xc] sm:$0xf]
    %v1366 = vld [vmem:[#allocation3 + $0x10] sm:$0xf]
    %v1367 = vld [vmem:[#allocation3 + $0x14] sm:$0xf]
    %v1368 = vld [vmem:[#allocation3 + $0x18] sm:$0xf]
    %v1369 = vld [vmem:[#allocation3 + $0x1c] sm:$0xf]
    %v1370 = vld [vmem:[#allocation3 + $0x20] sm:$0xf]
    %v1371 = vld [vmem:[#allocation3 + $0x24] sm:$0xf]
    %v1372 = vld [vmem:[#allocation3 + $0x28] sm:$0xf]
    %v1373 = vld [vmem:[#allocation3 + $0x2c] sm:$0xf]
    %v1374 = vld [vmem:[#allocation3 + $0x30] sm:$0xf]
    %v1375 = vld [vmem:[#allocation3 + $0x34] sm:$0xf]
    %v1376 = vld [vmem:[#allocation3 + $0x38] sm:$0xf]
    %v1377 = vld [vmem:[#allocation3 + $0x3c] sm:$0xf]
    %s1378 = scalar_lea.vmem [#allocation3], 64
    %v1379 = vld [vmem:[%s1378] sm:$0xf]
    %v1380 = vld [vmem:[%s1378 + $0x4] sm:$0xf]
    %v1381 = vld [vmem:[%s1378 + $0x8] sm:$0xf]
    %v1382 = vld [vmem:[%s1378 + $0xc] sm:$0xf]
    %v1383 = vld [vmem:[%s1378 + $0x10] sm:$0xf]
    %v1384 = vld [vmem:[%s1378 + $0x14] sm:$0xf]
    %v1385 = vld [vmem:[%s1378 + $0x18] sm:$0xf]
    %v1386 = vld [vmem:[%s1378 + $0x1c] sm:$0xf]
    %v1387 = vld [vmem:[%s1378 + $0x20] sm:$0xf]
    %v1388 = vld [vmem:[%s1378 + $0x24] sm:$0xf]
    %v1389 = vld [vmem:[%s1378 + $0x28] sm:$0xf]
    %v1390 = vld [vmem:[%s1378 + $0x2c] sm:$0xf]
    %v1391 = vld [vmem:[%s1378 + $0x30] sm:$0xf]
    %v1392 = vld [vmem:[%s1378 + $0x34] sm:$0xf]
    %v1393 = vld [vmem:[%s1378 + $0x38] sm:$0xf]
    %v1394 = vld [vmem:[%s1378 + $0x3c] sm:$0xf]
    %v1395 = vld [vmem:[#allocation16] sm:$0xff]
    %v1396 = vld [vmem:[#allocation16 + $0x8] sm:$0xff]
    %v1397 = vld [vmem:[#allocation16 + $0x10] sm:$0xff]
    %v1398 = vld [vmem:[#allocation16 + $0x18] sm:$0xff]
    %v1399 = vld [vmem:[#allocation16 + $0x20] sm:$0xff]
    %v1400 = vld [vmem:[#allocation16 + $0x28] sm:$0xff]
    %v1401 = vld [vmem:[#allocation16 + $0x30] sm:$0xff]
    %v1402 = vld [vmem:[#allocation16 + $0x38] sm:$0xff]
    %s1403 = scalar_lea.vmem [#allocation16], 64
    %v1404 = vld [vmem:[%s1403] sm:$0xff]
    %v1405 = vld [vmem:[%s1403 + $0x8] sm:$0xff]
    %v1406 = vld [vmem:[%s1403 + $0x10] sm:$0xff]
    %v1407 = vld [vmem:[%s1403 + $0x18] sm:$0xff]
    %v1408 = vld [vmem:[%s1403 + $0x20] sm:$0xff]
    %v1409 = vld [vmem:[%s1403 + $0x28] sm:$0xff]
    %v1410 = vld [vmem:[%s1403 + $0x30] sm:$0xff]
    %v1411 = vld [vmem:[%s1403 + $0x38] sm:$0xff]
    %v1428 = vunpack.c.l.b16 %v1379
    %v1429 = vunpack.c.l.b16 %v1380
    %v1430 = vunpack.c.l.b16 %v1381
    %v1431 = vunpack.c.l.b16 %v1382
    %v1432 = vunpack.c.l.b16 %v1383
    %v1433 = vunpack.c.l.b16 %v1384
    %v1434 = vunpack.c.l.b16 %v1385
    %v1435 = vunpack.c.l.b16 %v1386
    %v1436 = vunpack.c.l.b16 %v1387
    %v1437 = vunpack.c.l.b16 %v1388
    %v1438 = vunpack.c.l.b16 %v1389
    %v1439 = vunpack.c.l.b16 %v1390
    %v1440 = vunpack.c.l.b16 %v1391
    %v1441 = vunpack.c.l.b16 %v1392
    %v1442 = vunpack.c.l.b16 %v1393
    %v1443 = vunpack.c.l.b16 %v1394
    %v1444 = vpack.c.b16 %v1429, %v1428
    %v1445 = vpack.c.b16 %v1431, %v1430
    %v1446 = vpack.c.b16 %v1433, %v1432
    %v1447 = vpack.c.b16 %v1435, %v1434
    %v1448 = vpack.c.b16 %v1437, %v1436
    %v1449 = vpack.c.b16 %v1439, %v1438
    %v1450 = vpack.c.b16 %v1441, %v1440
    %v1451 = vpack.c.b16 %v1443, %v1442
    %v1460 = vunpack.c.l.b16 %v1404
    %v1461 = vunpack.c.h.b16 %v1404
    %v1462 = vunpack.c.l.b16 %v1405
    %v1463 = vunpack.c.h.b16 %v1405
    %v1464 = vunpack.c.l.b16 %v1406
    %v1465 = vunpack.c.h.b16 %v1406
    %v1466 = vunpack.c.l.b16 %v1407
    %v1467 = vunpack.c.h.b16 %v1407
    %v1468 = vunpack.c.l.b16 %v1408
    %v1469 = vunpack.c.h.b16 %v1408
    %v1470 = vunpack.c.l.b16 %v1409
    %v1471 = vunpack.c.h.b16 %v1409
    %v1472 = vunpack.c.l.b16 %v1410
    %v1473 = vunpack.c.h.b16 %v1410
    %v1474 = vunpack.c.l.b16 %v1411
    %v1475 = vunpack.c.h.b16 %v1411
    %v1476 = vpack.c.b16 %v1462, %v1460
    %v1477 = vpack.c.b16 %v1463, %v1461
    %v1478 = vpack.c.b16 %v1466, %v1464
    %v1479 = vpack.c.b16 %v1467, %v1465
    %v1480 = vpack.c.b16 %v1470, %v1468
    %v1481 = vpack.c.b16 %v1471, %v1469
    %v1482 = vpack.c.b16 %v1474, %v1472
    %v1483 = vpack.c.b16 %v1475, %v1473
    %v1493 = vsel %vm656, %v1444, 0
    %v1496 = vsel %vm656, %v1445, 0
    %v1499 = vsel %vm656, %v1446, 0
    %v1502 = vsel %vm656, %v1447, 0
    %v1505 = vsel %vm656, %v1448, 0
    %v1508 = vsel %vm656, %v1449, 0
    %v1511 = vsel %vm656, %v1450, 0
    %v1514 = vsel %vm656, %v1451, 0
    %1516 = vmatpush.bf16.msra.mxu0 0
    %1517 = vmatpush.bf16.msra.mxu0 0
    %1518 = vmatpush.bf16.msra.mxu0 0
    %1519 = vmatpush.bf16.msra.mxu0 0
    %1520 = vmatpush.bf16.msra.mxu0 %v1482
    %1521 = vmatpush.bf16.msra.mxu0 %v1480
    %1522 = vmatpush.bf16.msra.mxu0 %v1478
    %1523 = vmatpush.bf16.msra.mxu0 %v1476
    %1524 = vmatmul.bf16.gmra.mxu0 %v1493
    %v1525 = vpop.f32.mrf.mxu0
    %v1526 = vadd.f32 0.0, %v1525
    %v1527 = vpop.f32.mrf.mxu0
    %v1528 = vadd.f32 0.0, %v1527
    %1529 = vmatmul.bf16.gmra.mxu0 %v1496
    %v1530 = vpop.f32.mrf.mxu0
    %v1531 = vadd.f32 0.0, %v1530
    %v1532 = vpop.f32.mrf.mxu0
    %v1533 = vadd.f32 0.0, %v1532
    %1534 = vmatmul.bf16.gmra.mxu0 %v1499
    %v1535 = vpop.f32.mrf.mxu0
    %v1536 = vadd.f32 0.0, %v1535
    %v1537 = vpop.f32.mrf.mxu0
    %v1538 = vadd.f32 0.0, %v1537
    %1539 = vmatmul.bf16.gmra.mxu0 %v1502
    %v1540 = vpop.f32.mrf.mxu0
    %v1541 = vadd.f32 0.0, %v1540
    %v1542 = vpop.f32.mrf.mxu0
    %v1543 = vadd.f32 0.0, %v1542
    %1544 = vmatmul.bf16.gmra.mxu0 %v1505
    %v1545 = vpop.f32.mrf.mxu0
    %v1546 = vadd.f32 0.0, %v1545
    %v1547 = vpop.f32.mrf.mxu0
    %v1548 = vadd.f32 0.0, %v1547
    %1549 = vmatmul.bf16.gmra.mxu0 %v1508
    %v1550 = vpop.f32.mrf.mxu0
    %v1551 = vadd.f32 0.0, %v1550
    %v1552 = vpop.f32.mrf.mxu0
    %v1553 = vadd.f32 0.0, %v1552
    %1554 = vmatmul.bf16.gmra.mxu0 %v1511
    %v1555 = vpop.f32.mrf.mxu0
    %v1556 = vadd.f32 0.0, %v1555
    %v1557 = vpop.f32.mrf.mxu0
    %v1558 = vadd.f32 0.0, %v1557
    %1559 = vmatmul.bf16.gmra.mxu0 %v1514
    %v1560 = vpop.f32.mrf.mxu0
    %v1561 = vadd.f32 0.0, %v1560
    %v1562 = vpop.f32.mrf.mxu0
    %v1563 = vadd.f32 0.0, %v1562
    %1564 = vdwg.mxu0
    %1565 = vmatpush.bf16.msra.mxu0 0
    %1566 = vmatpush.bf16.msra.mxu0 0
    %1567 = vmatpush.bf16.msra.mxu0 0
    %1568 = vmatpush.bf16.msra.mxu0 0
    %1569 = vmatpush.bf16.msra.mxu0 %v1483
    %1570 = vmatpush.bf16.msra.mxu0 %v1481
    %1571 = vmatpush.bf16.msra.mxu0 %v1479
    %1572 = vmatpush.bf16.msra.mxu0 %v1477
    %1573 = vmatmul.bf16.gmra.mxu0 %v1493
    %v1574 = vpop.f32.mrf.mxu0
    %v1575 = vadd.f32 0.0, %v1574
    %v1576 = vpop.f32.mrf.mxu0
    %v1577 = vadd.f32 0.0, %v1576
    %1578 = vmatmul.bf16.gmra.mxu0 %v1496
    %v1579 = vpop.f32.mrf.mxu0
    %v1580 = vadd.f32 0.0, %v1579
    %v1581 = vpop.f32.mrf.mxu0
    %v1582 = vadd.f32 0.0, %v1581
    %1583 = vmatmul.bf16.gmra.mxu0 %v1499
    %v1584 = vpop.f32.mrf.mxu0
    %v1585 = vadd.f32 0.0, %v1584
    %v1586 = vpop.f32.mrf.mxu0
    %v1587 = vadd.f32 0.0, %v1586
    %1588 = vmatmul.bf16.gmra.mxu0 %v1502
    %v1589 = vpop.f32.mrf.mxu0
    %v1590 = vadd.f32 0.0, %v1589
    %v1591 = vpop.f32.mrf.mxu0
    %v1592 = vadd.f32 0.0, %v1591
    %1593 = vmatmul.bf16.gmra.mxu0 %v1505
    %v1594 = vpop.f32.mrf.mxu0
    %v1595 = vadd.f32 0.0, %v1594
    %v1596 = vpop.f32.mrf.mxu0
    %v1597 = vadd.f32 0.0, %v1596
    %1598 = vmatmul.bf16.gmra.mxu0 %v1508
    %v1599 = vpop.f32.mrf.mxu0
    %v1600 = vadd.f32 0.0, %v1599
    %v1601 = vpop.f32.mrf.mxu0
    %v1602 = vadd.f32 0.0, %v1601
    %1603 = vmatmul.bf16.gmra.mxu0 %v1511
    %v1604 = vpop.f32.mrf.mxu0
    %v1605 = vadd.f32 0.0, %v1604
    %v1606 = vpop.f32.mrf.mxu0
    %v1607 = vadd.f32 0.0, %v1606
    %1608 = vmatmul.bf16.gmra.mxu0 %v1514
    %v1609 = vpop.f32.mrf.mxu0
    %v1610 = vadd.f32 0.0, %v1609
    %v1611 = vpop.f32.mrf.mxu0
    %v1612 = vadd.f32 0.0, %v1611
    %1613 = vdwg.mxu0
    %v1630 = vunpack.c.l.b16 %v1362
    %v1631 = vunpack.c.l.b16 %v1363
    %v1632 = vunpack.c.l.b16 %v1364
    %v1633 = vunpack.c.l.b16 %v1365
    %v1634 = vunpack.c.l.b16 %v1366
    %v1635 = vunpack.c.l.b16 %v1367
    %v1636 = vunpack.c.l.b16 %v1368
    %v1637 = vunpack.c.l.b16 %v1369
    %v1638 = vunpack.c.l.b16 %v1370
    %v1639 = vunpack.c.l.b16 %v1371
    %v1640 = vunpack.c.l.b16 %v1372
    %v1641 = vunpack.c.l.b16 %v1373
    %v1642 = vunpack.c.l.b16 %v1374
    %v1643 = vunpack.c.l.b16 %v1375
    %v1644 = vunpack.c.l.b16 %v1376
    %v1645 = vunpack.c.l.b16 %v1377
    %v1646 = vpack.c.b16 %v1631, %v1630
    %v1647 = vpack.c.b16 %v1633, %v1632
    %v1648 = vpack.c.b16 %v1635, %v1634
    %v1649 = vpack.c.b16 %v1637, %v1636
    %v1650 = vpack.c.b16 %v1639, %v1638
    %v1651 = vpack.c.b16 %v1641, %v1640
    %v1652 = vpack.c.b16 %v1643, %v1642
    %v1653 = vpack.c.b16 %v1645, %v1644
    %v1662 = vunpack.c.l.b16 %v1395
    %v1663 = vunpack.c.h.b16 %v1395
    %v1664 = vunpack.c.l.b16 %v1396
    %v1665 = vunpack.c.h.b16 %v1396
    %v1666 = vunpack.c.l.b16 %v1397
    %v1667 = vunpack.c.h.b16 %v1397
    %v1668 = vunpack.c.l.b16 %v1398
    %v1669 = vunpack.c.h.b16 %v1398
    %v1670 = vunpack.c.l.b16 %v1399
    %v1671 = vunpack.c.h.b16 %v1399
    %v1672 = vunpack.c.l.b16 %v1400
    %v1673 = vunpack.c.h.b16 %v1400
    %v1674 = vunpack.c.l.b16 %v1401
    %v1675 = vunpack.c.h.b16 %v1401
    %v1676 = vunpack.c.l.b16 %v1402
    %v1677 = vunpack.c.h.b16 %v1402
    %v1678 = vpack.c.b16 %v1664, %v1662
    %v1679 = vpack.c.b16 %v1665, %v1663
    %v1680 = vpack.c.b16 %v1668, %v1666
    %v1681 = vpack.c.b16 %v1669, %v1667
    %v1682 = vpack.c.b16 %v1672, %v1670
    %v1683 = vpack.c.b16 %v1673, %v1671
    %v1684 = vpack.c.b16 %v1676, %v1674
    %v1685 = vpack.c.b16 %v1677, %v1675
    %v1695 = vsel %vm656, %v1646, 0
    %v1698 = vsel %vm656, %v1647, 0
    %v1701 = vsel %vm656, %v1648, 0
    %v1704 = vsel %vm656, %v1649, 0
    %v1707 = vsel %vm656, %v1650, 0
    %v1710 = vsel %vm656, %v1651, 0
    %v1713 = vsel %vm656, %v1652, 0
    %v1716 = vsel %vm656, %v1653, 0
    %1718 = vmatpush.bf16.msra.mxu0 0
    %1719 = vmatpush.bf16.msra.mxu0 0
    %1720 = vmatpush.bf16.msra.mxu0 0
    %1721 = vmatpush.bf16.msra.mxu0 0
    %1722 = vmatpush.bf16.msra.mxu0 %v1684
    %1723 = vmatpush.bf16.msra.mxu0 %v1682
    %1724 = vmatpush.bf16.msra.mxu0 %v1680
    %1725 = vmatpush.bf16.msra.mxu0 %v1678
    %1726 = vmatmul.bf16.gmra.mxu0 %v1695
    %v1727 = vpop.f32.mrf.mxu0
    %v1728 = vadd.f32 %v1526, %v1727
    %v1729 = vpop.f32.mrf.mxu0
    %v1730 = vadd.f32 %v1528, %v1729
    %1731 = vmatmul.bf16.gmra.mxu0 %v1698
    %v1732 = vpop.f32.mrf.mxu0
    %v1733 = vadd.f32 %v1531, %v1732
    %v1734 = vpop.f32.mrf.mxu0
    %v1735 = vadd.f32 %v1533, %v1734
    %1736 = vmatmul.bf16.gmra.mxu0 %v1701
    %v1737 = vpop.f32.mrf.mxu0
    %v1738 = vadd.f32 %v1536, %v1737
    %v1739 = vpop.f32.mrf.mxu0
    %v1740 = vadd.f32 %v1538, %v1739
    %1741 = vmatmul.bf16.gmra.mxu0 %v1704
    %v1742 = vpop.f32.mrf.mxu0
    %v1743 = vadd.f32 %v1541, %v1742
    %v1744 = vpop.f32.mrf.mxu0
    %v1745 = vadd.f32 %v1543, %v1744
    %1746 = vmatmul.bf16.gmra.mxu0 %v1707
    %v1747 = vpop.f32.mrf.mxu0
    %v1748 = vadd.f32 %v1546, %v1747
    %v1749 = vpop.f32.mrf.mxu0
    %v1750 = vadd.f32 %v1548, %v1749
    %1751 = vmatmul.bf16.gmra.mxu0 %v1710
    %v1752 = vpop.f32.mrf.mxu0
    %v1753 = vadd.f32 %v1551, %v1752
    %v1754 = vpop.f32.mrf.mxu0
    %v1755 = vadd.f32 %v1553, %v1754
    %1756 = vmatmul.bf16.gmra.mxu0 %v1713
    %v1757 = vpop.f32.mrf.mxu0
    %v1758 = vadd.f32 %v1556, %v1757
    %v1759 = vpop.f32.mrf.mxu0
    %v1760 = vadd.f32 %v1558, %v1759
    %1761 = vmatmul.bf16.gmra.mxu0 %v1716
    %v1762 = vpop.f32.mrf.mxu0
    %v1763 = vadd.f32 %v1561, %v1762
    %v1764 = vpop.f32.mrf.mxu0
    %v1765 = vadd.f32 %v1563, %v1764
    %1766 = vdwg.mxu0
    %1767 = vmatpush.bf16.msra.mxu0 0
    %1768 = vmatpush.bf16.msra.mxu0 0
    %1769 = vmatpush.bf16.msra.mxu0 0
    %1770 = vmatpush.bf16.msra.mxu0 0
    %1771 = vmatpush.bf16.msra.mxu0 %v1685
    %1772 = vmatpush.bf16.msra.mxu0 %v1683
    %1773 = vmatpush.bf16.msra.mxu0 %v1681
    %1774 = vmatpush.bf16.msra.mxu0 %v1679
    %1775 = vmatmul.bf16.gmra.mxu0 %v1695
    %v1776 = vpop.f32.mrf.mxu0
    %v1777 = vadd.f32 %v1575, %v1776
    %v1778 = vpop.f32.mrf.mxu0
    %v1779 = vadd.f32 %v1577, %v1778
    %1780 = vmatmul.bf16.gmra.mxu0 %v1698
    %v1781 = vpop.f32.mrf.mxu0
    %v1782 = vadd.f32 %v1580, %v1781
    %v1783 = vpop.f32.mrf.mxu0
    %v1784 = vadd.f32 %v1582, %v1783
    %1785 = vmatmul.bf16.gmra.mxu0 %v1701
    %v1786 = vpop.f32.mrf.mxu0
    %v1787 = vadd.f32 %v1585, %v1786
    %v1788 = vpop.f32.mrf.mxu0
    %v1789 = vadd.f32 %v1587, %v1788
    %1790 = vmatmul.bf16.gmra.mxu0 %v1704
    %v1791 = vpop.f32.mrf.mxu0
    %v1792 = vadd.f32 %v1590, %v1791
    %v1793 = vpop.f32.mrf.mxu0
    %v1794 = vadd.f32 %v1592, %v1793
    %1795 = vmatmul.bf16.gmra.mxu0 %v1707
    %v1796 = vpop.f32.mrf.mxu0
    %v1797 = vadd.f32 %v1595, %v1796
    %v1798 = vpop.f32.mrf.mxu0
    %v1799 = vadd.f32 %v1597, %v1798
    %1800 = vmatmul.bf16.gmra.mxu0 %v1710
    %v1801 = vpop.f32.mrf.mxu0
    %v1802 = vadd.f32 %v1600, %v1801
    %v1803 = vpop.f32.mrf.mxu0
    %v1804 = vadd.f32 %v1602, %v1803
    %1805 = vmatmul.bf16.gmra.mxu0 %v1713
    %v1806 = vpop.f32.mrf.mxu0
    %v1807 = vadd.f32 %v1605, %v1806
    %v1808 = vpop.f32.mrf.mxu0
    %v1809 = vadd.f32 %v1607, %v1808
    %1810 = vmatmul.bf16.gmra.mxu0 %v1716
    %v1811 = vpop.f32.mrf.mxu0
    %v1812 = vadd.f32 %v1610, %v1811
    %v1813 = vpop.f32.mrf.mxu0
    %v1814 = vadd.f32 %v1612, %v1813
    %1815 = vdwg.mxu0
    %v1816 = vld [vmem:[%s10] sm:$0x3]
    %v1818 = vperm.slane %v1816, 0
    %v1819 = vperm.slane %v1816, 1
    %v1822 = vadd.f32 %v1728, %v1818
    %v1823 = vadd.f32 %v1777, %v1819
    %v1824 = vadd.f32 %v1730, %v1818
    %v1825 = vadd.f32 %v1779, %v1819
    %v1826 = vadd.f32 %v1733, %v1818
    %v1827 = vadd.f32 %v1782, %v1819
    %v1828 = vadd.f32 %v1735, %v1818
    %v1829 = vadd.f32 %v1784, %v1819
    %v1830 = vadd.f32 %v1738, %v1818
    %v1831 = vadd.f32 %v1787, %v1819
    %v1832 = vadd.f32 %v1740, %v1818
    %v1833 = vadd.f32 %v1789, %v1819
    %v1834 = vadd.f32 %v1743, %v1818
    %v1835 = vadd.f32 %v1792, %v1819
    %v1836 = vadd.f32 %v1745, %v1818
    %v1837 = vadd.f32 %v1794, %v1819
    %v1838 = vadd.f32 %v1748, %v1818
    %v1839 = vadd.f32 %v1797, %v1819
    %v1840 = vadd.f32 %v1750, %v1818
    %v1841 = vadd.f32 %v1799, %v1819
    %v1842 = vadd.f32 %v1753, %v1818
    %v1843 = vadd.f32 %v1802, %v1819
    %v1844 = vadd.f32 %v1755, %v1818
    %v1845 = vadd.f32 %v1804, %v1819
    %v1846 = vadd.f32 %v1758, %v1818
    %v1847 = vadd.f32 %v1807, %v1819
    %v1848 = vadd.f32 %v1760, %v1818
    %v1849 = vadd.f32 %v1809, %v1819
    %v1850 = vadd.f32 %v1763, %v1818
    %v1851 = vadd.f32 %v1812, %v1819
    %v1852 = vadd.f32 %v1765, %v1818
    %v1853 = vadd.f32 %v1814, %v1819
    %1854 = vst [vmem:[#allocation2] sm:$0xff] %v1822
    %1855 = vst [vmem:[#allocation2 + $0x8] sm:$0xff] %v1823
    %1856 = vst [vmem:[#allocation2 + $0x10] sm:$0xff] %v1824
    %1857 = vst [vmem:[#allocation2 + $0x18] sm:$0xff] %v1825
    %1858 = vst [vmem:[#allocation2 + $0x20] sm:$0xff] %v1826
    %1859 = vst [vmem:[#allocation2 + $0x28] sm:$0xff] %v1827
    %1860 = vst [vmem:[#allocation2 + $0x30] sm:$0xff] %v1828
    %1861 = vst [vmem:[#allocation2 + $0x38] sm:$0xff] %v1829
    %1862 = vst [vmem:[#allocation2 + $0x40] sm:$0xff] %v1830
    %1863 = vst [vmem:[#allocation2 + $0x48] sm:$0xff] %v1831
    %1864 = vst [vmem:[#allocation2 + $0x50] sm:$0xff] %v1832
    %1865 = vst [vmem:[#allocation2 + $0x58] sm:$0xff] %v1833
    %1866 = vst [vmem:[#allocation2 + $0x60] sm:$0xff] %v1834
    %1867 = vst [vmem:[#allocation2 + $0x68] sm:$0xff] %v1835
    %1868 = vst [vmem:[#allocation2 + $0x70] sm:$0xff] %v1836
    %1869 = vst [vmem:[#allocation2 + $0x78] sm:$0xff] %v1837
    %1870 = vst [vmem:[#allocation2 + $0x80] sm:$0xff] %v1838
    %1871 = vst [vmem:[#allocation2 + $0x88] sm:$0xff] %v1839
    %1872 = vst [vmem:[#allocation2 + $0x90] sm:$0xff] %v1840
    %1873 = vst [vmem:[#allocation2 + $0x98] sm:$0xff] %v1841
    %1874 = vst [vmem:[#allocation2 + $0xa0] sm:$0xff] %v1842
    %1875 = vst [vmem:[#allocation2 + $0xa8] sm:$0xff] %v1843
    %1876 = vst [vmem:[#allocation2 + $0xb0] sm:$0xff] %v1844
    %1877 = vst [vmem:[#allocation2 + $0xb8] sm:$0xff] %v1845
    %1878 = vst [vmem:[#allocation2 + $0xc0] sm:$0xff] %v1846
    %1879 = vst [vmem:[#allocation2 + $0xc8] sm:$0xff] %v1847
    %1880 = vst [vmem:[#allocation2 + $0xd0] sm:$0xff] %v1848
    %1881 = vst [vmem:[#allocation2 + $0xd8] sm:$0xff] %v1849
    %1882 = vst [vmem:[#allocation2 + $0xe0] sm:$0xff] %v1850
    %1883 = vst [vmem:[#allocation2 + $0xe8] sm:$0xff] %v1851
    %1884 = vst [vmem:[#allocation2 + $0xf0] sm:$0xff] %v1852
    %1885 = vst [vmem:[#allocation2 + $0xf8] sm:$0xff] %v1853
    %v1886 = vld [vmem:[#allocation19] sm:$0xff]
    %v1887 = vld [vmem:[#allocation19 + $0x8] sm:$0xff]
    %v1888 = vld [vmem:[#allocation19 + $0x10] sm:$0xff]
    %v1889 = vld [vmem:[#allocation19 + $0x18] sm:$0xff]
    %v1890 = vld [vmem:[#allocation19 + $0x20] sm:$0xff]
    %v1891 = vld [vmem:[#allocation19 + $0x28] sm:$0xff]
    %v1892 = vld [vmem:[#allocation19 + $0x30] sm:$0xff]
    %v1893 = vld [vmem:[#allocation19 + $0x38] sm:$0xff]
    %s1894 = scalar_lea.vmem [#allocation19], 64
    %v1895 = vld [vmem:[%s1894] sm:$0xff]
    %v1896 = vld [vmem:[%s1894 + $0x8] sm:$0xff]
    %v1897 = vld [vmem:[%s1894 + $0x10] sm:$0xff]
    %v1898 = vld [vmem:[%s1894 + $0x18] sm:$0xff]
    %v1899 = vld [vmem:[%s1894 + $0x20] sm:$0xff]
    %v1900 = vld [vmem:[%s1894 + $0x28] sm:$0xff]
    %v1901 = vld [vmem:[%s1894 + $0x30] sm:$0xff]
    %v1902 = vld [vmem:[%s1894 + $0x38] sm:$0xff]
    %v1911 = vunpack.c.l.b16 %v1895
    %v1912 = vunpack.c.h.b16 %v1895
    %v1913 = vunpack.c.l.b16 %v1896
    %v1914 = vunpack.c.h.b16 %v1896
    %v1915 = vunpack.c.l.b16 %v1897
    %v1916 = vunpack.c.h.b16 %v1897
    %v1917 = vunpack.c.l.b16 %v1898
    %v1918 = vunpack.c.h.b16 %v1898
    %v1919 = vunpack.c.l.b16 %v1899
    %v1920 = vunpack.c.h.b16 %v1899
    %v1921 = vunpack.c.l.b16 %v1900
    %v1922 = vunpack.c.h.b16 %v1900
    %v1923 = vunpack.c.l.b16 %v1901
    %v1924 = vunpack.c.h.b16 %v1901
    %v1925 = vunpack.c.l.b16 %v1902
    %v1926 = vunpack.c.h.b16 %v1902
    %v1927 = vpack.c.b16 %v1913, %v1911
    %v1928 = vpack.c.b16 %v1914, %v1912
    %v1929 = vpack.c.b16 %v1917, %v1915
    %v1930 = vpack.c.b16 %v1918, %v1916
    %v1931 = vpack.c.b16 %v1921, %v1919
    %v1932 = vpack.c.b16 %v1922, %v1920
    %v1933 = vpack.c.b16 %v1925, %v1923
    %v1934 = vpack.c.b16 %v1926, %v1924
    %1943 = vmatpush.bf16.msra.mxu0 0
    %1944 = vmatpush.bf16.msra.mxu0 0
    %1945 = vmatpush.bf16.msra.mxu0 0
    %1946 = vmatpush.bf16.msra.mxu0 0
    %1947 = vmatpush.bf16.msra.mxu0 %v1933
    %1948 = vmatpush.bf16.msra.mxu0 %v1931
    %1949 = vmatpush.bf16.msra.mxu0 %v1929
    %1950 = vmatpush.bf16.msra.mxu0 %v1927
    %1951 = vmatmul.bf16.gmra.mxu0 %v1493
    %v1952 = vpop.f32.mrf.mxu0
    %v1953 = vadd.f32 0.0, %v1952
    %v1954 = vpop.f32.mrf.mxu0
    %v1955 = vadd.f32 0.0, %v1954
    %1956 = vmatmul.bf16.gmra.mxu0 %v1496
    %v1957 = vpop.f32.mrf.mxu0
    %v1958 = vadd.f32 0.0, %v1957
    %v1959 = vpop.f32.mrf.mxu0
    %v1960 = vadd.f32 0.0, %v1959
    %1961 = vmatmul.bf16.gmra.mxu0 %v1499
    %v1962 = vpop.f32.mrf.mxu0
    %v1963 = vadd.f32 0.0, %v1962
    %v1964 = vpop.f32.mrf.mxu0
    %v1965 = vadd.f32 0.0, %v1964
    %1966 = vmatmul.bf16.gmra.mxu0 %v1502
    %v1967 = vpop.f32.mrf.mxu0
    %v1968 = vadd.f32 0.0, %v1967
    %v1969 = vpop.f32.mrf.mxu0
    %v1970 = vadd.f32 0.0, %v1969
    %1971 = vmatmul.bf16.gmra.mxu0 %v1505
    %v1972 = vpop.f32.mrf.mxu0
    %v1973 = vadd.f32 0.0, %v1972
    %v1974 = vpop.f32.mrf.mxu0
    %v1975 = vadd.f32 0.0, %v1974
    %1976 = vmatmul.bf16.gmra.mxu0 %v1508
    %v1977 = vpop.f32.mrf.mxu0
    %v1978 = vadd.f32 0.0, %v1977
    %v1979 = vpop.f32.mrf.mxu0
    %v1980 = vadd.f32 0.0, %v1979
    %1981 = vmatmul.bf16.gmra.mxu0 %v1511
    %v1982 = vpop.f32.mrf.mxu0
    %v1983 = vadd.f32 0.0, %v1982
    %v1984 = vpop.f32.mrf.mxu0
    %v1985 = vadd.f32 0.0, %v1984
    %1986 = vmatmul.bf16.gmra.mxu0 %v1514
    %v1987 = vpop.f32.mrf.mxu0
    %v1988 = vadd.f32 0.0, %v1987
    %v1989 = vpop.f32.mrf.mxu0
    %v1990 = vadd.f32 0.0, %v1989
    %1991 = vdwg.mxu0
    %1992 = vmatpush.bf16.msra.mxu0 0
    %1993 = vmatpush.bf16.msra.mxu0 0
    %1994 = vmatpush.bf16.msra.mxu0 0
    %1995 = vmatpush.bf16.msra.mxu0 0
    %1996 = vmatpush.bf16.msra.mxu0 %v1934
    %1997 = vmatpush.bf16.msra.mxu0 %v1932
    %1998 = vmatpush.bf16.msra.mxu0 %v1930
    %1999 = vmatpush.bf16.msra.mxu0 %v1928
    %2000 = vmatmul.bf16.gmra.mxu0 %v1493
    %v2001 = vpop.f32.mrf.mxu0
    %v2002 = vadd.f32 0.0, %v2001
    %v2003 = vpop.f32.mrf.mxu0
    %v2004 = vadd.f32 0.0, %v2003
    %2005 = vmatmul.bf16.gmra.mxu0 %v1496
    %v2006 = vpop.f32.mrf.mxu0
    %v2007 = vadd.f32 0.0, %v2006
    %v2008 = vpop.f32.mrf.mxu0
    %v2009 = vadd.f32 0.0, %v2008
    %2010 = vmatmul.bf16.gmra.mxu0 %v1499
    %v2011 = vpop.f32.mrf.mxu0
    %v2012 = vadd.f32 0.0, %v2011
    %v2013 = vpop.f32.mrf.mxu0
    %v2014 = vadd.f32 0.0, %v2013
    %2015 = vmatmul.bf16.gmra.mxu0 %v1502
    %v2016 = vpop.f32.mrf.mxu0
    %v2017 = vadd.f32 0.0, %v2016
    %v2018 = vpop.f32.mrf.mxu0
    %v2019 = vadd.f32 0.0, %v2018
    %2020 = vmatmul.bf16.gmra.mxu0 %v1505
    %v2021 = vpop.f32.mrf.mxu0
    %v2022 = vadd.f32 0.0, %v2021
    %v2023 = vpop.f32.mrf.mxu0
    %v2024 = vadd.f32 0.0, %v2023
    %2025 = vmatmul.bf16.gmra.mxu0 %v1508
    %v2026 = vpop.f32.mrf.mxu0
    %v2027 = vadd.f32 0.0, %v2026
    %v2028 = vpop.f32.mrf.mxu0
    %v2029 = vadd.f32 0.0, %v2028
    %2030 = vmatmul.bf16.gmra.mxu0 %v1511
    %v2031 = vpop.f32.mrf.mxu0
    %v2032 = vadd.f32 0.0, %v2031
    %v2033 = vpop.f32.mrf.mxu0
    %v2034 = vadd.f32 0.0, %v2033
    %2035 = vmatmul.bf16.gmra.mxu0 %v1514
    %v2036 = vpop.f32.mrf.mxu0
    %v2037 = vadd.f32 0.0, %v2036
    %v2038 = vpop.f32.mrf.mxu0
    %v2039 = vadd.f32 0.0, %v2038
    %2040 = vdwg.mxu0
    %v2049 = vunpack.c.l.b16 %v1886
    %v2050 = vunpack.c.h.b16 %v1886
    %v2051 = vunpack.c.l.b16 %v1887
    %v2052 = vunpack.c.h.b16 %v1887
    %v2053 = vunpack.c.l.b16 %v1888
    %v2054 = vunpack.c.h.b16 %v1888
    %v2055 = vunpack.c.l.b16 %v1889
    %v2056 = vunpack.c.h.b16 %v1889
    %v2057 = vunpack.c.l.b16 %v1890
    %v2058 = vunpack.c.h.b16 %v1890
    %v2059 = vunpack.c.l.b16 %v1891
    %v2060 = vunpack.c.h.b16 %v1891
    %v2061 = vunpack.c.l.b16 %v1892
    %v2062 = vunpack.c.h.b16 %v1892
    %v2063 = vunpack.c.l.b16 %v1893
    %v2064 = vunpack.c.h.b16 %v1893
    %v2065 = vpack.c.b16 %v2051, %v2049
    %v2066 = vpack.c.b16 %v2052, %v2050
    %v2067 = vpack.c.b16 %v2055, %v2053
    %v2068 = vpack.c.b16 %v2056, %v2054
    %v2069 = vpack.c.b16 %v2059, %v2057
    %v2070 = vpack.c.b16 %v2060, %v2058
    %v2071 = vpack.c.b16 %v2063, %v2061
    %v2072 = vpack.c.b16 %v2064, %v2062
    %2081 = vmatpush.bf16.msra.mxu0 0
    %2082 = vmatpush.bf16.msra.mxu0 0
    %2083 = vmatpush.bf16.msra.mxu0 0
    %2084 = vmatpush.bf16.msra.mxu0 0
    %2085 = vmatpush.bf16.msra.mxu0 %v2071
    %2086 = vmatpush.bf16.msra.mxu0 %v2069
    %2087 = vmatpush.bf16.msra.mxu0 %v2067
    %2088 = vmatpush.bf16.msra.mxu0 %v2065
    %2089 = vmatmul.bf16.gmra.mxu0 %v1695
    %v2090 = vpop.f32.mrf.mxu0
    %v2091 = vadd.f32 %v1953, %v2090
    %v2092 = vpop.f32.mrf.mxu0
    %v2093 = vadd.f32 %v1955, %v2092
    %2094 = vmatmul.bf16.gmra.mxu0 %v1698
    %v2095 = vpop.f32.mrf.mxu0
    %v2096 = vadd.f32 %v1958, %v2095
    %v2097 = vpop.f32.mrf.mxu0
    %v2098 = vadd.f32 %v1960, %v2097
    %2099 = vmatmul.bf16.gmra.mxu0 %v1701
    %v2100 = vpop.f32.mrf.mxu0
    %v2101 = vadd.f32 %v1963, %v2100
    %v2102 = vpop.f32.mrf.mxu0
    %v2103 = vadd.f32 %v1965, %v2102
    %2104 = vmatmul.bf16.gmra.mxu0 %v1704
    %v2105 = vpop.f32.mrf.mxu0
    %v2106 = vadd.f32 %v1968, %v2105
    %v2107 = vpop.f32.mrf.mxu0
    %v2108 = vadd.f32 %v1970, %v2107
    %2109 = vmatmul.bf16.gmra.mxu0 %v1707
    %v2110 = vpop.f32.mrf.mxu0
    %v2111 = vadd.f32 %v1973, %v2110
    %v2112 = vpop.f32.mrf.mxu0
    %v2113 = vadd.f32 %v1975, %v2112
    %2114 = vmatmul.bf16.gmra.mxu0 %v1710
    %v2115 = vpop.f32.mrf.mxu0
    %v2116 = vadd.f32 %v1978, %v2115
    %v2117 = vpop.f32.mrf.mxu0
    %v2118 = vadd.f32 %v1980, %v2117
    %2119 = vmatmul.bf16.gmra.mxu0 %v1713
    %v2120 = vpop.f32.mrf.mxu0
    %v2121 = vadd.f32 %v1983, %v2120
    %v2122 = vpop.f32.mrf.mxu0
    %v2123 = vadd.f32 %v1985, %v2122
    %2124 = vmatmul.bf16.gmra.mxu0 %v1716
    %v2125 = vpop.f32.mrf.mxu0
    %v2126 = vadd.f32 %v1988, %v2125
    %v2127 = vpop.f32.mrf.mxu0
    %v2128 = vadd.f32 %v1990, %v2127
    %2129 = vdwg.mxu0
    %2130 = vmatpush.bf16.msra.mxu0 0
    %2131 = vmatpush.bf16.msra.mxu0 0
    %2132 = vmatpush.bf16.msra.mxu0 0
    %2133 = vmatpush.bf16.msra.mxu0 0
    %2134 = vmatpush.bf16.msra.mxu0 %v2072
    %2135 = vmatpush.bf16.msra.mxu0 %v2070
    %2136 = vmatpush.bf16.msra.mxu0 %v2068
    %2137 = vmatpush.bf16.msra.mxu0 %v2066
    %2138 = vmatmul.bf16.gmra.mxu0 %v1695
    %v2139 = vpop.f32.mrf.mxu0
    %v2140 = vadd.f32 %v2002, %v2139
    %v2141 = vpop.f32.mrf.mxu0
    %v2142 = vadd.f32 %v2004, %v2141
    %2143 = vmatmul.bf16.gmra.mxu0 %v1698
    %v2144 = vpop.f32.mrf.mxu0
    %v2145 = vadd.f32 %v2007, %v2144
    %v2146 = vpop.f32.mrf.mxu0
    %v2147 = vadd.f32 %v2009, %v2146
    %2148 = vmatmul.bf16.gmra.mxu0 %v1701
    %v2149 = vpop.f32.mrf.mxu0
    %v2150 = vadd.f32 %v2012, %v2149
    %v2151 = vpop.f32.mrf.mxu0
    %v2152 = vadd.f32 %v2014, %v2151
    %2153 = vmatmul.bf16.gmra.mxu0 %v1704
    %v2154 = vpop.f32.mrf.mxu0
    %v2155 = vadd.f32 %v2017, %v2154
    %v2156 = vpop.f32.mrf.mxu0
    %v2157 = vadd.f32 %v2019, %v2156
    %2158 = vmatmul.bf16.gmra.mxu0 %v1707
    %v2159 = vpop.f32.mrf.mxu0
    %v2160 = vadd.f32 %v2022, %v2159
    %v2161 = vpop.f32.mrf.mxu0
    %v2162 = vadd.f32 %v2024, %v2161
    %2163 = vmatmul.bf16.gmra.mxu0 %v1710
    %v2164 = vpop.f32.mrf.mxu0
    %v2165 = vadd.f32 %v2027, %v2164
    %v2166 = vpop.f32.mrf.mxu0
    %v2167 = vadd.f32 %v2029, %v2166
    %2168 = vmatmul.bf16.gmra.mxu0 %v1713
    %v2169 = vpop.f32.mrf.mxu0
    %v2170 = vadd.f32 %v2032, %v2169
    %v2171 = vpop.f32.mrf.mxu0
    %v2172 = vadd.f32 %v2034, %v2171
    %2173 = vmatmul.bf16.gmra.mxu0 %v1716
    %v2174 = vpop.f32.mrf.mxu0
    %v2175 = vadd.f32 %v2037, %v2174
    %v2176 = vpop.f32.mrf.mxu0
    %v2177 = vadd.f32 %v2039, %v2176
    %2178 = vdwg.mxu0
    %v2179 = vld [vmem:[%s13] sm:$0x3]
    %v2181 = vperm.slane %v2179, 0
    %v2182 = vperm.slane %v2179, 1
    %v2185 = vadd.f32 %v2091, %v2181
    %v2186 = vadd.f32 %v2140, %v2182
    %v2187 = vadd.f32 %v2093, %v2181
    %v2188 = vadd.f32 %v2142, %v2182
    %v2189 = vadd.f32 %v2096, %v2181
    %v2190 = vadd.f32 %v2145, %v2182
    %v2191 = vadd.f32 %v2098, %v2181
    %v2192 = vadd.f32 %v2147, %v2182
    %v2193 = vadd.f32 %v2101, %v2181
    %v2194 = vadd.f32 %v2150, %v2182
    %v2195 = vadd.f32 %v2103, %v2181
    %v2196 = vadd.f32 %v2152, %v2182
    %v2197 = vadd.f32 %v2106, %v2181
    %v2198 = vadd.f32 %v2155, %v2182
    %v2199 = vadd.f32 %v2108, %v2181
    %v2200 = vadd.f32 %v2157, %v2182
    %v2201 = vadd.f32 %v2111, %v2181
    %v2202 = vadd.f32 %v2160, %v2182
    %v2203 = vadd.f32 %v2113, %v2181
    %v2204 = vadd.f32 %v2162, %v2182
    %v2205 = vadd.f32 %v2116, %v2181
    %v2206 = vadd.f32 %v2165, %v2182
    %v2207 = vadd.f32 %v2118, %v2181
    %v2208 = vadd.f32 %v2167, %v2182
    %v2209 = vadd.f32 %v2121, %v2181
    %v2210 = vadd.f32 %v2170, %v2182
    %v2211 = vadd.f32 %v2123, %v2181
    %v2212 = vadd.f32 %v2172, %v2182
    %v2213 = vadd.f32 %v2126, %v2181
    %v2214 = vadd.f32 %v2175, %v2182
    %v2215 = vadd.f32 %v2128, %v2181
    %v2216 = vadd.f32 %v2177, %v2182
    %2217 = vst [vmem:[%s623] sm:$0xff] %v2185
    %2218 = vst [vmem:[%s623 + $0x8] sm:$0xff] %v2186
    %2219 = vst [vmem:[%s623 + $0x10] sm:$0xff] %v2187
    %2220 = vst [vmem:[%s623 + $0x18] sm:$0xff] %v2188
    %2221 = vst [vmem:[%s623 + $0x20] sm:$0xff] %v2189
    %2222 = vst [vmem:[%s623 + $0x28] sm:$0xff] %v2190
    %2223 = vst [vmem:[%s623 + $0x30] sm:$0xff] %v2191
    %2224 = vst [vmem:[%s623 + $0x38] sm:$0xff] %v2192
    %2225 = vst [vmem:[%s623 + $0x40] sm:$0xff] %v2193
    %2226 = vst [vmem:[%s623 + $0x48] sm:$0xff] %v2194
    %2227 = vst [vmem:[%s623 + $0x50] sm:$0xff] %v2195
    %2228 = vst [vmem:[%s623 + $0x58] sm:$0xff] %v2196
    %2229 = vst [vmem:[%s623 + $0x60] sm:$0xff] %v2197
    %2230 = vst [vmem:[%s623 + $0x68] sm:$0xff] %v2198
    %2231 = vst [vmem:[%s623 + $0x70] sm:$0xff] %v2199
    %2232 = vst [vmem:[%s623 + $0x78] sm:$0xff] %v2200
    %2233 = vst [vmem:[%s623 + $0x80] sm:$0xff] %v2201
    %2234 = vst [vmem:[%s623 + $0x88] sm:$0xff] %v2202
    %2235 = vst [vmem:[%s623 + $0x90] sm:$0xff] %v2203
    %2236 = vst [vmem:[%s623 + $0x98] sm:$0xff] %v2204
    %2237 = vst [vmem:[%s623 + $0xa0] sm:$0xff] %v2205
    %2238 = vst [vmem:[%s623 + $0xa8] sm:$0xff] %v2206
    %2239 = vst [vmem:[%s623 + $0xb0] sm:$0xff] %v2207
    %2240 = vst [vmem:[%s623 + $0xb8] sm:$0xff] %v2208
    %2241 = vst [vmem:[%s623 + $0xc0] sm:$0xff] %v2209
    %2242 = vst [vmem:[%s623 + $0xc8] sm:$0xff] %v2210
    %2243 = vst [vmem:[%s623 + $0xd0] sm:$0xff] %v2211
    %2244 = vst [vmem:[%s623 + $0xd8] sm:$0xff] %v2212
    %2245 = vst [vmem:[%s623 + $0xe0] sm:$0xff] %v2213
    %2246 = vst [vmem:[%s623 + $0xe8] sm:$0xff] %v2214
    %2247 = vst [vmem:[%s623 + $0xf0] sm:$0xff] %v2215
    %2248 = vst [vmem:[%s623 + $0xf8] sm:$0xff] %v2216
    %2249 = vst.msk [vmem:[#allocation4] sm:$0xff] %vm656, 0.0
    %2250 = vst.msk [vmem:[#allocation4 + $0x8] sm:$0xff] %vm656, 0.0
    %2251 = vst.msk [vmem:[#allocation5] sm:$0xff] %vm656, 0.0
    %2252 = vst.msk [vmem:[#allocation5 + $0x8] sm:$0xff] %vm656, 0.0
    loop: start=0, step=1, limit=8
    $region101: #{tpu_custom_call.1} parent=1 // loop_pre_header
      _
    $region102: #{tpu_custom_call.1} parent=1 // loop_header
      %s2254 = sphi 0, %s2258
      %p2255 = scmp.ge.s32.totalorder %s2254, 8
    $region103: #{tpu_custom_call.1} parent=1 // loop_header_branch
      %2257 = sbr.rel (%p2255) target = $region107
    $region104: #{tpu_custom_call.1} parent=1 // loop_body
      %s2259 = smul.u32 %s2254, 2
      %v2260 = vld [vmem:[#allocation4] sm:$0xff]
      %v2261 = vld [vmem:[#allocation5] sm:$0xff]
      %s2262 = smul.u32 %s2259, 2
      %s2263 = smul.addr %s2262, 8
      %s2264 = scalar_lea.vmem [#allocation2], %s2263
      %v2265 = vld [vmem:[%s2264] sm:$0xff]
      %v2266 = vld [vmem:[%s2264 + $0x8] sm:$0xff]
      %v2267 = vpack.c.bf16 %v2260, %v2260
      %v2268 = vld [vmem:[#allocation18] sm:$0xff]
      %v2269 = vld [vmem:[#allocation18 + $0x8] sm:$0xff]
      %v2270 = vld [vmem:[#allocation18 + $0x10] sm:$0xff]
      %v2271 = vld [vmem:[#allocation18 + $0x18] sm:$0xff]
      %v2272 = vld [vmem:[#allocation18 + $0x20] sm:$0xff]
      %v2273 = vld [vmem:[#allocation18 + $0x28] sm:$0xff]
      %v2274 = vld [vmem:[#allocation18 + $0x30] sm:$0xff]
      %v2275 = vld [vmem:[#allocation18 + $0x38] sm:$0xff]
      %v2284 = vunpack.c.l.b16 %v2268
      %v2285 = vunpack.c.h.b16 %v2268
      %v2286 = vunpack.c.l.b16 %v2269
      %v2287 = vunpack.c.h.b16 %v2269
      %v2288 = vunpack.c.l.b16 %v2270
      %v2289 = vunpack.c.h.b16 %v2270
      %v2290 = vunpack.c.l.b16 %v2271
      %v2291 = vunpack.c.h.b16 %v2271
      %v2292 = vunpack.c.l.b16 %v2272
      %v2293 = vunpack.c.h.b16 %v2272
      %v2294 = vunpack.c.l.b16 %v2273
      %v2295 = vunpack.c.h.b16 %v2273
      %v2296 = vunpack.c.l.b16 %v2274
      %v2297 = vunpack.c.h.b16 %v2274
      %v2298 = vunpack.c.l.b16 %v2275
      %v2299 = vunpack.c.h.b16 %v2275
      %v2300 = vpack.c.b16 %v2286, %v2284
      %v2301 = vpack.c.b16 %v2287, %v2285
      %v2302 = vpack.c.b16 %v2290, %v2288
      %v2303 = vpack.c.b16 %v2291, %v2289
      %v2304 = vpack.c.b16 %v2294, %v2292
      %v2305 = vpack.c.b16 %v2295, %v2293
      %v2306 = vpack.c.b16 %v2298, %v2296
      %v2307 = vpack.c.b16 %v2299, %v2297
      %v2317 = vsel %vm656, %v2267, 0
      %2319 = vmatpush.bf16.msra.mxu0 0
      %2320 = vmatpush.bf16.msra.mxu0 0
      %2321 = vmatpush.bf16.msra.mxu0 0
      %2322 = vmatpush.bf16.msra.mxu0 0
      %2323 = vmatpush.bf16.msra.mxu0 %v2306
      %2324 = vmatpush.bf16.msra.mxu0 %v2304
      %2325 = vmatpush.bf16.msra.mxu0 %v2302
      %2326 = vmatpush.bf16.msra.mxu0 %v2300
      %2327 = vmatmul.bf16.gmra.mxu0 %v2317
      %v2328 = vpop.f32.mrf.mxu0
      %v2329 = vadd.f32 0.0, %v2328
      %v2330 = vpop.f32.mrf.mxu0
      %2331 = vdwg.mxu0
      %2332 = vmatpush.bf16.msra.mxu0 0
      %2333 = vmatpush.bf16.msra.mxu0 0
      %2334 = vmatpush.bf16.msra.mxu0 0
      %2335 = vmatpush.bf16.msra.mxu0 0
      %2336 = vmatpush.bf16.msra.mxu0 %v2307
      %2337 = vmatpush.bf16.msra.mxu0 %v2305
      %2338 = vmatpush.bf16.msra.mxu0 %v2303
      %2339 = vmatpush.bf16.msra.mxu0 %v2301
      %2340 = vmatmul.bf16.gmra.mxu0 %v2317
      %v2341 = vpop.f32.mrf.mxu0
      %v2342 = vadd.f32 0.0, %v2341
      %v2343 = vpop.f32.mrf.mxu0
      %2344 = vdwg.mxu0
      %v2345 = vadd.f32 %v2265, %v2329
      %v2346 = vadd.f32 %v2266, %v2342
      %v2347 = vxor.u32 %v2345, 2147483648
      %v2348 = vmul.f32 %v2347, 1.442695
      %v2349 = vpow.pop %v2348
      %v2350 = vadd.f32 %v2349, 1.0
      %v2351 = vrcp.pop %v2350
      %v2352 = vmul.f32 %v2350, %v2351
      %v2353 = vsub.f32 1.0, %v2352
      %v2354 = vmul.f32 %v2351, %v2353
      %v2355 = vadd.f32 %v2351, %v2354
      %vm2356 = vweird.f32 %v2350
      %vm2357 = vweird.f32 %v2351
      %vm2358 = vmor %vm2356, %vm2357
      %v2359 = vsel %vm2358, %v2351, %v2355
      %v2360 = vand.u32 2147483647, %v2350
      %vm2361 = vcmp.eq.f32.partialorder %v2360, 8.507059e+37
      %v2362 = vand.u32 %v2350, 2147483648
      %v2363 = vor.u32 1.1754944e-38, %v2362
      %v2364 = vsel %vm2361, %v2363, %v2359
      %v2365 = vmul.f32 1.0, %v2364
      %v2366 = vtanh.pop %v2346
      %v2367 = vxor.u32 %v2346, 2147483648
      %v2368 = vmul.f32 %v2367, 1.442695
      %v2369 = vpow.pop %v2368
      %v2370 = vadd.f32 %v2369, 1.0
      %v2371 = vrcp.pop %v2370
      %v2372 = vmul.f32 %v2370, %v2371
      %v2373 = vsub.f32 1.0, %v2372
      %v2374 = vmul.f32 %v2371, %v2373
      %v2375 = vadd.f32 %v2371, %v2374
      %vm2376 = vweird.f32 %v2370
      %vm2377 = vweird.f32 %v2371
      %vm2378 = vmor %vm2376, %vm2377
      %v2379 = vsel %vm2378, %v2371, %v2375
      %v2380 = vand.u32 2147483647, %v2370
      %vm2381 = vcmp.eq.f32.partialorder %v2380, 8.507059e+37
      %v2382 = vand.u32 %v2370, 2147483648
      %v2383 = vor.u32 1.1754944e-38, %v2382
      %v2384 = vsel %vm2381, %v2383, %v2379
      %v2385 = vmul.f32 1.0, %v2384
      %2387 = vrot.lane.b32.xlu0 %v2261, 64
      %v2388 = vpop.permute.xlu0 %2387
      %v2390 = vmul.f32 %v2365, %v2388
      %v2391 = vmul.f32 %v2365, %v2366
      %2393 = vrot.lane.b32.xlu0 %v2391, 64
      %v2394 = vpop.permute.xlu0 %2393
      %v2396 = vadd.f32 %v2390, %v2394
      %v2397 = vtanh.pop %v2396
      %v2398 = vmul.f32 %v2385, %v2397
      %v2399 = vstv %s2259
      %vm2400 = vcmp.gt.s32.totalorder %v189, %v2399
      %v2401 = vsel %vm2400, 1, 0
      %2402 = vset.pattern.permute.xlu0 0
      %2403 = vperm.xlu0 %2402, %v2401
      %v2404 = vpop.permute.xlu0 %2403
      %vm2405 = vcmp.eq.s32.totalorder %v2404, 1
      %2407 = vrot.lane.b32.xlu0 %v2260, 64
      %v2408 = vpop.permute.xlu0 %2407
      %v2410 = vsel %vm2405, %v2398, %v2408
      %2412 = vrot.lane.b32.xlu0 %v2410, 64
      %v2413 = vpop.permute.xlu0 %2412
      %2415 = vst.msk [vmem:[#allocation4] sm:$0xff] %vm656, %v2413
      %v2416 = vsel %vm2405, %v2396, %v2388
      %2418 = vrot.lane.b32.xlu0 %v2416, 64
      %v2419 = vpop.permute.xlu0 %2418
      %2421 = vst.msk [vmem:[#allocation5] sm:$0xff] %vm656, %v2419
      %s2422 = ssub.s32 15, %s2259
      %s2423 = scalar_lea.vmem [#allocation4], 8
      %v2424 = vld [vmem:[%s2423] sm:$0xff]
      %s2425 = scalar_lea.vmem [#allocation5], 8
      %v2426 = vld [vmem:[%s2425] sm:$0xff]
      %s2427 = smul.u32 %s2422, 2
      %s2428 = sadd.s32 %s2427, 32
      %s2429 = smul.addr %s2428, 8
      %s2430 = scalar_lea.vmem [#allocation2], %s2429
      %v2431 = vld [vmem:[%s2430] sm:$0xff]
      %v2432 = vld [vmem:[%s2430 + $0x8] sm:$0xff]
      %v2433 = vpack.c.bf16 %v2424, %v2424
      %v2434 = vld [vmem:[#allocation21] sm:$0xff]
      %v2435 = vld [vmem:[#allocation21 + $0x8] sm:$0xff]
      %v2436 = vld [vmem:[#allocation21 + $0x10] sm:$0xff]
      %v2437 = vld [vmem:[#allocation21 + $0x18] sm:$0xff]
      %v2438 = vld [vmem:[#allocation21 + $0x20] sm:$0xff]
      %v2439 = vld [vmem:[#allocation21 + $0x28] sm:$0xff]
      %v2440 = vld [vmem:[#allocation21 + $0x30] sm:$0xff]
      %v2441 = vld [vmem:[#allocation21 + $0x38] sm:$0xff]
      %v2450 = vunpack.c.l.b16 %v2434
      %v2451 = vunpack.c.h.b16 %v2434
      %v2452 = vunpack.c.l.b16 %v2435
      %v2453 = vunpack.c.h.b16 %v2435
      %v2454 = vunpack.c.l.b16 %v2436
      %v2455 = vunpack.c.h.b16 %v2436
      %v2456 = vunpack.c.l.b16 %v2437
      %v2457 = vunpack.c.h.b16 %v2437
      %v2458 = vunpack.c.l.b16 %v2438
      %v2459 = vunpack.c.h.b16 %v2438
      %v2460 = vunpack.c.l.b16 %v2439
      %v2461 = vunpack.c.h.b16 %v2439
      %v2462 = vunpack.c.l.b16 %v2440
      %v2463 = vunpack.c.h.b16 %v2440
      %v2464 = vunpack.c.l.b16 %v2441
      %v2465 = vunpack.c.h.b16 %v2441
      %v2466 = vpack.c.b16 %v2452, %v2450
      %v2467 = vpack.c.b16 %v2453, %v2451
      %v2468 = vpack.c.b16 %v2456, %v2454
      %v2469 = vpack.c.b16 %v2457, %v2455
      %v2470 = vpack.c.b16 %v2460, %v2458
      %v2471 = vpack.c.b16 %v2461, %v2459
      %v2472 = vpack.c.b16 %v2464, %v2462
      %v2473 = vpack.c.b16 %v2465, %v2463
      %v2483 = vsel %vm656, %v2433, 0
      %2485 = vmatpush.bf16.msra.mxu0 0
      %2486 = vmatpush.bf16.msra.mxu0 0
      %2487 = vmatpush.bf16.msra.mxu0 0
      %2488 = vmatpush.bf16.msra.mxu0 0
      %2489 = vmatpush.bf16.msra.mxu0 %v2472
      %2490 = vmatpush.bf16.msra.mxu0 %v2470
      %2491 = vmatpush.bf16.msra.mxu0 %v2468
      %2492 = vmatpush.bf16.msra.mxu0 %v2466
      %2493 = vmatmul.bf16.gmra.mxu0 %v2483
      %v2494 = vpop.f32.mrf.mxu0
      %v2495 = vadd.f32 0.0, %v2494
      %v2496 = vpop.f32.mrf.mxu0
      %2497 = vdwg.mxu0
      %2498 = vmatpush.bf16.msra.mxu0 0
      %2499 = vmatpush.bf16.msra.mxu0 0
      %2500 = vmatpush.bf16.msra.mxu0 0
      %2501 = vmatpush.bf16.msra.mxu0 0
      %2502 = vmatpush.bf16.msra.mxu0 %v2473
      %2503 = vmatpush.bf16.msra.mxu0 %v2471
      %2504 = vmatpush.bf16.msra.mxu0 %v2469
      %2505 = vmatpush.bf16.msra.mxu0 %v2467
      %2506 = vmatmul.bf16.gmra.mxu0 %v2483
      %v2507 = vpop.f32.mrf.mxu0
      %v2508 = vadd.f32 0.0, %v2507
      %v2509 = vpop.f32.mrf.mxu0
      %2510 = vdwg.mxu0
      %v2511 = vadd.f32 %v2431, %v2495
      %v2512 = vadd.f32 %v2432, %v2508
      %v2513 = vxor.u32 %v2511, 2147483648
      %v2514 = vmul.f32 %v2513, 1.442695
      %v2515 = vpow.pop %v2514
      %v2516 = vadd.f32 %v2515, 1.0
      %v2517 = vrcp.pop %v2516
      %v2518 = vmul.f32 %v2516, %v2517
      %v2519 = vsub.f32 1.0, %v2518
      %v2520 = vmul.f32 %v2517, %v2519
      %v2521 = vadd.f32 %v2517, %v2520
      %vm2522 = vweird.f32 %v2516
      %vm2523 = vweird.f32 %v2517
      %vm2524 = vmor %vm2522, %vm2523
      %v2525 = vsel %vm2524, %v2517, %v2521
      %v2526 = vand.u32 2147483647, %v2516
      %vm2527 = vcmp.eq.f32.partialorder %v2526, 8.507059e+37
      %v2528 = vand.u32 %v2516, 2147483648
      %v2529 = vor.u32 1.1754944e-38, %v2528
      %v2530 = vsel %vm2527, %v2529, %v2525
      %v2531 = vmul.f32 1.0, %v2530
      %v2532 = vtanh.pop %v2512
      %v2533 = vxor.u32 %v2512, 2147483648
      %v2534 = vmul.f32 %v2533, 1.442695
      %v2535 = vpow.pop %v2534
      %v2536 = vadd.f32 %v2535, 1.0
      %v2537 = vrcp.pop %v2536
      %v2538 = vmul.f32 %v2536, %v2537
      %v2539 = vsub.f32 1.0, %v2538
      %v2540 = vmul.f32 %v2537, %v2539
      %v2541 = vadd.f32 %v2537, %v2540
      %vm2542 = vweird.f32 %v2536
      %vm2543 = vweird.f32 %v2537
      %vm2544 = vmor %vm2542, %vm2543
      %v2545 = vsel %vm2544, %v2537, %v2541
      %v2546 = vand.u32 2147483647, %v2536
      %vm2547 = vcmp.eq.f32.partialorder %v2546, 8.507059e+37
      %v2548 = vand.u32 %v2536, 2147483648
      %v2549 = vor.u32 1.1754944e-38, %v2548
      %v2550 = vsel %vm2547, %v2549, %v2545
      %v2551 = vmul.f32 1.0, %v2550
      %2553 = vrot.lane.b32.xlu0 %v2426, 64
      %v2554 = vpop.permute.xlu0 %2553
      %v2556 = vmul.f32 %v2531, %v2554
      %v2557 = vmul.f32 %v2531, %v2532
      %2559 = vrot.lane.b32.xlu0 %v2557, 64
      %v2560 = vpop.permute.xlu0 %2559
      %v2562 = vadd.f32 %v2556, %v2560
      %v2563 = vtanh.pop %v2562
      %v2564 = vmul.f32 %v2551, %v2563
      %v2565 = vstv %s2422
      %vm2566 = vcmp.gt.s32.totalorder %v189, %v2565
      %v2567 = vsel %vm2566, 1, 0
      %2568 = vset.pattern.permute.xlu0 0
      %2569 = vperm.xlu0 %2568, %v2567
      %v2570 = vpop.permute.xlu0 %2569
      %vm2571 = vcmp.eq.s32.totalorder %v2570, 1
      %2573 = vrot.lane.b32.xlu0 %v2424, 64
      %v2574 = vpop.permute.xlu0 %2573
      %v2576 = vsel %vm2571, %v2564, %v2574
      %2578 = vrot.lane.b32.xlu0 %v2576, 64
      %v2579 = vpop.permute.xlu0 %2578
      %2581 = vst.msk [vmem:[%s2423] sm:$0xff] %vm656, %v2579
      %v2582 = vsel %vm2571, %v2562, %v2554
      %2584 = vrot.lane.b32.xlu0 %v2582, 64
      %v2585 = vpop.permute.xlu0 %2584
      %2587 = vst.msk [vmem:[%s2425] sm:$0xff] %vm656, %v2585
      %s2588 = sadd.s32 %s2259, 1
      %v2589 = vld [vmem:[#allocation4] sm:$0xff]
      %v2590 = vld [vmem:[#allocation5] sm:$0xff]
      %s2591 = smul.u32 %s2588, 2
      %s2592 = smul.addr %s2591, 8
      %s2593 = scalar_lea.vmem [#allocation2], %s2592
      %v2594 = vld [vmem:[%s2593] sm:$0xff]
      %v2595 = vld [vmem:[%s2593 + $0x8] sm:$0xff]
      %v2596 = vpack.c.bf16 %v2589, %v2589
      %v2597 = vld [vmem:[#allocation18] sm:$0xff]
      %v2598 = vld [vmem:[#allocation18 + $0x8] sm:$0xff]
      %v2599 = vld [vmem:[#allocation18 + $0x10] sm:$0xff]
      %v2600 = vld [vmem:[#allocation18 + $0x18] sm:$0xff]
      %v2601 = vld [vmem:[#allocation18 + $0x20] sm:$0xff]
      %v2602 = vld [vmem:[#allocation18 + $0x28] sm:$0xff]
      %v2603 = vld [vmem:[#allocation18 + $0x30] sm:$0xff]
      %v2604 = vld [vmem:[#allocation18 + $0x38] sm:$0xff]
      %v2613 = vunpack.c.l.b16 %v2597
      %v2614 = vunpack.c.h.b16 %v2597
      %v2615 = vunpack.c.l.b16 %v2598
      %v2616 = vunpack.c.h.b16 %v2598
      %v2617 = vunpack.c.l.b16 %v2599
      %v2618 = vunpack.c.h.b16 %v2599
      %v2619 = vunpack.c.l.b16 %v2600
      %v2620 = vunpack.c.h.b16 %v2600
      %v2621 = vunpack.c.l.b16 %v2601
      %v2622 = vunpack.c.h.b16 %v2601
      %v2623 = vunpack.c.l.b16 %v2602
      %v2624 = vunpack.c.h.b16 %v2602
      %v2625 = vunpack.c.l.b16 %v2603
      %v2626 = vunpack.c.h.b16 %v2603
      %v2627 = vunpack.c.l.b16 %v2604
      %v2628 = vunpack.c.h.b16 %v2604
      %v2629 = vpack.c.b16 %v2615, %v2613
      %v2630 = vpack.c.b16 %v2616, %v2614
      %v2631 = vpack.c.b16 %v2619, %v2617
      %v2632 = vpack.c.b16 %v2620, %v2618
      %v2633 = vpack.c.b16 %v2623, %v2621
      %v2634 = vpack.c.b16 %v2624, %v2622
      %v2635 = vpack.c.b16 %v2627, %v2625
      %v2636 = vpack.c.b16 %v2628, %v2626
      %v2646 = vsel %vm656, %v2596, 0
      %2648 = vmatpush.bf16.msra.mxu0 0
      %2649 = vmatpush.bf16.msra.mxu0 0
      %2650 = vmatpush.bf16.msra.mxu0 0
      %2651 = vmatpush.bf16.msra.mxu0 0
      %2652 = vmatpush.bf16.msra.mxu0 %v2635
      %2653 = vmatpush.bf16.msra.mxu0 %v2633
      %2654 = vmatpush.bf16.msra.mxu0 %v2631
      %2655 = vmatpush.bf16.msra.mxu0 %v2629
      %2656 = vmatmul.bf16.gmra.mxu0 %v2646
      %v2657 = vpop.f32.mrf.mxu0
      %v2658 = vadd.f32 0.0, %v2657
      %v2659 = vpop.f32.mrf.mxu0
      %2660 = vdwg.mxu0
      %2661 = vmatpush.bf16.msra.mxu0 0
      %2662 = vmatpush.bf16.msra.mxu0 0
      %2663 = vmatpush.bf16.msra.mxu0 0
      %2664 = vmatpush.bf16.msra.mxu0 0
      %2665 = vmatpush.bf16.msra.mxu0 %v2636
      %2666 = vmatpush.bf16.msra.mxu0 %v2634
      %2667 = vmatpush.bf16.msra.mxu0 %v2632
      %2668 = vmatpush.bf16.msra.mxu0 %v2630
      %2669 = vmatmul.bf16.gmra.mxu0 %v2646
      %v2670 = vpop.f32.mrf.mxu0
      %v2671 = vadd.f32 0.0, %v2670
      %v2672 = vpop.f32.mrf.mxu0
      %2673 = vdwg.mxu0
      %v2674 = vadd.f32 %v2594, %v2658
      %v2675 = vadd.f32 %v2595, %v2671
      %v2676 = vxor.u32 %v2674, 2147483648
      %v2677 = vmul.f32 %v2676, 1.442695
      %v2678 = vpow.pop %v2677
      %v2679 = vadd.f32 %v2678, 1.0
      %v2680 = vrcp.pop %v2679
      %v2681 = vmul.f32 %v2679, %v2680
      %v2682 = vsub.f32 1.0, %v2681
      %v2683 = vmul.f32 %v2680, %v2682
      %v2684 = vadd.f32 %v2680, %v2683
      %vm2685 = vweird.f32 %v2679
      %vm2686 = vweird.f32 %v2680
      %vm2687 = vmor %vm2685, %vm2686
      %v2688 = vsel %vm2687, %v2680, %v2684
      %v2689 = vand.u32 2147483647, %v2679
      %vm2690 = vcmp.eq.f32.partialorder %v2689, 8.507059e+37
      %v2691 = vand.u32 %v2679, 2147483648
      %v2692 = vor.u32 1.1754944e-38, %v2691
      %v2693 = vsel %vm2690, %v2692, %v2688
      %v2694 = vmul.f32 1.0, %v2693
      %v2695 = vtanh.pop %v2675
      %v2696 = vxor.u32 %v2675, 2147483648
      %v2697 = vmul.f32 %v2696, 1.442695
      %v2698 = vpow.pop %v2697
      %v2699 = vadd.f32 %v2698, 1.0
      %v2700 = vrcp.pop %v2699
      %v2701 = vmul.f32 %v2699, %v2700
      %v2702 = vsub.f32 1.0, %v2701
      %v2703 = vmul.f32 %v2700, %v2702
      %v2704 = vadd.f32 %v2700, %v2703
      %vm2705 = vweird.f32 %v2699
      %vm2706 = vweird.f32 %v2700
      %vm2707 = vmor %vm2705, %vm2706
      %v2708 = vsel %vm2707, %v2700, %v2704
      %v2709 = vand.u32 2147483647, %v2699
      %vm2710 = vcmp.eq.f32.partialorder %v2709, 8.507059e+37
      %v2711 = vand.u32 %v2699, 2147483648
      %v2712 = vor.u32 1.1754944e-38, %v2711
      %v2713 = vsel %vm2710, %v2712, %v2708
      %v2714 = vmul.f32 1.0, %v2713
      %2716 = vrot.lane.b32.xlu0 %v2590, 64
      %v2717 = vpop.permute.xlu0 %2716
      %v2719 = vmul.f32 %v2694, %v2717
      %v2720 = vmul.f32 %v2694, %v2695
      %2722 = vrot.lane.b32.xlu0 %v2720, 64
      %v2723 = vpop.permute.xlu0 %2722
      %v2725 = vadd.f32 %v2719, %v2723
      %v2726 = vtanh.pop %v2725
      %v2727 = vmul.f32 %v2714, %v2726
      %v2728 = vstv %s2588
      %vm2729 = vcmp.gt.s32.totalorder %v189, %v2728
      %v2730 = vsel %vm2729, 1, 0
      %2731 = vset.pattern.permute.xlu0 0
      %2732 = vperm.xlu0 %2731, %v2730
      %v2733 = vpop.permute.xlu0 %2732
      %vm2734 = vcmp.eq.s32.totalorder %v2733, 1
      %2736 = vrot.lane.b32.xlu0 %v2589, 64
      %v2737 = vpop.permute.xlu0 %2736
      %v2739 = vsel %vm2734, %v2727, %v2737
      %2741 = vrot.lane.b32.xlu0 %v2739, 64
      %v2742 = vpop.permute.xlu0 %2741
      %2744 = vst.msk [vmem:[#allocation4] sm:$0xff] %vm656, %v2742
      %v2745 = vsel %vm2734, %v2725, %v2717
      %2747 = vrot.lane.b32.xlu0 %v2745, 64
      %v2748 = vpop.permute.xlu0 %2747
      %2750 = vst.msk [vmem:[#allocation5] sm:$0xff] %vm656, %v2748
      %s2751 = ssub.s32 14, %s2259
      %v2752 = vld [vmem:[%s2423] sm:$0xff]
      %v2753 = vld [vmem:[%s2425] sm:$0xff]
      %s2754 = smul.u32 %s2751, 2
      %s2755 = sadd.s32 %s2754, 32
      %s2756 = smul.addr %s2755, 8
      %s2757 = scalar_lea.vmem [#allocation2], %s2756
      %v2758 = vld [vmem:[%s2757] sm:$0xff]
      %v2759 = vld [vmem:[%s2757 + $0x8] sm:$0xff]
      %v2760 = vpack.c.bf16 %v2752, %v2752
      %v2761 = vld [vmem:[#allocation21] sm:$0xff]
      %v2762 = vld [vmem:[#allocation21 + $0x8] sm:$0xff]
      %v2763 = vld [vmem:[#allocation21 + $0x10] sm:$0xff]
      %v2764 = vld [vmem:[#allocation21 + $0x18] sm:$0xff]
      %v2765 = vld [vmem:[#allocation21 + $0x20] sm:$0xff]
      %v2766 = vld [vmem:[#allocation21 + $0x28] sm:$0xff]
      %v2767 = vld [vmem:[#allocation21 + $0x30] sm:$0xff]
      %v2768 = vld [vmem:[#allocation21 + $0x38] sm:$0xff]
      %v2777 = vunpack.c.l.b16 %v2761
      %v2778 = vunpack.c.h.b16 %v2761
      %v2779 = vunpack.c.l.b16 %v2762
      %v2780 = vunpack.c.h.b16 %v2762
      %v2781 = vunpack.c.l.b16 %v2763
      %v2782 = vunpack.c.h.b16 %v2763
      %v2783 = vunpack.c.l.b16 %v2764
      %v2784 = vunpack.c.h.b16 %v2764
      %v2785 = vunpack.c.l.b16 %v2765
      %v2786 = vunpack.c.h.b16 %v2765
      %v2787 = vunpack.c.l.b16 %v2766
      %v2788 = vunpack.c.h.b16 %v2766
      %v2789 = vunpack.c.l.b16 %v2767
      %v2790 = vunpack.c.h.b16 %v2767
      %v2791 = vunpack.c.l.b16 %v2768
      %v2792 = vunpack.c.h.b16 %v2768
      %v2793 = vpack.c.b16 %v2779, %v2777
      %v2794 = vpack.c.b16 %v2780, %v2778
      %v2795 = vpack.c.b16 %v2783, %v2781
      %v2796 = vpack.c.b16 %v2784, %v2782
      %v2797 = vpack.c.b16 %v2787, %v2785
      %v2798 = vpack.c.b16 %v2788, %v2786
      %v2799 = vpack.c.b16 %v2791, %v2789
      %v2800 = vpack.c.b16 %v2792, %v2790
      %v2810 = vsel %vm656, %v2760, 0
      %2812 = vmatpush.bf16.msra.mxu0 0
      %2813 = vmatpush.bf16.msra.mxu0 0
      %2814 = vmatpush.bf16.msra.mxu0 0
      %2815 = vmatpush.bf16.msra.mxu0 0
      %2816 = vmatpush.bf16.msra.mxu0 %v2799
      %2817 = vmatpush.bf16.msra.mxu0 %v2797
      %2818 = vmatpush.bf16.msra.mxu0 %v2795
      %2819 = vmatpush.bf16.msra.mxu0 %v2793
      %2820 = vmatmul.bf16.gmra.mxu0 %v2810
      %v2821 = vpop.f32.mrf.mxu0
      %v2822 = vadd.f32 0.0, %v2821
      %v2823 = vpop.f32.mrf.mxu0
      %2824 = vdwg.mxu0
      %2825 = vmatpush.bf16.msra.mxu0 0
      %2826 = vmatpush.bf16.msra.mxu0 0
      %2827 = vmatpush.bf16.msra.mxu0 0
      %2828 = vmatpush.bf16.msra.mxu0 0
      %2829 = vmatpush.bf16.msra.mxu0 %v2800
      %2830 = vmatpush.bf16.msra.mxu0 %v2798
      %2831 = vmatpush.bf16.msra.mxu0 %v2796
      %2832 = vmatpush.bf16.msra.mxu0 %v2794
      %2833 = vmatmul.bf16.gmra.mxu0 %v2810
      %v2834 = vpop.f32.mrf.mxu0
      %v2835 = vadd.f32 0.0, %v2834
      %v2836 = vpop.f32.mrf.mxu0
      %2837 = vdwg.mxu0
      %v2838 = vadd.f32 %v2758, %v2822
      %v2839 = vadd.f32 %v2759, %v2835
      %v2840 = vxor.u32 %v2838, 2147483648
      %v2841 = vmul.f32 %v2840, 1.442695
      %v2842 = vpow.pop %v2841
      %v2843 = vadd.f32 %v2842, 1.0
      %v2844 = vrcp.pop %v2843
      %v2845 = vmul.f32 %v2843, %v2844
      %v2846 = vsub.f32 1.0, %v2845
      %v2847 = vmul.f32 %v2844, %v2846
      %v2848 = vadd.f32 %v2844, %v2847
      %vm2849 = vweird.f32 %v2843
      %vm2850 = vweird.f32 %v2844
      %vm2851 = vmor %vm2849, %vm2850
      %v2852 = vsel %vm2851, %v2844, %v2848
      %v2853 = vand.u32 2147483647, %v2843
      %vm2854 = vcmp.eq.f32.partialorder %v2853, 8.507059e+37
      %v2855 = vand.u32 %v2843, 2147483648
      %v2856 = vor.u32 1.1754944e-38, %v2855
      %v2857 = vsel %vm2854, %v2856, %v2852
      %v2858 = vmul.f32 1.0, %v2857
      %v2859 = vtanh.pop %v2839
      %v2860 = vxor.u32 %v2839, 2147483648
      %v2861 = vmul.f32 %v2860, 1.442695
      %v2862 = vpow.pop %v2861
      %v2863 = vadd.f32 %v2862, 1.0
      %v2864 = vrcp.pop %v2863
      %v2865 = vmul.f32 %v2863, %v2864
      %v2866 = vsub.f32 1.0, %v2865
      %v2867 = vmul.f32 %v2864, %v2866
      %v2868 = vadd.f32 %v2864, %v2867
      %vm2869 = vweird.f32 %v2863
      %vm2870 = vweird.f32 %v2864
      %vm2871 = vmor %vm2869, %vm2870
      %v2872 = vsel %vm2871, %v2864, %v2868
      %v2873 = vand.u32 2147483647, %v2863
      %vm2874 = vcmp.eq.f32.partialorder %v2873, 8.507059e+37
      %v2875 = vand.u32 %v2863, 2147483648
      %v2876 = vor.u32 1.1754944e-38, %v2875
      %v2877 = vsel %vm2874, %v2876, %v2872
      %v2878 = vmul.f32 1.0, %v2877
      %2880 = vrot.lane.b32.xlu0 %v2753, 64
      %v2881 = vpop.permute.xlu0 %2880
      %v2883 = vmul.f32 %v2858, %v2881
      %v2884 = vmul.f32 %v2858, %v2859
      %2886 = vrot.lane.b32.xlu0 %v2884, 64
      %v2887 = vpop.permute.xlu0 %2886
      %v2889 = vadd.f32 %v2883, %v2887
      %v2890 = vtanh.pop %v2889
      %v2891 = vmul.f32 %v2878, %v2890
      %v2892 = vstv %s2751
      %vm2893 = vcmp.gt.s32.totalorder %v189, %v2892
      %v2894 = vsel %vm2893, 1, 0
      %2895 = vset.pattern.permute.xlu0 0
      %2896 = vperm.xlu0 %2895, %v2894
      %v2897 = vpop.permute.xlu0 %2896
      %vm2898 = vcmp.eq.s32.totalorder %v2897, 1
      %2900 = vrot.lane.b32.xlu0 %v2752, 64
      %v2901 = vpop.permute.xlu0 %2900
      %v2903 = vsel %vm2898, %v2891, %v2901
      %2905 = vrot.lane.b32.xlu0 %v2903, 64
      %v2906 = vpop.permute.xlu0 %2905
      %2908 = vst.msk [vmem:[%s2423] sm:$0xff] %vm656, %v2906
      %v2909 = vsel %vm2898, %v2889, %v2881
      %2911 = vrot.lane.b32.xlu0 %v2909, 64
      %v2912 = vpop.permute.xlu0 %2911
      %2914 = vst.msk [vmem:[%s2425] sm:$0xff] %vm656, %v2912
    $region105: #{tpu_custom_call.1} parent=1 // loop_footer
      %s2258 = sadd.s32 1, %s2254
    $region106: #{tpu_custom_call.1} parent=1 // loop_footer_branch
      %2253 = sbr.rel target = $region102
    $region107: #{tpu_custom_call.1} parent=1 // loop_exit
      _
    %v2915 = vld [vmem:[#allocation4] sm:$0xff]
    %s2916 = scalar_lea.vmem [#allocation4], 8
    %v2917 = vld [vmem:[%s2916] sm:$0xff]
    %2919 = vrot.lane.b32.xlu0 %v2917, 64
    %v2920 = vpop.permute.xlu0 %2919
    %v2922 = vsel %vm656, %v2915, %v2920
    %2923 = vst [vmem:[#allocation22] sm:$0xff] %v2922
    // Predicated region
    $region108: #{tpu_custom_call.1} parent=1 // pred_check
      _
    $region109: #{tpu_custom_call.1} parent=1 // pred_check_branch
      %2925 = sbr.rel (0) target = $region111
    $region110: #{tpu_custom_call.1} parent=1 // pred_region
      %2927 = vsyncadd [#allocation9], 0
      %s2929 = sshll.u32 [#allocation22], 4
      %s2930 = int_to_ptr.vmem [resolvable:$true] %s2929
      %s2931 = sshll.u32 %s14, 4
      %s2932 = int_to_ptr.hbm [resolvable:$true] %s2931
      %2934 = dma.vmem_to_hbm [thread:$0]  %s2930, 128, %s2932, [#allocation9]
    $region111: #{tpu_custom_call.1} parent=1 // pred_fallthru
      _
    // Predicated region
    $region112: #{tpu_custom_call.1} parent=1 // pred_check
      _
    $region113: #{tpu_custom_call.1} parent=1 // pred_check_branch
      %2936 = sbr.rel (0) target = $region115
    $region114: #{tpu_custom_call.1} parent=1 // pred_region
      %2938 = dma.done [#allocation9], 128
    $region115: #{tpu_custom_call.1} parent=1 // pred_fallthru
      _
    %2939 = vsyncpa [#allocation8], 1
    %2940 = vsyncpa [#allocation11], 1
    %2941 = vsyncpa [#allocation14], 1
    %2942 = vsyncpa [#allocation17], 1
    %2943 = vsyncpa [#allocation20], 1
    %2944 = vsyncpa [#allocation9], 1

</llo_original>
